<compile_context>
chip_gen: v7x
topology: tpu7x:2x2x1
jax: 0.10.0
libtpu: 0.0.40
codegen_flags: <defaults>
</compile_context>

<pallas_src>
import math
from functools import partial

import jax
import jax.numpy as jnp
from jax.experimental import pallas as pl
from jax.experimental.pallas import tpu as pltpu

LN_EPS = 1e-12


def _layer_norm(x, g, b):
    mean = jnp.mean(x, axis=-1, keepdims=True)
    var = jnp.mean((x - mean) ** 2, axis=-1, keepdims=True)
    return (x - mean) * jax.lax.rsqrt(var + LN_EPS) * g + b


def _gelu(x):
    # Original ALBert gelu: x * 0.5 * (1 + erf(x / sqrt(2))).
    # TODO(synk): switch to the tanh approximation (EUP slot instead of a VPU
    #             erf polynomial) only if the small numeric change is accepted.
    return x * 0.5 * (1.0 + jax.lax.erf(x / math.sqrt(2.0)))


def _vmem_limit_bytes():
    try:
        cap = pltpu.get_tpu_info().vmem_capacity_bytes
    except Exception:
        cap = 128 * 1024 * 1024
    # ~112 MiB on 128 MiB parts (v5e/v6e), ~56 MiB on 64 MiB parts (v7x).
    return int(cap * 7 // 8)


# --------------------------- fused encoder kernel ---------------------------
def _encoder_kernel(
    x_ref, mask_ref,
    emb_w_ref, emb_b_ref,                       # embedding_hidden_mapping_in
    ln_g_ref, ln_b_ref,                         # layer.LayerNorm (shared)
    wqkv_ref, bqkv_ref,                         # fused q|k|v projection (H, 3H)
    wo_ref, bo_ref, lno_g_ref, lno_b_ref,       # attention.output dense + LN
    wi_ref, bi_ref, wo2_ref, bo2_ref,           # intermediate + output dense
    ln1_g_ref, ln1_b_ref,                       # layer.LayerNorm_1
    o_ref,
    h_scr,                                      # (S, H) f32 hidden-state carry
    *, num_heads, head_dim,
):
    layer = pl.program_id(1)
    n_layers = pl.num_programs(1)
    S, H = h_scr.shape
    NH, DH = num_heads, head_dim
    bf16 = jnp.bfloat16

    ln_g = ln_g_ref[...]
    ln_b = ln_b_ref[...]

    # Layer 0: embedding_hidden_mapping_in (E -> H) + shared LayerNorm.
    @pl.when(layer == 0)
    def _():
        x16 = x_ref[0].astype(bf16)                        # (S, E)
        h0 = (jnp.dot(x16, emb_w_ref[...],
                      preferred_element_type=jnp.float32) + emb_b_ref[...])
        h_scr[...] = _layer_norm(h0, ln_g, ln_b)

    h = h_scr[...]                                         # (S, H) f32
    mask = mask_ref[0, 0]                                  # (S,) additive key mask

    # ------------------------- self attention -------------------------
    # Fused QKV projection: one lane-dense (S,H) @ (H,3H) MXU push.
    h16 = h.astype(bf16)
    qkv = (jnp.dot(h16, wqkv_ref[...],
                   preferred_element_type=jnp.float32) + bqkv_ref[...])   # (S, 3H)

    scale = 1.0 / math.sqrt(DH)
    ctx_heads = []
    # Static head loop: only one (S, S) f32 score tile per head is live; no
    # (NH, S, S) or (NH, S, H) f32 intermediates ever materialize.
    for hd in range(NH):
        q_h = (qkv[:, hd * DH:(hd + 1) * DH] * scale).astype(bf16)        # (S, DH)
        k_h = qkv[:, H + hd * DH:H + (hd + 1) * DH].astype(bf16)          # (S, DH)
        v_h = qkv[:, 2 * H + hd * DH:2 * H + (hd + 1) * DH].astype(bf16)  # (S, DH)
        s = jax.lax.dot_general(q_h, k_h, (((1,), (1,)), ((), ())),
                                preferred_element_type=jnp.float32)       # (S, S)
        s = s + mask[None, :]
        s = s - jnp.max(s, axis=-1, keepdims=True)
        p = jnp.exp(s)
        p = p * pl.reciprocal(jnp.sum(p, axis=-1, keepdims=True), approx=True)
        ctx_heads.append(jnp.dot(p.astype(bf16), v_h,
                                 preferred_element_type=jnp.float32))     # (S, DH)
    ctx = jnp.concatenate(ctx_heads, axis=-1).astype(bf16)                # (S, H)

    # Attention output dense: single K=H contraction, + residual + LN.
    attn_out = (jnp.dot(ctx, wo_ref[...],
                        preferred_element_type=jnp.float32) + bo_ref[...])
    attn_out = _layer_norm(attn_out + h, lno_g_ref[...], lno_b_ref[...])

    # Extra shared LayerNorm on the attention output (ALBertLayer semantics).
    attn_norm = _layer_norm(attn_out, ln_g, ln_b)

    # --------------- feed forward (intermediate + output) ---------------
    inter = (jnp.dot(attn_norm.astype(bf16), wi_ref[...],
                     preferred_element_type=jnp.float32) + bi_ref[...])
    inter = _gelu(inter)
    ff = (jnp.dot(inter.astype(bf16), wo2_ref[...],
                  preferred_element_type=jnp.float32) + bo2_ref[...])
    new_h = _layer_norm(ff + attn_norm, ln1_g_ref[...], ln1_b_ref[...])

    # Carry to next layer (ALBERT weight sharing).  This is only correct while
    # the layer axis stays the innermost grid dimension and is "arbitrary".
    h_scr[...] = new_h

    # Only the final layer's hidden state leaves the kernel.
    @pl.when(layer == n_layers - 1)
    def _():
        o_ref[0] = new_h


# ------------------------------- ALBertEncoder -------------------------------
def albert_encoder(x, attn_mask, params, *, num_layers, num_heads):
    B, S, E = x.shape
    (ln_g, ln_b, wq, bq, wk, bk, wv, bv, wo, bo, lno_g, lno_b,
     wi, bi, wo2, bo2, ln1_g, ln1_b) = params["layer"]
    H = wq.shape[0]
    assert H % num_heads == 0
    DH = H // num_heads
    f32, bf16 = jnp.float32, jnp.bfloat16

    # One-time wrapper-side weight prep: fused QKV weight + bf16 casts.
    wqkv = jnp.concatenate([wq, wk, wv], axis=1).astype(bf16)   # (H, 3H)
    bqkv = jnp.concatenate([bq, bk, bv], axis=1).astype(f32)    # (1, 3H)

    weight_args = [
        params["emb_w"].astype(bf16), params["emb_b"].astype(f32),
        ln_g.astype(f32), ln_b.astype(f32),
        wqkv, bqkv,
        wo.astype(bf16), bo.astype(f32),
        lno_g.astype(f32), lno_b.astype(f32),
        wi.astype(bf16), bi.astype(f32),
        wo2.astype(bf16), bo2.astype(f32),
        ln1_g.astype(f32), ln1_b.astype(f32),
    ]

    kernel = partial(_encoder_kernel, num_heads=num_heads, head_dim=DH)

    def build(single_buffer_weights):
        # Layer-invariant index maps -> each weight is DMA'd from HBM once and
        # stays VMEM-resident for all layers; single-buffering halves its VMEM.
        extra = {"pipeline_mode": pl.Buffered(1)} if single_buffer_weights else {}
        weight_specs = [
            pl.BlockSpec(w.shape, (lambda b, l, nd=w.ndim: (0,) * nd), **extra)
            for w in weight_args
        ]
        return pl.pallas_call(
            kernel,
            out_shape=jax.ShapeDtypeStruct((B, S, H), f32),
            # Layer axis MUST stay innermost + "arbitrary" for the h_scr carry.
            grid=(B, num_layers),
            in_specs=[
                pl.BlockSpec((1, S, E), lambda b, l: (b, 0, 0)),
                pl.BlockSpec((1, 1, S), lambda b, l: (b, 0, 0)),
            ] + weight_specs,
            out_specs=pl.BlockSpec((1, S, H), lambda b, l: (b, 0, 0)),
            scratch_shapes=[pltpu.VMEM((S, H), f32)],
            compiler_params=pltpu.CompilerParams(
                dimension_semantics=("parallel", "arbitrary"),
                vmem_limit_bytes=_vmem_limit_bytes(),
            ),
        )

    try:
        out = build(True)(x, attn_mask, *weight_args)
        return jax.block_until_ready(out)
    except Exception:
        # pl.Buffered(1) not supported on this jax build -> default buffering.
        out = build(False)(x, attn_mask, *weight_args)
        return jax.block_until_ready(out)


# ------------------------------ pure-JAX reference ------------------------------
def _ref_encoder(x, attn_mask, params, *, num_layers, num_heads):
    (ln_g, ln_b, wq, bq, wk, bk, wv, bv, wo, bo, lno_g, lno_b,
     wi, bi, wo2, bo2, ln1_g, ln1_b) = params["layer"]
    B, S, _ = x.shape
    H = wq.shape[0]
    dh = H // num_heads
    mask = attn_mask[:, 0, :]            # (B, S)
    h = x
    for i in range(num_layers):
        if i == 0:
            h = h @ params["emb_w"] + params["emb_b"]
            h = _layer_norm(h, ln_g, ln_b)
        q = h @ wq + bq
        k = h @ wk + bk
        v = h @ wv + bv
        qh = q.reshape(B, S, num_heads, dh).transpose(0, 2, 1, 3)
        kh = k.reshape(B, S, num_heads, dh).transpose(0, 2, 1, 3)
        vh = v.reshape(B, S, num_heads, dh).transpose(0, 2, 1, 3)
        s = jnp.einsum("bnqd,bnkd->bnqk", qh, kh) / math.sqrt(dh)
        s = s + mask[:, None, None, :]
        p = jax.nn.softmax(s, axis=-1)
        ctx = jnp.einsum("bnqk,bnkd->bnqd", p, vh).transpose(0, 2, 1, 3).reshape(B, S, H)
        a = _layer_norm(ctx @ wo + bo + h, lno_g, lno_b)
        an = _layer_norm(a, ln_g, ln_b)
        inter = _gelu(an @ wi + bi)
        h = _layer_norm(inter @ wo2 + bo2 + an, ln1_g, ln1_b)
    return h


if __name__ == "__main__":
    B, S = 2, 8
    E, H, I = 16, 32, 64         # embedding_size, hidden_size, intermediate_size
    NH, L = 4, 2                 # num_attention_heads, num_hidden_layers

    key = jax.random.PRNGKey(0)
    ks = jax.random.split(key, 16)

    def nrm(k, shape, scale=0.02):
        return (scale * jax.random.normal(k, shape)).astype(jnp.float32)

    ones_h = jnp.ones((1, H), jnp.float32)
    zeros_h = jnp.zeros((1, H), jnp.float32)

    params = {
        "emb_w": nrm(ks[0], (E, H)),
        "emb_b": nrm(ks[1], (1, H)),
        "layer": [
            ones_h, zeros_h,                           # LayerNorm (shared)
            nrm(ks[2], (H, H)), nrm(ks[3], (1, H)),    # query
            nrm(ks[4], (H, H)), nrm(ks[5], (1, H)),    # key
            nrm(ks[6], (H, H)), nrm(ks[7], (1, H)),    # value
            nrm(ks[8], (H, H)), nrm(ks[9], (1, H)),    # attn output dense
            ones_h, zeros_h,                           # attn output LayerNorm
            nrm(ks[10], (H, I)), nrm(ks[11], (1, I)),  # intermediate dense
            nrm(ks[12], (I, H)), nrm(ks[13], (1, H)),  # output dense
            ones_h, zeros_h,                           # LayerNorm_1
        ],
    }

    x = jax.random.normal(ks[14], (B, S, E), jnp.float32)
    # additive attention mask: 0 = attend, -10000 = masked (mask last 2 keys of batch 1)
    attn_mask = jnp.zeros((B, 1, S), jnp.float32).at[1, 0, -2:].set(-10000.0)

    out = albert_encoder(x, attn_mask, params, num_layers=L, num_heads=NH)
    out = jax.block_until_ready(out)

    ref = _ref_encoder(x, attn_mask, params, num_layers=L, num_heads=NH)
    assert out.shape == (B, S, H)
    # bf16 MXU inputs (f32 accumulation) -> loosen tolerance vs. the f32 reference
    max_err = float(jnp.max(jnp.abs(out - ref)))
    assert max_err < 2.5e-2, max_err

    print("KERNEL_OK")
</pallas_src>

<mosaic_0001>
module attributes {stable_mosaic.version = 11 : i64} {
  func.func @_encoder_kernel(%arg0: i32, %arg1: i32, %arg2: memref<1x8x16xf32, #tpu.memory_space<vmem>>, %arg3: memref<1x1x8xf32, #tpu.memory_space<vmem>>, %arg4: memref<16x32xbf16, #tpu.memory_space<vmem>>, %arg5: memref<1x32xf32, #tpu.memory_space<vmem>>, %arg6: memref<1x32xf32, #tpu.memory_space<vmem>>, %arg7: memref<1x32xf32, #tpu.memory_space<vmem>>, %arg8: memref<32x96xbf16, #tpu.memory_space<vmem>>, %arg9: memref<1x96xf32, #tpu.memory_space<vmem>>, %arg10: memref<32x32xbf16, #tpu.memory_space<vmem>>, %arg11: memref<1x32xf32, #tpu.memory_space<vmem>>, %arg12: memref<1x32xf32, #tpu.memory_space<vmem>>, %arg13: memref<1x32xf32, #tpu.memory_space<vmem>>, %arg14: memref<32x64xbf16, #tpu.memory_space<vmem>>, %arg15: memref<1x64xf32, #tpu.memory_space<vmem>>, %arg16: memref<64x32xbf16, #tpu.memory_space<vmem>>, %arg17: memref<1x32xf32, #tpu.memory_space<vmem>>, %arg18: memref<1x32xf32, #tpu.memory_space<vmem>>, %arg19: memref<1x32xf32, #tpu.memory_space<vmem>>, %arg20: memref<1x8x32xf32, #tpu.memory_space<vmem>>, %arg21: memref<8x32xf32, #tpu.memory_space<vmem>>) attributes {dimension_semantics = [#tpu.dimension_semantics<parallel>, #tpu.dimension_semantics<arbitrary>], iteration_bounds = array<i64: 2, 2>, scalar_prefetch = 0 : i64, scratch_operands = 1 : i64, tpu.core_type = #tpu.core_type<tc>, window_params = [{transform_indices = @transform_0, window_bounds = array<i64: 1, 8, 16>}, {transform_indices = @transform_1, window_bounds = array<i64: 1, 1, 8>}, {pipeline_mode = #tpu.pipeline_mode<synchronous>, transform_indices = @transform_2, window_bounds = array<i64: 16, 32>}, {pipeline_mode = #tpu.pipeline_mode<synchronous>, transform_indices = @transform_3, window_bounds = array<i64: 1, 32>}, {pipeline_mode = #tpu.pipeline_mode<synchronous>, transform_indices = @transform_4, window_bounds = array<i64: 1, 32>}, {pipeline_mode = #tpu.pipeline_mode<synchronous>, transform_indices = @transform_5, window_bounds = array<i64: 1, 32>}, {pipeline_mode = #tpu.pipeline_mode<synchronous>, transform_indices = @transform_6, window_bounds = array<i64: 32, 96>}, {pipeline_mode = #tpu.pipeline_mode<synchronous>, transform_indices = @transform_7, window_bounds = array<i64: 1, 96>}, {pipeline_mode = #tpu.pipeline_mode<synchronous>, transform_indices = @transform_8, window_bounds = array<i64: 32, 32>}, {pipeline_mode = #tpu.pipeline_mode<synchronous>, transform_indices = @transform_9, window_bounds = array<i64: 1, 32>}, {pipeline_mode = #tpu.pipeline_mode<synchronous>, transform_indices = @transform_10, window_bounds = array<i64: 1, 32>}, {pipeline_mode = #tpu.pipeline_mode<synchronous>, transform_indices = @transform_11, window_bounds = array<i64: 1, 32>}, {pipeline_mode = #tpu.pipeline_mode<synchronous>, transform_indices = @transform_12, window_bounds = array<i64: 32, 64>}, {pipeline_mode = #tpu.pipeline_mode<synchronous>, transform_indices = @transform_13, window_bounds = array<i64: 1, 64>}, {pipeline_mode = #tpu.pipeline_mode<synchronous>, transform_indices = @transform_14, window_bounds = array<i64: 64, 32>}, {pipeline_mode = #tpu.pipeline_mode<synchronous>, transform_indices = @transform_15, window_bounds = array<i64: 1, 32>}, {pipeline_mode = #tpu.pipeline_mode<synchronous>, transform_indices = @transform_16, window_bounds = array<i64: 1, 32>}, {pipeline_mode = #tpu.pipeline_mode<synchronous>, transform_indices = @transform_17, window_bounds = array<i64: 1, 32>}, {transform_indices = @transform_18, window_bounds = array<i64: 1, 8, 32>}]} {
    %c0 = arith.constant 0 : index
    %c0_0 = arith.constant 0 : index
    %0 = vector.load %arg6[%c0, %c0_0] : memref<1x32xf32, #tpu.memory_space<vmem>>, vector<1x32xf32>
    %c0_1 = arith.constant 0 : index
    %c0_2 = arith.constant 0 : index
    %1 = vector.load %arg7[%c0_1, %c0_2] : memref<1x32xf32, #tpu.memory_space<vmem>>, vector<1x32xf32>
    %c0_i32 = arith.constant 0 : i32
    %2 = arith.cmpi eq, %arg1, %c0_i32 : i32
    %3 = arith.extui %2 : i1 to i32
    %c0_i32_3 = arith.constant 0 : i32
    %4 = arith.cmpi ne, %3, %c0_i32_3 : i32
    scf.if %4 {
      %c0_77 = arith.constant 0 : index
      %c0_78 = arith.constant 0 : index
      %c0_79 = arith.constant 0 : index
      %213 = vector.load %arg2[%c0_77, %c0_78, %c0_79] : memref<1x8x16xf32, #tpu.memory_space<vmem>>, vector<1x8x16xf32>
      %214 = vector.shape_cast %213 : vector<1x8x16xf32> to vector<8x16xf32>
      %215 = arith.truncf %214 : vector<8x16xf32> to vector<8x16xbf16>
      %c0_80 = arith.constant 0 : index
      %c0_81 = arith.constant 0 : index
      %216 = vector.load %arg4[%c0_80, %c0_81] : memref<16x32xbf16, #tpu.memory_space<vmem>>, vector<16x32xbf16>
      %cst_82 = arith.constant dense<0.000000e+00> : vector<8x32xf32>
      %217 = tpu.matmul %215, %216, %cst_82 {dimension_numbers = #tpu.dot_dimension_numbers<[1], [0], [0], [1], [0, 0, 1, 1], [], []>} : vector<8x16xbf16>, vector<16x32xbf16>, vector<8x32xf32> -> vector<8x32xf32>
      %c0_83 = arith.constant 0 : index
      %c0_84 = arith.constant 0 : index
      %218 = vector.load %arg5[%c0_83, %c0_84] : memref<1x32xf32, #tpu.memory_space<vmem>>, vector<1x32xf32>
      %219 = vector.broadcast %218 : vector<1x32xf32> to vector<8x32xf32>
      %220 = arith.addf %217, %219 : vector<8x32xf32>
      %cst_85 = arith.constant dense<0.000000e+00> : vector<8xf32>
      %221 = vector.multi_reduction <add>, %220, %cst_85 [1] : vector<8x32xf32> to vector<8xf32>
      %222 = vector.shape_cast %221 : vector<8xf32> to vector<8x1xf32>
      %cst_86 = arith.constant 3.200000e+01 : f32
      %223 = vector.broadcast %cst_86 : f32 to vector<8x1xf32>
      %224 = arith.divf %222, %223 : vector<8x1xf32>
      %225 = vector.broadcast %224 : vector<8x1xf32> to vector<8x32xf32>
      %226 = arith.subf %220, %225 : vector<8x32xf32>
      %227 = arith.mulf %226, %226 : vector<8x32xf32>
      %cst_87 = arith.constant dense<0.000000e+00> : vector<8xf32>
      %228 = vector.multi_reduction <add>, %227, %cst_87 [1] : vector<8x32xf32> to vector<8xf32>
      %229 = vector.shape_cast %228 : vector<8xf32> to vector<8x1xf32>
      %cst_88 = arith.constant 3.200000e+01 : f32
      %230 = vector.broadcast %cst_88 : f32 to vector<8x1xf32>
      %231 = arith.divf %229, %230 : vector<8x1xf32>
      %232 = vector.broadcast %224 : vector<8x1xf32> to vector<8x32xf32>
      %233 = arith.subf %220, %232 : vector<8x32xf32>
      %cst_89 = arith.constant 9.99999996E-13 : f32
      %234 = vector.broadcast %cst_89 : f32 to vector<8x1xf32>
      %235 = arith.addf %231, %234 : vector<8x1xf32>
      %236 = math.rsqrt %235 : vector<8x1xf32>
      %237 = vector.broadcast %236 : vector<8x1xf32> to vector<8x32xf32>
      %238 = arith.mulf %233, %237 : vector<8x32xf32>
      %239 = vector.broadcast %0 : vector<1x32xf32> to vector<8x32xf32>
      %240 = arith.mulf %238, %239 : vector<8x32xf32>
      %241 = vector.broadcast %1 : vector<1x32xf32> to vector<8x32xf32>
      %242 = arith.addf %240, %241 : vector<8x32xf32>
      %c0_90 = arith.constant 0 : index
      %c0_91 = arith.constant 0 : index
      %243 = vector.load %arg21[%c0_90, %c0_91] : memref<8x32xf32, #tpu.memory_space<vmem>>, vector<8x32xf32>
      tpu.vector_store %arg21[%c0_90, %c0_91], %242 {strides = array<i32>} : memref<8x32xf32, #tpu.memory_space<vmem>>, vector<8x32xf32>,
    } else {
    }
    %c0_4 = arith.constant 0 : index
    %c0_5 = arith.constant 0 : index
    %5 = vector.load %arg21[%c0_4, %c0_5] : memref<8x32xf32, #tpu.memory_space<vmem>>, vector<8x32xf32>
    %c0_6 = arith.constant 0 : index
    %c0_7 = arith.constant 0 : index
    %c0_8 = arith.constant 0 : index
    %6 = vector.load %arg3[%c0_6, %c0_7, %c0_8] : memref<1x1x8xf32, #tpu.memory_space<vmem>>, vector<1x1x8xf32>
    %7 = vector.shape_cast %6 : vector<1x1x8xf32> to vector<8xf32>
    %8 = arith.truncf %5 : vector<8x32xf32> to vector<8x32xbf16>
    %c0_9 = arith.constant 0 : index
    %c0_10 = arith.constant 0 : index
    %9 = vector.load %arg8[%c0_9, %c0_10] : memref<32x96xbf16, #tpu.memory_space<vmem>>, vector<32x96xbf16>
    %cst = arith.constant dense<0.000000e+00> : vector<8x96xf32>
    %10 = tpu.matmul %8, %9, %cst {dimension_numbers = #tpu.dot_dimension_numbers<[1], [0], [0], [1], [0, 0, 1, 1], [], []>} : vector<8x32xbf16>, vector<32x96xbf16>, vector<8x96xf32> -> vector<8x96xf32>
    %c0_11 = arith.constant 0 : index
    %c0_12 = arith.constant 0 : index
    %11 = vector.load %arg9[%c0_11, %c0_12] : memref<1x96xf32, #tpu.memory_space<vmem>>, vector<1x96xf32>
    %12 = vector.broadcast %11 : vector<1x96xf32> to vector<8x96xf32>
    %13 = arith.addf %10, %12 : vector<8x96xf32>
    %14 = vector.extract_strided_slice %13 {offsets = [0, 0], sizes = [8, 8], strides = [1, 1]} : vector<8x96xf32> to vector<8x8xf32>
    %cst_13 = arith.constant 0.353553385 : f32
    %15 = vector.broadcast %cst_13 : f32 to vector<8x8xf32>
    %16 = arith.mulf %14, %15 : vector<8x8xf32>
    %17 = arith.truncf %16 : vector<8x8xf32> to vector<8x8xbf16>
    %18 = vector.extract_strided_slice %13 {offsets = [0, 32], sizes = [8, 8], strides = [1, 1]} : vector<8x96xf32> to vector<8x8xf32>
    %19 = arith.truncf %18 : vector<8x8xf32> to vector<8x8xbf16>
    %20 = vector.extract_strided_slice %13 {offsets = [0, 64], sizes = [8, 8], strides = [1, 1]} : vector<8x96xf32> to vector<8x8xf32>
    %21 = arith.truncf %20 : vector<8x8xf32> to vector<8x8xbf16>
    %cst_14 = arith.constant dense<0.000000e+00> : vector<8x8xf32>
    %22 = tpu.matmul %17, %19, %cst_14 {dimension_numbers = #tpu.dot_dimension_numbers<[1], [1], [0], [0], [0, 0, 1, 0], [], []>} : vector<8x8xbf16>, vector<8x8xbf16>, vector<8x8xf32> -> vector<8x8xf32>
    %23 = vector.shape_cast %7 : vector<8xf32> to vector<1x8xf32>
    %24 = vector.broadcast %23 : vector<1x8xf32> to vector<8x8xf32>
    %25 = arith.addf %22, %24 : vector<8x8xf32>
    %cst_15 = arith.constant dense<0xFF800000> : vector<8xf32>
    %26 = vector.multi_reduction <maximumf>, %25, %cst_15 [1] : vector<8x8xf32> to vector<8xf32>
    %27 = vector.shape_cast %26 : vector<8xf32> to vector<8x1xf32>
    %28 = vector.broadcast %27 : vector<8x1xf32> to vector<8x8xf32>
    %29 = arith.subf %25, %28 : vector<8x8xf32>
    %30 = math.exp %29 : vector<8x8xf32>
    %cst_16 = arith.constant dense<0.000000e+00> : vector<8xf32>
    %31 = vector.multi_reduction <add>, %30, %cst_16 [1] : vector<8x8xf32> to vector<8xf32>
    %32 = vector.shape_cast %31 : vector<8xf32> to vector<8x1xf32>
    %33 = tpu.reciprocal %32 {approx = true} : vector<8x1xf32> -> vector<8x1xf32>
    %34 = vector.broadcast %33 : vector<8x1xf32> to vector<8x8xf32>
    %35 = arith.mulf %30, %34 : vector<8x8xf32>
    %36 = arith.truncf %35 : vector<8x8xf32> to vector<8x8xbf16>
    %cst_17 = arith.constant dense<0.000000e+00> : vector<8x8xf32>
    %37 = tpu.matmul %36, %21, %cst_17 {dimension_numbers = #tpu.dot_dimension_numbers<[1], [0], [0], [1], [0, 0, 1, 1], [], []>} : vector<8x8xbf16>, vector<8x8xbf16>, vector<8x8xf32> -> vector<8x8xf32>
    %38 = vector.extract_strided_slice %13 {offsets = [0, 8], sizes = [8, 8], strides = [1, 1]} : vector<8x96xf32> to vector<8x8xf32>
    %cst_18 = arith.constant 0.353553385 : f32
    %39 = vector.broadcast %cst_18 : f32 to vector<8x8xf32>
    %40 = arith.mulf %38, %39 : vector<8x8xf32>
    %41 = arith.truncf %40 : vector<8x8xf32> to vector<8x8xbf16>
    %42 = vector.extract_strided_slice %13 {offsets = [0, 40], sizes = [8, 8], strides = [1, 1]} : vector<8x96xf32> to vector<8x8xf32>
    %43 = arith.truncf %42 : vector<8x8xf32> to vector<8x8xbf16>
    %44 = vector.extract_strided_slice %13 {offsets = [0, 72], sizes = [8, 8], strides = [1, 1]} : vector<8x96xf32> to vector<8x8xf32>
    %45 = arith.truncf %44 : vector<8x8xf32> to vector<8x8xbf16>
    %cst_19 = arith.constant dense<0.000000e+00> : vector<8x8xf32>
    %46 = tpu.matmul %41, %43, %cst_19 {dimension_numbers = #tpu.dot_dimension_numbers<[1], [1], [0], [0], [0, 0, 1, 0], [], []>} : vector<8x8xbf16>, vector<8x8xbf16>, vector<8x8xf32> -> vector<8x8xf32>
    %47 = vector.shape_cast %7 : vector<8xf32> to vector<1x8xf32>
    %48 = vector.broadcast %47 : vector<1x8xf32> to vector<8x8xf32>
    %49 = arith.addf %46, %48 : vector<8x8xf32>
    %cst_20 = arith.constant dense<0xFF800000> : vector<8xf32>
    %50 = vector.multi_reduction <maximumf>, %49, %cst_20 [1] : vector<8x8xf32> to vector<8xf32>
    %51 = vector.shape_cast %50 : vector<8xf32> to vector<8x1xf32>
    %52 = vector.broadcast %51 : vector<8x1xf32> to vector<8x8xf32>
    %53 = arith.subf %49, %52 : vector<8x8xf32>
    %54 = math.exp %53 : vector<8x8xf32>
    %cst_21 = arith.constant dense<0.000000e+00> : vector<8xf32>
    %55 = vector.multi_reduction <add>, %54, %cst_21 [1] : vector<8x8xf32> to vector<8xf32>
    %56 = vector.shape_cast %55 : vector<8xf32> to vector<8x1xf32>
    %57 = tpu.reciprocal %56 {approx = true} : vector<8x1xf32> -> vector<8x1xf32>
    %58 = vector.broadcast %57 : vector<8x1xf32> to vector<8x8xf32>
    %59 = arith.mulf %54, %58 : vector<8x8xf32>
    %60 = arith.truncf %59 : vector<8x8xf32> to vector<8x8xbf16>
    %cst_22 = arith.constant dense<0.000000e+00> : vector<8x8xf32>
    %61 = tpu.matmul %60, %45, %cst_22 {dimension_numbers = #tpu.dot_dimension_numbers<[1], [0], [0], [1], [0, 0, 1, 1], [], []>} : vector<8x8xbf16>, vector<8x8xbf16>, vector<8x8xf32> -> vector<8x8xf32>
    %62 = vector.extract_strided_slice %13 {offsets = [0, 16], sizes = [8, 8], strides = [1, 1]} : vector<8x96xf32> to vector<8x8xf32>
    %cst_23 = arith.constant 0.353553385 : f32
    %63 = vector.broadcast %cst_23 : f32 to vector<8x8xf32>
    %64 = arith.mulf %62, %63 : vector<8x8xf32>
    %65 = arith.truncf %64 : vector<8x8xf32> to vector<8x8xbf16>
    %66 = vector.extract_strided_slice %13 {offsets = [0, 48], sizes = [8, 8], strides = [1, 1]} : vector<8x96xf32> to vector<8x8xf32>
    %67 = arith.truncf %66 : vector<8x8xf32> to vector<8x8xbf16>
    %68 = vector.extract_strided_slice %13 {offsets = [0, 80], sizes = [8, 8], strides = [1, 1]} : vector<8x96xf32> to vector<8x8xf32>
    %69 = arith.truncf %68 : vector<8x8xf32> to vector<8x8xbf16>
    %cst_24 = arith.constant dense<0.000000e+00> : vector<8x8xf32>
    %70 = tpu.matmul %65, %67, %cst_24 {dimension_numbers = #tpu.dot_dimension_numbers<[1], [1], [0], [0], [0, 0, 1, 0], [], []>} : vector<8x8xbf16>, vector<8x8xbf16>, vector<8x8xf32> -> vector<8x8xf32>
    %71 = vector.shape_cast %7 : vector<8xf32> to vector<1x8xf32>
    %72 = vector.broadcast %71 : vector<1x8xf32> to vector<8x8xf32>
    %73 = arith.addf %70, %72 : vector<8x8xf32>
    %cst_25 = arith.constant dense<0xFF800000> : vector<8xf32>
    %74 = vector.multi_reduction <maximumf>, %73, %cst_25 [1] : vector<8x8xf32> to vector<8xf32>
    %75 = vector.shape_cast %74 : vector<8xf32> to vector<8x1xf32>
    %76 = vector.broadcast %75 : vector<8x1xf32> to vector<8x8xf32>
    %77 = arith.subf %73, %76 : vector<8x8xf32>
    %78 = math.exp %77 : vector<8x8xf32>
    %cst_26 = arith.constant dense<0.000000e+00> : vector<8xf32>
    %79 = vector.multi_reduction <add>, %78, %cst_26 [1] : vector<8x8xf32> to vector<8xf32>
    %80 = vector.shape_cast %79 : vector<8xf32> to vector<8x1xf32>
    %81 = tpu.reciprocal %80 {approx = true} : vector<8x1xf32> -> vector<8x1xf32>
    %82 = vector.broadcast %81 : vector<8x1xf32> to vector<8x8xf32>
    %83 = arith.mulf %78, %82 : vector<8x8xf32>
    %84 = arith.truncf %83 : vector<8x8xf32> to vector<8x8xbf16>
    %cst_27 = arith.constant dense<0.000000e+00> : vector<8x8xf32>
    %85 = tpu.matmul %84, %69, %cst_27 {dimension_numbers = #tpu.dot_dimension_numbers<[1], [0], [0], [1], [0, 0, 1, 1], [], []>} : vector<8x8xbf16>, vector<8x8xbf16>, vector<8x8xf32> -> vector<8x8xf32>
    %86 = vector.extract_strided_slice %13 {offsets = [0, 24], sizes = [8, 8], strides = [1, 1]} : vector<8x96xf32> to vector<8x8xf32>
    %cst_28 = arith.constant 0.353553385 : f32
    %87 = vector.broadcast %cst_28 : f32 to vector<8x8xf32>
    %88 = arith.mulf %86, %87 : vector<8x8xf32>
    %89 = arith.truncf %88 : vector<8x8xf32> to vector<8x8xbf16>
    %90 = vector.extract_strided_slice %13 {offsets = [0, 56], sizes = [8, 8], strides = [1, 1]} : vector<8x96xf32> to vector<8x8xf32>
    %91 = arith.truncf %90 : vector<8x8xf32> to vector<8x8xbf16>
    %92 = vector.extract_strided_slice %13 {offsets = [0, 88], sizes = [8, 8], strides = [1, 1]} : vector<8x96xf32> to vector<8x8xf32>
    %93 = arith.truncf %92 : vector<8x8xf32> to vector<8x8xbf16>
    %cst_29 = arith.constant dense<0.000000e+00> : vector<8x8xf32>
    %94 = tpu.matmul %89, %91, %cst_29 {dimension_numbers = #tpu.dot_dimension_numbers<[1], [1], [0], [0], [0, 0, 1, 0], [], []>} : vector<8x8xbf16>, vector<8x8xbf16>, vector<8x8xf32> -> vector<8x8xf32>
    %95 = vector.shape_cast %7 : vector<8xf32> to vector<1x8xf32>
    %96 = vector.broadcast %95 : vector<1x8xf32> to vector<8x8xf32>
    %97 = arith.addf %94, %96 : vector<8x8xf32>
    %cst_30 = arith.constant dense<0xFF800000> : vector<8xf32>
    %98 = vector.multi_reduction <maximumf>, %97, %cst_30 [1] : vector<8x8xf32> to vector<8xf32>
    %99 = vector.shape_cast %98 : vector<8xf32> to vector<8x1xf32>
    %100 = vector.broadcast %99 : vector<8x1xf32> to vector<8x8xf32>
    %101 = arith.subf %97, %100 : vector<8x8xf32>
    %102 = math.exp %101 : vector<8x8xf32>
    %cst_31 = arith.constant dense<0.000000e+00> : vector<8xf32>
    %103 = vector.multi_reduction <add>, %102, %cst_31 [1] : vector<8x8xf32> to vector<8xf32>
    %104 = vector.shape_cast %103 : vector<8xf32> to vector<8x1xf32>
    %105 = tpu.reciprocal %104 {approx = true} : vector<8x1xf32> -> vector<8x1xf32>
    %106 = vector.broadcast %105 : vector<8x1xf32> to vector<8x8xf32>
    %107 = arith.mulf %102, %106 : vector<8x8xf32>
    %108 = arith.truncf %107 : vector<8x8xf32> to vector<8x8xbf16>
    %cst_32 = arith.constant dense<0.000000e+00> : vector<8x8xf32>
    %109 = tpu.matmul %108, %93, %cst_32 {dimension_numbers = #tpu.dot_dimension_numbers<[1], [0], [0], [1], [0, 0, 1, 1], [], []>} : vector<8x8xbf16>, vector<8x8xbf16>, vector<8x8xf32> -> vector<8x8xf32>
    %110 = tpu.concatenate %37, %61, %85, %109 in 1 : vector<8x8xf32>, vector<8x8xf32>, vector<8x8xf32>, vector<8x8xf32> -> vector<8x32xf32>
    %111 = arith.truncf %110 : vector<8x32xf32> to vector<8x32xbf16>
    %c0_33 = arith.constant 0 : index
    %c0_34 = arith.constant 0 : index
    %112 = vector.load %arg10[%c0_33, %c0_34] : memref<32x32xbf16, #tpu.memory_space<vmem>>, vector<32x32xbf16>
    %cst_35 = arith.constant dense<0.000000e+00> : vector<8x32xf32>
    %113 = tpu.matmul %111, %112, %cst_35 {dimension_numbers = #tpu.dot_dimension_numbers<[1], [0], [0], [1], [0, 0, 1, 1], [], []>} : vector<8x32xbf16>, vector<32x32xbf16>, vector<8x32xf32> -> vector<8x32xf32>
    %c0_36 = arith.constant 0 : index
    %c0_37 = arith.constant 0 : index
    %114 = vector.load %arg11[%c0_36, %c0_37] : memref<1x32xf32, #tpu.memory_space<vmem>>, vector<1x32xf32>
    %115 = vector.broadcast %114 : vector<1x32xf32> to vector<8x32xf32>
    %116 = arith.addf %113, %115 : vector<8x32xf32>
    %117 = arith.addf %116, %5 : vector<8x32xf32>
    %c0_38 = arith.constant 0 : index
    %c0_39 = arith.constant 0 : index
    %118 = vector.load %arg12[%c0_38, %c0_39] : memref<1x32xf32, #tpu.memory_space<vmem>>, vector<1x32xf32>
    %c0_40 = arith.constant 0 : index
    %c0_41 = arith.constant 0 : index
    %119 = vector.load %arg13[%c0_40, %c0_41] : memref<1x32xf32, #tpu.memory_space<vmem>>, vector<1x32xf32>
    %cst_42 = arith.constant dense<0.000000e+00> : vector<8xf32>
    %120 = vector.multi_reduction <add>, %117, %cst_42 [1] : vector<8x32xf32> to vector<8xf32>
    %121 = vector.shape_cast %120 : vector<8xf32> to vector<8x1xf32>
    %cst_43 = arith.constant 3.200000e+01 : f32
    %122 = vector.broadcast %cst_43 : f32 to vector<8x1xf32>
    %123 = arith.divf %121, %122 : vector<8x1xf32>
    %124 = vector.broadcast %123 : vector<8x1xf32> to vector<8x32xf32>
    %125 = arith.subf %117, %124 : vector<8x32xf32>
    %126 = arith.mulf %125, %125 : vector<8x32xf32>
    %cst_44 = arith.constant dense<0.000000e+00> : vector<8xf32>
    %127 = vector.multi_reduction <add>, %126, %cst_44 [1] : vector<8x32xf32> to vector<8xf32>
    %128 = vector.shape_cast %127 : vector<8xf32> to vector<8x1xf32>
    %cst_45 = arith.constant 3.200000e+01 : f32
    %129 = vector.broadcast %cst_45 : f32 to vector<8x1xf32>
    %130 = arith.divf %128, %129 : vector<8x1xf32>
    %131 = vector.broadcast %123 : vector<8x1xf32> to vector<8x32xf32>
    %132 = arith.subf %117, %131 : vector<8x32xf32>
    %cst_46 = arith.constant 9.99999996E-13 : f32
    %133 = vector.broadcast %cst_46 : f32 to vector<8x1xf32>
    %134 = arith.addf %130, %133 : vector<8x1xf32>
    %135 = math.rsqrt %134 : vector<8x1xf32>
    %136 = vector.broadcast %135 : vector<8x1xf32> to vector<8x32xf32>
    %137 = arith.mulf %132, %136 : vector<8x32xf32>
    %138 = vector.broadcast %118 : vector<1x32xf32> to vector<8x32xf32>
    %139 = arith.mulf %137, %138 : vector<8x32xf32>
    %140 = vector.broadcast %119 : vector<1x32xf32> to vector<8x32xf32>
    %141 = arith.addf %139, %140 : vector<8x32xf32>
    %cst_47 = arith.constant dense<0.000000e+00> : vector<8xf32>
    %142 = vector.multi_reduction <add>, %141, %cst_47 [1] : vector<8x32xf32> to vector<8xf32>
    %143 = vector.shape_cast %142 : vector<8xf32> to vector<8x1xf32>
    %cst_48 = arith.constant 3.200000e+01 : f32
    %144 = vector.broadcast %cst_48 : f32 to vector<8x1xf32>
    %145 = arith.divf %143, %144 : vector<8x1xf32>
    %146 = vector.broadcast %145 : vector<8x1xf32> to vector<8x32xf32>
    %147 = arith.subf %141, %146 : vector<8x32xf32>
    %148 = arith.mulf %147, %147 : vector<8x32xf32>
    %cst_49 = arith.constant dense<0.000000e+00> : vector<8xf32>
    %149 = vector.multi_reduction <add>, %148, %cst_49 [1] : vector<8x32xf32> to vector<8xf32>
    %150 = vector.shape_cast %149 : vector<8xf32> to vector<8x1xf32>
    %cst_50 = arith.constant 3.200000e+01 : f32
    %151 = vector.broadcast %cst_50 : f32 to vector<8x1xf32>
    %152 = arith.divf %150, %151 : vector<8x1xf32>
    %153 = vector.broadcast %145 : vector<8x1xf32> to vector<8x32xf32>
    %154 = arith.subf %141, %153 : vector<8x32xf32>
    %cst_51 = arith.constant 9.99999996E-13 : f32
    %155 = vector.broadcast %cst_51 : f32 to vector<8x1xf32>
    %156 = arith.addf %152, %155 : vector<8x1xf32>
    %157 = math.rsqrt %156 : vector<8x1xf32>
    %158 = vector.broadcast %157 : vector<8x1xf32> to vector<8x32xf32>
    %159 = arith.mulf %154, %158 : vector<8x32xf32>
    %160 = vector.broadcast %0 : vector<1x32xf32> to vector<8x32xf32>
    %161 = arith.mulf %159, %160 : vector<8x32xf32>
    %162 = vector.broadcast %1 : vector<1x32xf32> to vector<8x32xf32>
    %163 = arith.addf %161, %162 : vector<8x32xf32>
    %164 = arith.truncf %163 : vector<8x32xf32> to vector<8x32xbf16>
    %c0_52 = arith.constant 0 : index
    %c0_53 = arith.constant 0 : index
    %165 = vector.load %arg14[%c0_52, %c0_53] : memref<32x64xbf16, #tpu.memory_space<vmem>>, vector<32x64xbf16>
    %cst_54 = arith.constant dense<0.000000e+00> : vector<8x64xf32>
    %166 = tpu.matmul %164, %165, %cst_54 {dimension_numbers = #tpu.dot_dimension_numbers<[1], [0], [0], [1], [0, 0, 1, 1], [], []>} : vector<8x32xbf16>, vector<32x64xbf16>, vector<8x64xf32> -> vector<8x64xf32>
    %c0_55 = arith.constant 0 : index
    %c0_56 = arith.constant 0 : index
    %167 = vector.load %arg15[%c0_55, %c0_56] : memref<1x64xf32, #tpu.memory_space<vmem>>, vector<1x64xf32>
    %168 = vector.broadcast %167 : vector<1x64xf32> to vector<8x64xf32>
    %169 = arith.addf %166, %168 : vector<8x64xf32>
    %cst_57 = arith.constant 5.000000e-01 : f32
    %170 = vector.broadcast %cst_57 : f32 to vector<8x64xf32>
    %171 = arith.mulf %169, %170 : vector<8x64xf32>
    %cst_58 = arith.constant 1.41421354 : f32
    %172 = vector.broadcast %cst_58 : f32 to vector<8x64xf32>
    %173 = arith.divf %169, %172 : vector<8x64xf32>
    %174 = math.erf %173 : vector<8x64xf32>
    %cst_59 = arith.constant 1.000000e+00 : f32
    %175 = vector.broadcast %cst_59 : f32 to vector<8x64xf32>
    %176 = arith.addf %175, %174 : vector<8x64xf32>
    %177 = arith.mulf %171, %176 : vector<8x64xf32>
    %178 = arith.truncf %177 : vector<8x64xf32> to vector<8x64xbf16>
    %c0_60 = arith.constant 0 : index
    %c0_61 = arith.constant 0 : index
    %179 = vector.load %arg16[%c0_60, %c0_61] : memref<64x32xbf16, #tpu.memory_space<vmem>>, vector<64x32xbf16>
    %cst_62 = arith.constant dense<0.000000e+00> : vector<8x32xf32>
    %180 = tpu.matmul %178, %179, %cst_62 {dimension_numbers = #tpu.dot_dimension_numbers<[1], [0], [0], [1], [0, 0, 1, 1], [], []>} : vector<8x64xbf16>, vector<64x32xbf16>, vector<8x32xf32> -> vector<8x32xf32>
    %c0_63 = arith.constant 0 : index
    %c0_64 = arith.constant 0 : index
    %181 = vector.load %arg17[%c0_63, %c0_64] : memref<1x32xf32, #tpu.memory_space<vmem>>, vector<1x32xf32>
    %182 = vector.broadcast %181 : vector<1x32xf32> to vector<8x32xf32>
    %183 = arith.addf %180, %182 : vector<8x32xf32>
    %184 = arith.addf %183, %163 : vector<8x32xf32>
    %c0_65 = arith.constant 0 : index
    %c0_66 = arith.constant 0 : index
    %185 = vector.load %arg18[%c0_65, %c0_66] : memref<1x32xf32, #tpu.memory_space<vmem>>, vector<1x32xf32>
    %c0_67 = arith.constant 0 : index
    %c0_68 = arith.constant 0 : index
    %186 = vector.load %arg19[%c0_67, %c0_68] : memref<1x32xf32, #tpu.memory_space<vmem>>, vector<1x32xf32>
    %cst_69 = arith.constant dense<0.000000e+00> : vector<8xf32>
    %187 = vector.multi_reduction <add>, %184, %cst_69 [1] : vector<8x32xf32> to vector<8xf32>
    %188 = vector.shape_cast %187 : vector<8xf32> to vector<8x1xf32>
    %cst_70 = arith.constant 3.200000e+01 : f32
    %189 = vector.broadcast %cst_70 : f32 to vector<8x1xf32>
    %190 = arith.divf %188, %189 : vector<8x1xf32>
    %191 = vector.broadcast %190 : vector<8x1xf32> to vector<8x32xf32>
    %192 = arith.subf %184, %191 : vector<8x32xf32>
    %193 = arith.mulf %192, %192 : vector<8x32xf32>
    %cst_71 = arith.constant dense<0.000000e+00> : vector<8xf32>
    %194 = vector.multi_reduction <add>, %193, %cst_71 [1] : vector<8x32xf32> to vector<8xf32>
    %195 = vector.shape_cast %194 : vector<8xf32> to vector<8x1xf32>
    %cst_72 = arith.constant 3.200000e+01 : f32
    %196 = vector.broadcast %cst_72 : f32 to vector<8x1xf32>
    %197 = arith.divf %195, %196 : vector<8x1xf32>
    %198 = vector.broadcast %190 : vector<8x1xf32> to vector<8x32xf32>
    %199 = arith.subf %184, %198 : vector<8x32xf32>
    %cst_73 = arith.constant 9.99999996E-13 : f32
    %200 = vector.broadcast %cst_73 : f32 to vector<8x1xf32>
    %201 = arith.addf %197, %200 : vector<8x1xf32>
    %202 = math.rsqrt %201 : vector<8x1xf32>
    %203 = vector.broadcast %202 : vector<8x1xf32> to vector<8x32xf32>
    %204 = arith.mulf %199, %203 : vector<8x32xf32>
    %205 = vector.broadcast %185 : vector<1x32xf32> to vector<8x32xf32>
    %206 = arith.mulf %204, %205 : vector<8x32xf32>
    %207 = vector.broadcast %186 : vector<1x32xf32> to vector<8x32xf32>
    %208 = arith.addf %206, %207 : vector<8x32xf32>
    %c0_74 = arith.constant 0 : index
    %c0_75 = arith.constant 0 : index
    %209 = vector.load %arg21[%c0_74, %c0_75] : memref<8x32xf32, #tpu.memory_space<vmem>>, vector<8x32xf32>
    tpu.vector_store %arg21[%c0_74, %c0_75], %208 {strides = array<i32>} : memref<8x32xf32, #tpu.memory_space<vmem>>, vector<8x32xf32>,
    %c1_i32 = arith.constant 1 : i32
    %210 = arith.cmpi eq, %arg1, %c1_i32 : i32
    %211 = arith.extui %210 : i1 to i32
    %c0_i32_76 = arith.constant 0 : i32
    %212 = arith.cmpi ne, %211, %c0_i32_76 : i32
    scf.if %212 {
      %c0_77 = arith.constant 0 : index
      %c0_78 = arith.constant 0 : index
      %c0_79 = arith.constant 0 : index
      %213 = vector.load %arg20[%c0_77, %c0_78, %c0_79] : memref<1x8x32xf32, #tpu.memory_space<vmem>>, vector<1x8x32xf32>
      %214 = vector.shape_cast %213 : vector<1x8x32xf32> to vector<8x32xf32>
      %215 = vector.shape_cast %208 : vector<8x32xf32> to vector<1x8x32xf32>
      tpu.vector_store %arg20[%c0_77, %c0_78, %c0_79], %215 {strides = array<i32>} : memref<1x8x32xf32, #tpu.memory_space<vmem>>, vector<1x8x32xf32>,
    } else {
    }
    return
  }
  func.func @transform_0(%arg0: i32, %arg1: i32) -> (i32, i32, i32) {
    %c0_i32 = arith.constant 0 : i32
    %c0_i32_0 = arith.constant 0 : i32
    %c0_i32_1 = arith.constant 0 : i32
    return %arg0, %c0_i32, %c0_i32_0 : i32, i32, i32
  }
  func.func @transform_1(%arg0: i32, %arg1: i32) -> (i32, i32, i32) {
    %c0_i32 = arith.constant 0 : i32
    %c0_i32_0 = arith.constant 0 : i32
    %c0_i32_1 = arith.constant 0 : i32
    return %arg0, %c0_i32, %c0_i32_0 : i32, i32, i32
  }
  func.func @transform_2(%arg0: i32, %arg1: i32) -> (i32, i32) {
    %c0_i32 = arith.constant 0 : i32
    %c0_i32_0 = arith.constant 0 : i32
    %c0_i32_1 = arith.constant 0 : i32
    return %c0_i32, %c0_i32_0 : i32, i32
  }
  func.func @transform_3(%arg0: i32, %arg1: i32) -> (i32, i32) {
    %c0_i32 = arith.constant 0 : i32
    %c0_i32_0 = arith.constant 0 : i32
    %c0_i32_1 = arith.constant 0 : i32
    return %c0_i32, %c0_i32_0 : i32, i32
  }
  func.func @transform_4(%arg0: i32, %arg1: i32) -> (i32, i32) {
    %c0_i32 = arith.constant 0 : i32
    %c0_i32_0 = arith.constant 0 : i32
    %c0_i32_1 = arith.constant 0 : i32
    return %c0_i32, %c0_i32_0 : i32, i32
  }
  func.func @transform_5(%arg0: i32, %arg1: i32) -> (i32, i32) {
    %c0_i32 = arith.constant 0 : i32
    %c0_i32_0 = arith.constant 0 : i32
    %c0_i32_1 = arith.constant 0 : i32
    return %c0_i32, %c0_i32_0 : i32, i32
  }
  func.func @transform_6(%arg0: i32, %arg1: i32) -> (i32, i32) {
    %c0_i32 = arith.constant 0 : i32
    %c0_i32_0 = arith.constant 0 : i32
    %c0_i32_1 = arith.constant 0 : i32
    return %c0_i32, %c0_i32_0 : i32, i32
  }
  func.func @transform_7(%arg0: i32, %arg1: i32) -> (i32, i32) {
    %c0_i32 = arith.constant 0 : i32
    %c0_i32_0 = arith.constant 0 : i32
    %c0_i32_1 = arith.constant 0 : i32
    return %c0_i32, %c0_i32_0 : i32, i32
  }
  func.func @transform_8(%arg0: i32, %arg1: i32) -> (i32, i32) {
    %c0_i32 = arith.constant 0 : i32
    %c0_i32_0 = arith.constant 0 : i32
    %c0_i32_1 = arith.constant 0 : i32
    return %c0_i32, %c0_i32_0 : i32, i32
  }
  func.func @transform_9(%arg0: i32, %arg1: i32) -> (i32, i32) {
    %c0_i32 = arith.constant 0 : i32
    %c0_i32_0 = arith.constant 0 : i32
    %c0_i32_1 = arith.constant 0 : i32
    return %c0_i32, %c0_i32_0 : i32, i32
  }
  func.func @transform_10(%arg0: i32, %arg1: i32) -> (i32, i32) {
    %c0_i32 = arith.constant 0 : i32
    %c0_i32_0 = arith.constant 0 : i32
    %c0_i32_1 = arith.constant 0 : i32
    return %c0_i32, %c0_i32_0 : i32, i32
  }
  func.func @transform_11(%arg0: i32, %arg1: i32) -> (i32, i32) {
    %c0_i32 = arith.constant 0 : i32
    %c0_i32_0 = arith.constant 0 : i32
    %c0_i32_1 = arith.constant 0 : i32
    return %c0_i32, %c0_i32_0 : i32, i32
  }
  func.func @transform_12(%arg0: i32, %arg1: i32) -> (i32, i32) {
    %c0_i32 = arith.constant 0 : i32
    %c0_i32_0 = arith.constant 0 : i32
    %c0_i32_1 = arith.constant 0 : i32
    return %c0_i32, %c0_i32_0 : i32, i32
  }
  func.func @transform_13(%arg0: i32, %arg1: i32) -> (i32, i32) {
    %c0_i32 = arith.constant 0 : i32
    %c0_i32_0 = arith.constant 0 : i32
    %c0_i32_1 = arith.constant 0 : i32
    return %c0_i32, %c0_i32_0 : i32, i32
  }
  func.func @transform_14(%arg0: i32, %arg1: i32) -> (i32, i32) {
    %c0_i32 = arith.constant 0 : i32
    %c0_i32_0 = arith.constant 0 : i32
    %c0_i32_1 = arith.constant 0 : i32
    return %c0_i32, %c0_i32_0 : i32, i32
  }
  func.func @transform_15(%arg0: i32, %arg1: i32) -> (i32, i32) {
    %c0_i32 = arith.constant 0 : i32
    %c0_i32_0 = arith.constant 0 : i32
    %c0_i32_1 = arith.constant 0 : i32
    return %c0_i32, %c0_i32_0 : i32, i32
  }
  func.func @transform_16(%arg0: i32, %arg1: i32) -> (i32, i32) {
    %c0_i32 = arith.constant 0 : i32
    %c0_i32_0 = arith.constant 0 : i32
    %c0_i32_1 = arith.constant 0 : i32
    return %c0_i32, %c0_i32_0 : i32, i32
  }
  func.func @transform_17(%arg0: i32, %arg1: i32) -> (i32, i32) {
    %c0_i32 = arith.constant 0 : i32
    %c0_i32_0 = arith.constant 0 : i32
    %c0_i32_1 = arith.constant 0 : i32
    return %c0_i32, %c0_i32_0 : i32, i32
  }
  func.func @transform_18(%arg0: i32, %arg1: i32) -> (i32, i32, i32) {
    %c0_i32 = arith.constant 0 : i32
    %c0_i32_0 = arith.constant 0 : i32
    %c0_i32_1 = arith.constant 0 : i32
    return %arg0, %c0_i32, %c0_i32_0 : i32, i32, i32
  }
}

module attributes {stable_mosaic.version = 11 : i64} {
  func.func @_encoder_kernel(%arg0: i32, %arg1: i32, %arg2: memref<1x8x16xf32, #tpu.memory_space<vmem>>, %arg3: memref<1x1x8xf32, #tpu.memory_space<vmem>>, %arg4: memref<16x32xbf16, #tpu.memory_space<vmem>>, %arg5: memref<1x32xf32, #tpu.memory_space<vmem>>, %arg6: memref<1x32xf32, #tpu.memory_space<vmem>>, %arg7: memref<1x32xf32, #tpu.memory_space<vmem>>, %arg8: memref<32x96xbf16, #tpu.memory_space<vmem>>, %arg9: memref<1x96xf32, #tpu.memory_space<vmem>>, %arg10: memref<32x32xbf16, #tpu.memory_space<vmem>>, %arg11: memref<1x32xf32, #tpu.memory_space<vmem>>, %arg12: memref<1x32xf32, #tpu.memory_space<vmem>>, %arg13: memref<1x32xf32, #tpu.memory_space<vmem>>, %arg14: memref<32x64xbf16, #tpu.memory_space<vmem>>, %arg15: memref<1x64xf32, #tpu.memory_space<vmem>>, %arg16: memref<64x32xbf16, #tpu.memory_space<vmem>>, %arg17: memref<1x32xf32, #tpu.memory_space<vmem>>, %arg18: memref<1x32xf32, #tpu.memory_space<vmem>>, %arg19: memref<1x32xf32, #tpu.memory_space<vmem>>, %arg20: memref<1x8x32xf32, #tpu.memory_space<vmem>>, %arg21: memref<8x32xf32, #tpu.memory_space<vmem>>) attributes {dimension_semantics = [#tpu.dimension_semantics<parallel>, #tpu.dimension_semantics<arbitrary>], iteration_bounds = array<i64: 2, 2>, scalar_prefetch = 0 : i64, scratch_operands = 1 : i64, tpu.core_type = #tpu.core_type<tc>, window_params = [{transform_indices = @transform_0, window_bounds = array<i64: 1, 8, 16>}, {transform_indices = @transform_1, window_bounds = array<i64: 1, 1, 8>}, {pipeline_mode = #tpu.pipeline_mode<synchronous>, transform_indices = @transform_2, window_bounds = array<i64: 16, 32>}, {pipeline_mode = #tpu.pipeline_mode<synchronous>, transform_indices = @transform_3, window_bounds = array<i64: 1, 32>}, {pipeline_mode = #tpu.pipeline_mode<synchronous>, transform_indices = @transform_4, window_bounds = array<i64: 1, 32>}, {pipeline_mode = #tpu.pipeline_mode<synchronous>, transform_indices = @transform_5, window_bounds = array<i64: 1, 32>}, {pipeline_mode = #tpu.pipeline_mode<synchronous>, transform_indices = @transform_6, window_bounds = array<i64: 32, 96>}, {pipeline_mode = #tpu.pipeline_mode<synchronous>, transform_indices = @transform_7, window_bounds = array<i64: 1, 96>}, {pipeline_mode = #tpu.pipeline_mode<synchronous>, transform_indices = @transform_8, window_bounds = array<i64: 32, 32>}, {pipeline_mode = #tpu.pipeline_mode<synchronous>, transform_indices = @transform_9, window_bounds = array<i64: 1, 32>}, {pipeline_mode = #tpu.pipeline_mode<synchronous>, transform_indices = @transform_10, window_bounds = array<i64: 1, 32>}, {pipeline_mode = #tpu.pipeline_mode<synchronous>, transform_indices = @transform_11, window_bounds = array<i64: 1, 32>}, {pipeline_mode = #tpu.pipeline_mode<synchronous>, transform_indices = @transform_12, window_bounds = array<i64: 32, 64>}, {pipeline_mode = #tpu.pipeline_mode<synchronous>, transform_indices = @transform_13, window_bounds = array<i64: 1, 64>}, {pipeline_mode = #tpu.pipeline_mode<synchronous>, transform_indices = @transform_14, window_bounds = array<i64: 64, 32>}, {pipeline_mode = #tpu.pipeline_mode<synchronous>, transform_indices = @transform_15, window_bounds = array<i64: 1, 32>}, {pipeline_mode = #tpu.pipeline_mode<synchronous>, transform_indices = @transform_16, window_bounds = array<i64: 1, 32>}, {pipeline_mode = #tpu.pipeline_mode<synchronous>, transform_indices = @transform_17, window_bounds = array<i64: 1, 32>}, {transform_indices = @transform_18, window_bounds = array<i64: 1, 8, 32>}]} {
    %c0 = arith.constant 0 : index
    %c0_0 = arith.constant 0 : index
    %0 = vector.load %arg6[%c0, %c0_0] : memref<1x32xf32, #tpu.memory_space<vmem>>, vector<1x32xf32>
    %c0_1 = arith.constant 0 : index
    %c0_2 = arith.constant 0 : index
    %1 = vector.load %arg7[%c0_1, %c0_2] : memref<1x32xf32, #tpu.memory_space<vmem>>, vector<1x32xf32>
    %c0_i32 = arith.constant 0 : i32
    %2 = arith.cmpi eq, %arg1, %c0_i32 : i32
    %3 = arith.extui %2 : i1 to i32
    %c0_i32_3 = arith.constant 0 : i32
    %4 = arith.cmpi ne, %3, %c0_i32_3 : i32
    scf.if %4 {
      %c0_77 = arith.constant 0 : index
      %c0_78 = arith.constant 0 : index
      %c0_79 = arith.constant 0 : index
      %213 = vector.load %arg2[%c0_77, %c0_78, %c0_79] : memref<1x8x16xf32, #tpu.memory_space<vmem>>, vector<1x8x16xf32>
      %214 = vector.shape_cast %213 : vector<1x8x16xf32> to vector<8x16xf32>
      %215 = arith.truncf %214 : vector<8x16xf32> to vector<8x16xbf16>
      %c0_80 = arith.constant 0 : index
      %c0_81 = arith.constant 0 : index
      %216 = vector.load %arg4[%c0_80, %c0_81] : memref<16x32xbf16, #tpu.memory_space<vmem>>, vector<16x32xbf16>
      %cst_82 = arith.constant dense<0.000000e+00> : vector<8x32xf32>
      %217 = tpu.matmul %215, %216, %cst_82 {dimension_numbers = #tpu.dot_dimension_numbers<[1], [0], [0], [1], [0, 0, 1, 1], [], []>} : vector<8x16xbf16>, vector<16x32xbf16>, vector<8x32xf32> -> vector<8x32xf32>
      %c0_83 = arith.constant 0 : index
      %c0_84 = arith.constant 0 : index
      %218 = vector.load %arg5[%c0_83, %c0_84] : memref<1x32xf32, #tpu.memory_space<vmem>>, vector<1x32xf32>
      %219 = vector.broadcast %218 : vector<1x32xf32> to vector<8x32xf32>
      %220 = arith.addf %217, %219 : vector<8x32xf32>
      %cst_85 = arith.constant dense<0.000000e+00> : vector<8xf32>
      %221 = vector.multi_reduction <add>, %220, %cst_85 [1] : vector<8x32xf32> to vector<8xf32>
      %222 = vector.shape_cast %221 : vector<8xf32> to vector<8x1xf32>
      %cst_86 = arith.constant 3.200000e+01 : f32
      %223 = vector.broadcast %cst_86 : f32 to vector<8x1xf32>
      %224 = arith.divf %222, %223 : vector<8x1xf32>
      %225 = vector.broadcast %224 : vector<8x1xf32> to vector<8x32xf32>
      %226 = arith.subf %220, %225 : vector<8x32xf32>
      %227 = arith.mulf %226, %226 : vector<8x32xf32>
      %cst_87 = arith.constant dense<0.000000e+00> : vector<8xf32>
      %228 = vector.multi_reduction <add>, %227, %cst_87 [1] : vector<8x32xf32> to vector<8xf32>
      %229 = vector.shape_cast %228 : vector<8xf32> to vector<8x1xf32>
      %cst_88 = arith.constant 3.200000e+01 : f32
      %230 = vector.broadcast %cst_88 : f32 to vector<8x1xf32>
      %231 = arith.divf %229, %230 : vector<8x1xf32>
      %232 = vector.broadcast %224 : vector<8x1xf32> to vector<8x32xf32>
      %233 = arith.subf %220, %232 : vector<8x32xf32>
      %cst_89 = arith.constant 9.99999996E-13 : f32
      %234 = vector.broadcast %cst_89 : f32 to vector<8x1xf32>
      %235 = arith.addf %231, %234 : vector<8x1xf32>
      %236 = math.rsqrt %235 : vector<8x1xf32>
      %237 = vector.broadcast %236 : vector<8x1xf32> to vector<8x32xf32>
      %238 = arith.mulf %233, %237 : vector<8x32xf32>
      %239 = vector.broadcast %0 : vector<1x32xf32> to vector<8x32xf32>
      %240 = arith.mulf %238, %239 : vector<8x32xf32>
      %241 = vector.broadcast %1 : vector<1x32xf32> to vector<8x32xf32>
      %242 = arith.addf %240, %241 : vector<8x32xf32>
      %c0_90 = arith.constant 0 : index
      %c0_91 = arith.constant 0 : index
      %243 = vector.load %arg21[%c0_90, %c0_91] : memref<8x32xf32, #tpu.memory_space<vmem>>, vector<8x32xf32>
      tpu.vector_store %arg21[%c0_90, %c0_91], %242 {strides = array<i32>} : memref<8x32xf32, #tpu.memory_space<vmem>>, vector<8x32xf32>,
    } else {
    }
    %c0_4 = arith.constant 0 : index
    %c0_5 = arith.constant 0 : index
    %5 = vector.load %arg21[%c0_4, %c0_5] : memref<8x32xf32, #tpu.memory_space<vmem>>, vector<8x32xf32>
    %c0_6 = arith.constant 0 : index
    %c0_7 = arith.constant 0 : index
    %c0_8 = arith.constant 0 : index
    %6 = vector.load %arg3[%c0_6, %c0_7, %c0_8] : memref<1x1x8xf32, #tpu.memory_space<vmem>>, vector<1x1x8xf32>
    %7 = vector.shape_cast %6 : vector<1x1x8xf32> to vector<8xf32>
    %8 = arith.truncf %5 : vector<8x32xf32> to vector<8x32xbf16>
    %c0_9 = arith.constant 0 : index
    %c0_10 = arith.constant 0 : index
    %9 = vector.load %arg8[%c0_9, %c0_10] : memref<32x96xbf16, #tpu.memory_space<vmem>>, vector<32x96xbf16>
    %cst = arith.constant dense<0.000000e+00> : vector<8x96xf32>
    %10 = tpu.matmul %8, %9, %cst {dimension_numbers = #tpu.dot_dimension_numbers<[1], [0], [0], [1], [0, 0, 1, 1], [], []>} : vector<8x32xbf16>, vector<32x96xbf16>, vector<8x96xf32> -> vector<8x96xf32>
    %c0_11 = arith.constant 0 : index
    %c0_12 = arith.constant 0 : index
    %11 = vector.load %arg9[%c0_11, %c0_12] : memref<1x96xf32, #tpu.memory_space<vmem>>, vector<1x96xf32>
    %12 = vector.broadcast %11 : vector<1x96xf32> to vector<8x96xf32>
    %13 = arith.addf %10, %12 : vector<8x96xf32>
    %14 = vector.extract_strided_slice %13 {offsets = [0, 0], sizes = [8, 8], strides = [1, 1]} : vector<8x96xf32> to vector<8x8xf32>
    %cst_13 = arith.constant 0.353553385 : f32
    %15 = vector.broadcast %cst_13 : f32 to vector<8x8xf32>
    %16 = arith.mulf %14, %15 : vector<8x8xf32>
    %17 = arith.truncf %16 : vector<8x8xf32> to vector<8x8xbf16>
    %18 = vector.extract_strided_slice %13 {offsets = [0, 32], sizes = [8, 8], strides = [1, 1]} : vector<8x96xf32> to vector<8x8xf32>
    %19 = arith.truncf %18 : vector<8x8xf32> to vector<8x8xbf16>
    %20 = vector.extract_strided_slice %13 {offsets = [0, 64], sizes = [8, 8], strides = [1, 1]} : vector<8x96xf32> to vector<8x8xf32>
    %21 = arith.truncf %20 : vector<8x8xf32> to vector<8x8xbf16>
    %cst_14 = arith.constant dense<0.000000e+00> : vector<8x8xf32>
    %22 = tpu.matmul %17, %19, %cst_14 {dimension_numbers = #tpu.dot_dimension_numbers<[1], [1], [0], [0], [0, 0, 1, 0], [], []>} : vector<8x8xbf16>, vector<8x8xbf16>, vector<8x8xf32> -> vector<8x8xf32>
    %23 = vector.shape_cast %7 : vector<8xf32> to vector<1x8xf32>
    %24 = vector.broadcast %23 : vector<1x8xf32> to vector<8x8xf32>
    %25 = arith.addf %22, %24 : vector<8x8xf32>
    %cst_15 = arith.constant dense<0xFF800000> : vector<8xf32>
    %26 = vector.multi_reduction <maximumf>, %25, %cst_15 [1] : vector<8x8xf32> to vector<8xf32>
    %27 = vector.shape_cast %26 : vector<8xf32> to vector<8x1xf32>
    %28 = vector.broadcast %27 : vector<8x1xf32> to vector<8x8xf32>
    %29 = arith.subf %25, %28 : vector<8x8xf32>
    %30 = math.exp %29 : vector<8x8xf32>
    %cst_16 = arith.constant dense<0.000000e+00> : vector<8xf32>
    %31 = vector.multi_reduction <add>, %30, %cst_16 [1] : vector<8x8xf32> to vector<8xf32>
    %32 = vector.shape_cast %31 : vector<8xf32> to vector<8x1xf32>
    %33 = tpu.reciprocal %32 {approx = true} : vector<8x1xf32> -> vector<8x1xf32>
    %34 = vector.broadcast %33 : vector<8x1xf32> to vector<8x8xf32>
    %35 = arith.mulf %30, %34 : vector<8x8xf32>
    %36 = arith.truncf %35 : vector<8x8xf32> to vector<8x8xbf16>
    %cst_17 = arith.constant dense<0.000000e+00> : vector<8x8xf32>
    %37 = tpu.matmul %36, %21, %cst_17 {dimension_numbers = #tpu.dot_dimension_numbers<[1], [0], [0], [1], [0, 0, 1, 1], [], []>} : vector<8x8xbf16>, vector<8x8xbf16>, vector<8x8xf32> -> vector<8x8xf32>
    %38 = vector.extract_strided_slice %13 {offsets = [0, 8], sizes = [8, 8], strides = [1, 1]} : vector<8x96xf32> to vector<8x8xf32>
    %cst_18 = arith.constant 0.353553385 : f32
    %39 = vector.broadcast %cst_18 : f32 to vector<8x8xf32>
    %40 = arith.mulf %38, %39 : vector<8x8xf32>
    %41 = arith.truncf %40 : vector<8x8xf32> to vector<8x8xbf16>
    %42 = vector.extract_strided_slice %13 {offsets = [0, 40], sizes = [8, 8], strides = [1, 1]} : vector<8x96xf32> to vector<8x8xf32>
    %43 = arith.truncf %42 : vector<8x8xf32> to vector<8x8xbf16>
    %44 = vector.extract_strided_slice %13 {offsets = [0, 72], sizes = [8, 8], strides = [1, 1]} : vector<8x96xf32> to vector<8x8xf32>
    %45 = arith.truncf %44 : vector<8x8xf32> to vector<8x8xbf16>
    %cst_19 = arith.constant dense<0.000000e+00> : vector<8x8xf32>
    %46 = tpu.matmul %41, %43, %cst_19 {dimension_numbers = #tpu.dot_dimension_numbers<[1], [1], [0], [0], [0, 0, 1, 0], [], []>} : vector<8x8xbf16>, vector<8x8xbf16>, vector<8x8xf32> -> vector<8x8xf32>
    %47 = vector.shape_cast %7 : vector<8xf32> to vector<1x8xf32>
    %48 = vector.broadcast %47 : vector<1x8xf32> to vector<8x8xf32>
    %49 = arith.addf %46, %48 : vector<8x8xf32>
    %cst_20 = arith.constant dense<0xFF800000> : vector<8xf32>
    %50 = vector.multi_reduction <maximumf>, %49, %cst_20 [1] : vector<8x8xf32> to vector<8xf32>
    %51 = vector.shape_cast %50 : vector<8xf32> to vector<8x1xf32>
    %52 = vector.broadcast %51 : vector<8x1xf32> to vector<8x8xf32>
    %53 = arith.subf %49, %52 : vector<8x8xf32>
    %54 = math.exp %53 : vector<8x8xf32>
    %cst_21 = arith.constant dense<0.000000e+00> : vector<8xf32>
    %55 = vector.multi_reduction <add>, %54, %cst_21 [1] : vector<8x8xf32> to vector<8xf32>
    %56 = vector.shape_cast %55 : vector<8xf32> to vector<8x1xf32>
    %57 = tpu.reciprocal %56 {approx = true} : vector<8x1xf32> -> vector<8x1xf32>
    %58 = vector.broadcast %57 : vector<8x1xf32> to vector<8x8xf32>
    %59 = arith.mulf %54, %58 : vector<8x8xf32>
    %60 = arith.truncf %59 : vector<8x8xf32> to vector<8x8xbf16>
    %cst_22 = arith.constant dense<0.000000e+00> : vector<8x8xf32>
    %61 = tpu.matmul %60, %45, %cst_22 {dimension_numbers = #tpu.dot_dimension_numbers<[1], [0], [0], [1], [0, 0, 1, 1], [], []>} : vector<8x8xbf16>, vector<8x8xbf16>, vector<8x8xf32> -> vector<8x8xf32>
    %62 = vector.extract_strided_slice %13 {offsets = [0, 16], sizes = [8, 8], strides = [1, 1]} : vector<8x96xf32> to vector<8x8xf32>
    %cst_23 = arith.constant 0.353553385 : f32
    %63 = vector.broadcast %cst_23 : f32 to vector<8x8xf32>
    %64 = arith.mulf %62, %63 : vector<8x8xf32>
    %65 = arith.truncf %64 : vector<8x8xf32> to vector<8x8xbf16>
    %66 = vector.extract_strided_slice %13 {offsets = [0, 48], sizes = [8, 8], strides = [1, 1]} : vector<8x96xf32> to vector<8x8xf32>
    %67 = arith.truncf %66 : vector<8x8xf32> to vector<8x8xbf16>
    %68 = vector.extract_strided_slice %13 {offsets = [0, 80], sizes = [8, 8], strides = [1, 1]} : vector<8x96xf32> to vector<8x8xf32>
    %69 = arith.truncf %68 : vector<8x8xf32> to vector<8x8xbf16>
    %cst_24 = arith.constant dense<0.000000e+00> : vector<8x8xf32>
    %70 = tpu.matmul %65, %67, %cst_24 {dimension_numbers = #tpu.dot_dimension_numbers<[1], [1], [0], [0], [0, 0, 1, 0], [], []>} : vector<8x8xbf16>, vector<8x8xbf16>, vector<8x8xf32> -> vector<8x8xf32>
    %71 = vector.shape_cast %7 : vector<8xf32> to vector<1x8xf32>
    %72 = vector.broadcast %71 : vector<1x8xf32> to vector<8x8xf32>
    %73 = arith.addf %70, %72 : vector<8x8xf32>
    %cst_25 = arith.constant dense<0xFF800000> : vector<8xf32>
    %74 = vector.multi_reduction <maximumf>, %73, %cst_25 [1] : vector<8x8xf32> to vector<8xf32>
    %75 = vector.shape_cast %74 : vector<8xf32> to vector<8x1xf32>
    %76 = vector.broadcast %75 : vector<8x1xf32> to vector<8x8xf32>
    %77 = arith.subf %73, %76 : vector<8x8xf32>
    %78 = math.exp %77 : vector<8x8xf32>
    %cst_26 = arith.constant dense<0.000000e+00> : vector<8xf32>
    %79 = vector.multi_reduction <add>, %78, %cst_26 [1] : vector<8x8xf32> to vector<8xf32>
    %80 = vector.shape_cast %79 : vector<8xf32> to vector<8x1xf32>
    %81 = tpu.reciprocal %80 {approx = true} : vector<8x1xf32> -> vector<8x1xf32>
    %82 = vector.broadcast %81 : vector<8x1xf32> to vector<8x8xf32>
    %83 = arith.mulf %78, %82 : vector<8x8xf32>
    %84 = arith.truncf %83 : vector<8x8xf32> to vector<8x8xbf16>
    %cst_27 = arith.constant dense<0.000000e+00> : vector<8x8xf32>
    %85 = tpu.matmul %84, %69, %cst_27 {dimension_numbers = #tpu.dot_dimension_numbers<[1], [0], [0], [1], [0, 0, 1, 1], [], []>} : vector<8x8xbf16>, vector<8x8xbf16>, vector<8x8xf32> -> vector<8x8xf32>
    %86 = vector.extract_strided_slice %13 {offsets = [0, 24], sizes = [8, 8], strides = [1, 1]} : vector<8x96xf32> to vector<8x8xf32>
    %cst_28 = arith.constant 0.353553385 : f32
    %87 = vector.broadcast %cst_28 : f32 to vector<8x8xf32>
    %88 = arith.mulf %86, %87 : vector<8x8xf32>
    %89 = arith.truncf %88 : vector<8x8xf32> to vector<8x8xbf16>
    %90 = vector.extract_strided_slice %13 {offsets = [0, 56], sizes = [8, 8], strides = [1, 1]} : vector<8x96xf32> to vector<8x8xf32>
    %91 = arith.truncf %90 : vector<8x8xf32> to vector<8x8xbf16>
    %92 = vector.extract_strided_slice %13 {offsets = [0, 88], sizes = [8, 8], strides = [1, 1]} : vector<8x96xf32> to vector<8x8xf32>
    %93 = arith.truncf %92 : vector<8x8xf32> to vector<8x8xbf16>
    %cst_29 = arith.constant dense<0.000000e+00> : vector<8x8xf32>
    %94 = tpu.matmul %89, %91, %cst_29 {dimension_numbers = #tpu.dot_dimension_numbers<[1], [1], [0], [0], [0, 0, 1, 0], [], []>} : vector<8x8xbf16>, vector<8x8xbf16>, vector<8x8xf32> -> vector<8x8xf32>
    %95 = vector.shape_cast %7 : vector<8xf32> to vector<1x8xf32>
    %96 = vector.broadcast %95 : vector<1x8xf32> to vector<8x8xf32>
    %97 = arith.addf %94, %96 : vector<8x8xf32>
    %cst_30 = arith.constant dense<0xFF800000> : vector<8xf32>
    %98 = vector.multi_reduction <maximumf>, %97, %cst_30 [1] : vector<8x8xf32> to vector<8xf32>
    %99 = vector.shape_cast %98 : vector<8xf32> to vector<8x1xf32>
    %100 = vector.broadcast %99 : vector<8x1xf32> to vector<8x8xf32>
    %101 = arith.subf %97, %100 : vector<8x8xf32>
    %102 = math.exp %101 : vector<8x8xf32>
    %cst_31 = arith.constant dense<0.000000e+00> : vector<8xf32>
    %103 = vector.multi_reduction <add>, %102, %cst_31 [1] : vector<8x8xf32> to vector<8xf32>
    %104 = vector.shape_cast %103 : vector<8xf32> to vector<8x1xf32>
    %105 = tpu.reciprocal %104 {approx = true} : vector<8x1xf32> -> vector<8x1xf32>
    %106 = vector.broadcast %105 : vector<8x1xf32> to vector<8x8xf32>
    %107 = arith.mulf %102, %106 : vector<8x8xf32>
    %108 = arith.truncf %107 : vector<8x8xf32> to vector<8x8xbf16>
    %cst_32 = arith.constant dense<0.000000e+00> : vector<8x8xf32>
    %109 = tpu.matmul %108, %93, %cst_32 {dimension_numbers = #tpu.dot_dimension_numbers<[1], [0], [0], [1], [0, 0, 1, 1], [], []>} : vector<8x8xbf16>, vector<8x8xbf16>, vector<8x8xf32> -> vector<8x8xf32>
    %110 = tpu.concatenate %37, %61, %85, %109 in 1 : vector<8x8xf32>, vector<8x8xf32>, vector<8x8xf32>, vector<8x8xf32> -> vector<8x32xf32>
    %111 = arith.truncf %110 : vector<8x32xf32> to vector<8x32xbf16>
    %c0_33 = arith.constant 0 : index
    %c0_34 = arith.constant 0 : index
    %112 = vector.load %arg10[%c0_33, %c0_34] : memref<32x32xbf16, #tpu.memory_space<vmem>>, vector<32x32xbf16>
    %cst_35 = arith.constant dense<0.000000e+00> : vector<8x32xf32>
    %113 = tpu.matmul %111, %112, %cst_35 {dimension_numbers = #tpu.dot_dimension_numbers<[1], [0], [0], [1], [0, 0, 1, 1], [], []>} : vector<8x32xbf16>, vector<32x32xbf16>, vector<8x32xf32> -> vector<8x32xf32>
    %c0_36 = arith.constant 0 : index
    %c0_37 = arith.constant 0 : index
    %114 = vector.load %arg11[%c0_36, %c0_37] : memref<1x32xf32, #tpu.memory_space<vmem>>, vector<1x32xf32>
    %115 = vector.broadcast %114 : vector<1x32xf32> to vector<8x32xf32>
    %116 = arith.addf %113, %115 : vector<8x32xf32>
    %117 = arith.addf %116, %5 : vector<8x32xf32>
    %c0_38 = arith.constant 0 : index
    %c0_39 = arith.constant 0 : index
    %118 = vector.load %arg12[%c0_38, %c0_39] : memref<1x32xf32, #tpu.memory_space<vmem>>, vector<1x32xf32>
    %c0_40 = arith.constant 0 : index
    %c0_41 = arith.constant 0 : index
    %119 = vector.load %arg13[%c0_40, %c0_41] : memref<1x32xf32, #tpu.memory_space<vmem>>, vector<1x32xf32>
    %cst_42 = arith.constant dense<0.000000e+00> : vector<8xf32>
    %120 = vector.multi_reduction <add>, %117, %cst_42 [1] : vector<8x32xf32> to vector<8xf32>
    %121 = vector.shape_cast %120 : vector<8xf32> to vector<8x1xf32>
    %cst_43 = arith.constant 3.200000e+01 : f32
    %122 = vector.broadcast %cst_43 : f32 to vector<8x1xf32>
    %123 = arith.divf %121, %122 : vector<8x1xf32>
    %124 = vector.broadcast %123 : vector<8x1xf32> to vector<8x32xf32>
    %125 = arith.subf %117, %124 : vector<8x32xf32>
    %126 = arith.mulf %125, %125 : vector<8x32xf32>
    %cst_44 = arith.constant dense<0.000000e+00> : vector<8xf32>
    %127 = vector.multi_reduction <add>, %126, %cst_44 [1] : vector<8x32xf32> to vector<8xf32>
    %128 = vector.shape_cast %127 : vector<8xf32> to vector<8x1xf32>
    %cst_45 = arith.constant 3.200000e+01 : f32
    %129 = vector.broadcast %cst_45 : f32 to vector<8x1xf32>
    %130 = arith.divf %128, %129 : vector<8x1xf32>
    %131 = vector.broadcast %123 : vector<8x1xf32> to vector<8x32xf32>
    %132 = arith.subf %117, %131 : vector<8x32xf32>
    %cst_46 = arith.constant 9.99999996E-13 : f32
    %133 = vector.broadcast %cst_46 : f32 to vector<8x1xf32>
    %134 = arith.addf %130, %133 : vector<8x1xf32>
    %135 = math.rsqrt %134 : vector<8x1xf32>
    %136 = vector.broadcast %135 : vector<8x1xf32> to vector<8x32xf32>
    %137 = arith.mulf %132, %136 : vector<8x32xf32>
    %138 = vector.broadcast %118 : vector<1x32xf32> to vector<8x32xf32>
    %139 = arith.mulf %137, %138 : vector<8x32xf32>
    %140 = vector.broadcast %119 : vector<1x32xf32> to vector<8x32xf32>
    %141 = arith.addf %139, %140 : vector<8x32xf32>
    %cst_47 = arith.constant dense<0.000000e+00> : vector<8xf32>
    %142 = vector.multi_reduction <add>, %141, %cst_47 [1] : vector<8x32xf32> to vector<8xf32>
    %143 = vector.shape_cast %142 : vector<8xf32> to vector<8x1xf32>
    %cst_48 = arith.constant 3.200000e+01 : f32
    %144 = vector.broadcast %cst_48 : f32 to vector<8x1xf32>
    %145 = arith.divf %143, %144 : vector<8x1xf32>
    %146 = vector.broadcast %145 : vector<8x1xf32> to vector<8x32xf32>
    %147 = arith.subf %141, %146 : vector<8x32xf32>
    %148 = arith.mulf %147, %147 : vector<8x32xf32>
    %cst_49 = arith.constant dense<0.000000e+00> : vector<8xf32>
    %149 = vector.multi_reduction <add>, %148, %cst_49 [1] : vector<8x32xf32> to vector<8xf32>
    %150 = vector.shape_cast %149 : vector<8xf32> to vector<8x1xf32>
    %cst_50 = arith.constant 3.200000e+01 : f32
    %151 = vector.broadcast %cst_50 : f32 to vector<8x1xf32>
    %152 = arith.divf %150, %151 : vector<8x1xf32>
    %153 = vector.broadcast %145 : vector<8x1xf32> to vector<8x32xf32>
    %154 = arith.subf %141, %153 : vector<8x32xf32>
    %cst_51 = arith.constant 9.99999996E-13 : f32
    %155 = vector.broadcast %cst_51 : f32 to vector<8x1xf32>
    %156 = arith.addf %152, %155 : vector<8x1xf32>
    %157 = math.rsqrt %156 : vector<8x1xf32>
    %158 = vector.broadcast %157 : vector<8x1xf32> to vector<8x32xf32>
    %159 = arith.mulf %154, %158 : vector<8x32xf32>
    %160 = vector.broadcast %0 : vector<1x32xf32> to vector<8x32xf32>
    %161 = arith.mulf %159, %160 : vector<8x32xf32>
    %162 = vector.broadcast %1 : vector<1x32xf32> to vector<8x32xf32>
    %163 = arith.addf %161, %162 : vector<8x32xf32>
    %164 = arith.truncf %163 : vector<8x32xf32> to vector<8x32xbf16>
    %c0_52 = arith.constant 0 : index
    %c0_53 = arith.constant 0 : index
    %165 = vector.load %arg14[%c0_52, %c0_53] : memref<32x64xbf16, #tpu.memory_space<vmem>>, vector<32x64xbf16>
    %cst_54 = arith.constant dense<0.000000e+00> : vector<8x64xf32>
    %166 = tpu.matmul %164, %165, %cst_54 {dimension_numbers = #tpu.dot_dimension_numbers<[1], [0], [0], [1], [0, 0, 1, 1], [], []>} : vector<8x32xbf16>, vector<32x64xbf16>, vector<8x64xf32> -> vector<8x64xf32>
    %c0_55 = arith.constant 0 : index
    %c0_56 = arith.constant 0 : index
    %167 = vector.load %arg15[%c0_55, %c0_56] : memref<1x64xf32, #tpu.memory_space<vmem>>, vector<1x64xf32>
    %168 = vector.broadcast %167 : vector<1x64xf32> to vector<8x64xf32>
    %169 = arith.addf %166, %168 : vector<8x64xf32>
    %cst_57 = arith.constant 5.000000e-01 : f32
    %170 = vector.broadcast %cst_57 : f32 to vector<8x64xf32>
    %171 = arith.mulf %169, %170 : vector<8x64xf32>
    %cst_58 = arith.constant 1.41421354 : f32
    %172 = vector.broadcast %cst_58 : f32 to vector<8x64xf32>
    %173 = arith.divf %169, %172 : vector<8x64xf32>
    %174 = math.erf %173 : vector<8x64xf32>
    %cst_59 = arith.constant 1.000000e+00 : f32
    %175 = vector.broadcast %cst_59 : f32 to vector<8x64xf32>
    %176 = arith.addf %175, %174 : vector<8x64xf32>
    %177 = arith.mulf %171, %176 : vector<8x64xf32>
    %178 = arith.truncf %177 : vector<8x64xf32> to vector<8x64xbf16>
    %c0_60 = arith.constant 0 : index
    %c0_61 = arith.constant 0 : index
    %179 = vector.load %arg16[%c0_60, %c0_61] : memref<64x32xbf16, #tpu.memory_space<vmem>>, vector<64x32xbf16>
    %cst_62 = arith.constant dense<0.000000e+00> : vector<8x32xf32>
    %180 = tpu.matmul %178, %179, %cst_62 {dimension_numbers = #tpu.dot_dimension_numbers<[1], [0], [0], [1], [0, 0, 1, 1], [], []>} : vector<8x64xbf16>, vector<64x32xbf16>, vector<8x32xf32> -> vector<8x32xf32>
    %c0_63 = arith.constant 0 : index
    %c0_64 = arith.constant 0 : index
    %181 = vector.load %arg17[%c0_63, %c0_64] : memref<1x32xf32, #tpu.memory_space<vmem>>, vector<1x32xf32>
    %182 = vector.broadcast %181 : vector<1x32xf32> to vector<8x32xf32>
    %183 = arith.addf %180, %182 : vector<8x32xf32>
    %184 = arith.addf %183, %163 : vector<8x32xf32>
    %c0_65 = arith.constant 0 : index
    %c0_66 = arith.constant 0 : index
    %185 = vector.load %arg18[%c0_65, %c0_66] : memref<1x32xf32, #tpu.memory_space<vmem>>, vector<1x32xf32>
    %c0_67 = arith.constant 0 : index
    %c0_68 = arith.constant 0 : index
    %186 = vector.load %arg19[%c0_67, %c0_68] : memref<1x32xf32, #tpu.memory_space<vmem>>, vector<1x32xf32>
    %cst_69 = arith.constant dense<0.000000e+00> : vector<8xf32>
    %187 = vector.multi_reduction <add>, %184, %cst_69 [1] : vector<8x32xf32> to vector<8xf32>
    %188 = vector.shape_cast %187 : vector<8xf32> to vector<8x1xf32>
    %cst_70 = arith.constant 3.200000e+01 : f32
    %189 = vector.broadcast %cst_70 : f32 to vector<8x1xf32>
    %190 = arith.divf %188, %189 : vector<8x1xf32>
    %191 = vector.broadcast %190 : vector<8x1xf32> to vector<8x32xf32>
    %192 = arith.subf %184, %191 : vector<8x32xf32>
    %193 = arith.mulf %192, %192 : vector<8x32xf32>
    %cst_71 = arith.constant dense<0.000000e+00> : vector<8xf32>
    %194 = vector.multi_reduction <add>, %193, %cst_71 [1] : vector<8x32xf32> to vector<8xf32>
    %195 = vector.shape_cast %194 : vector<8xf32> to vector<8x1xf32>
    %cst_72 = arith.constant 3.200000e+01 : f32
    %196 = vector.broadcast %cst_72 : f32 to vector<8x1xf32>
    %197 = arith.divf %195, %196 : vector<8x1xf32>
    %198 = vector.broadcast %190 : vector<8x1xf32> to vector<8x32xf32>
    %199 = arith.subf %184, %198 : vector<8x32xf32>
    %cst_73 = arith.constant 9.99999996E-13 : f32
    %200 = vector.broadcast %cst_73 : f32 to vector<8x1xf32>
    %201 = arith.addf %197, %200 : vector<8x1xf32>
    %202 = math.rsqrt %201 : vector<8x1xf32>
    %203 = vector.broadcast %202 : vector<8x1xf32> to vector<8x32xf32>
    %204 = arith.mulf %199, %203 : vector<8x32xf32>
    %205 = vector.broadcast %185 : vector<1x32xf32> to vector<8x32xf32>
    %206 = arith.mulf %204, %205 : vector<8x32xf32>
    %207 = vector.broadcast %186 : vector<1x32xf32> to vector<8x32xf32>
    %208 = arith.addf %206, %207 : vector<8x32xf32>
    %c0_74 = arith.constant 0 : index
    %c0_75 = arith.constant 0 : index
    %209 = vector.load %arg21[%c0_74, %c0_75] : memref<8x32xf32, #tpu.memory_space<vmem>>, vector<8x32xf32>
    tpu.vector_store %arg21[%c0_74, %c0_75], %208 {strides = array<i32>} : memref<8x32xf32, #tpu.memory_space<vmem>>, vector<8x32xf32>,
    %c1_i32 = arith.constant 1 : i32
    %210 = arith.cmpi eq, %arg1, %c1_i32 : i32
    %211 = arith.extui %210 : i1 to i32
    %c0_i32_76 = arith.constant 0 : i32
    %212 = arith.cmpi ne, %211, %c0_i32_76 : i32
    scf.if %212 {
      %c0_77 = arith.constant 0 : index
      %c0_78 = arith.constant 0 : index
      %c0_79 = arith.constant 0 : index
      %213 = vector.load %arg20[%c0_77, %c0_78, %c0_79] : memref<1x8x32xf32, #tpu.memory_space<vmem>>, vector<1x8x32xf32>
      %214 = vector.shape_cast %213 : vector<1x8x32xf32> to vector<8x32xf32>
      %215 = vector.shape_cast %208 : vector<8x32xf32> to vector<1x8x32xf32>
      tpu.vector_store %arg20[%c0_77, %c0_78, %c0_79], %215 {strides = array<i32>} : memref<1x8x32xf32, #tpu.memory_space<vmem>>, vector<1x8x32xf32>,
    } else {
    }
    return
  }
  func.func @transform_0(%arg0: i32, %arg1: i32) -> (i32, i32, i32) {
    %c0_i32 = arith.constant 0 : i32
    %c0_i32_0 = arith.constant 0 : i32
    %c0_i32_1 = arith.constant 0 : i32
    return %arg0, %c0_i32, %c0_i32_0 : i32, i32, i32
  }
  func.func @transform_1(%arg0: i32, %arg1: i32) -> (i32, i32, i32) {
    %c0_i32 = arith.constant 0 : i32
    %c0_i32_0 = arith.constant 0 : i32
    %c0_i32_1 = arith.constant 0 : i32
    return %arg0, %c0_i32, %c0_i32_0 : i32, i32, i32
  }
  func.func @transform_2(%arg0: i32, %arg1: i32) -> (i32, i32) {
    %c0_i32 = arith.constant 0 : i32
    %c0_i32_0 = arith.constant 0 : i32
    %c0_i32_1 = arith.constant 0 : i32
    return %c0_i32, %c0_i32_0 : i32, i32
  }
  func.func @transform_3(%arg0: i32, %arg1: i32) -> (i32, i32) {
    %c0_i32 = arith.constant 0 : i32
    %c0_i32_0 = arith.constant 0 : i32
    %c0_i32_1 = arith.constant 0 : i32
    return %c0_i32, %c0_i32_0 : i32, i32
  }
  func.func @transform_4(%arg0: i32, %arg1: i32) -> (i32, i32) {
    %c0_i32 = arith.constant 0 : i32
    %c0_i32_0 = arith.constant 0 : i32
    %c0_i32_1 = arith.constant 0 : i32
    return %c0_i32, %c0_i32_0 : i32, i32
  }
  func.func @transform_5(%arg0: i32, %arg1: i32) -> (i32, i32) {
    %c0_i32 = arith.constant 0 : i32
    %c0_i32_0 = arith.constant 0 : i32
    %c0_i32_1 = arith.constant 0 : i32
    return %c0_i32, %c0_i32_0 : i32, i32
  }
  func.func @transform_6(%arg0: i32, %arg1: i32) -> (i32, i32) {
    %c0_i32 = arith.constant 0 : i32
    %c0_i32_0 = arith.constant 0 : i32
    %c0_i32_1 = arith.constant 0 : i32
    return %c0_i32, %c0_i32_0 : i32, i32
  }
  func.func @transform_7(%arg0: i32, %arg1: i32) -> (i32, i32) {
    %c0_i32 = arith.constant 0 : i32
    %c0_i32_0 = arith.constant 0 : i32
    %c0_i32_1 = arith.constant 0 : i32
    return %c0_i32, %c0_i32_0 : i32, i32
  }
  func.func @transform_8(%arg0: i32, %arg1: i32) -> (i32, i32) {
    %c0_i32 = arith.constant 0 : i32
    %c0_i32_0 = arith.constant 0 : i32
    %c0_i32_1 = arith.constant 0 : i32
    return %c0_i32, %c0_i32_0 : i32, i32
  }
  func.func @transform_9(%arg0: i32, %arg1: i32) -> (i32, i32) {
    %c0_i32 = arith.constant 0 : i32
    %c0_i32_0 = arith.constant 0 : i32
    %c0_i32_1 = arith.constant 0 : i32
    return %c0_i32, %c0_i32_0 : i32, i32
  }
  func.func @transform_10(%arg0: i32, %arg1: i32) -> (i32, i32) {
    %c0_i32 = arith.constant 0 : i32
    %c0_i32_0 = arith.constant 0 : i32
    %c0_i32_1 = arith.constant 0 : i32
    return %c0_i32, %c0_i32_0 : i32, i32
  }
  func.func @transform_11(%arg0: i32, %arg1: i32) -> (i32, i32) {
    %c0_i32 = arith.constant 0 : i32
    %c0_i32_0 = arith.constant 0 : i32
    %c0_i32_1 = arith.constant 0 : i32
    return %c0_i32, %c0_i32_0 : i32, i32
  }
  func.func @transform_12(%arg0: i32, %arg1: i32) -> (i32, i32) {
    %c0_i32 = arith.constant 0 : i32
    %c0_i32_0 = arith.constant 0 : i32
    %c0_i32_1 = arith.constant 0 : i32
    return %c0_i32, %c0_i32_0 : i32, i32
  }
  func.func @transform_13(%arg0: i32, %arg1: i32) -> (i32, i32) {
    %c0_i32 = arith.constant 0 : i32
    %c0_i32_0 = arith.constant 0 : i32
    %c0_i32_1 = arith.constant 0 : i32
    return %c0_i32, %c0_i32_0 : i32, i32
  }
  func.func @transform_14(%arg0: i32, %arg1: i32) -> (i32, i32) {
    %c0_i32 = arith.constant 0 : i32
    %c0_i32_0 = arith.constant 0 : i32
    %c0_i32_1 = arith.constant 0 : i32
    return %c0_i32, %c0_i32_0 : i32, i32
  }
  func.func @transform_15(%arg0: i32, %arg1: i32) -> (i32, i32) {
    %c0_i32 = arith.constant 0 : i32
    %c0_i32_0 = arith.constant 0 : i32
    %c0_i32_1 = arith.constant 0 : i32
    return %c0_i32, %c0_i32_0 : i32, i32
  }
  func.func @transform_16(%arg0: i32, %arg1: i32) -> (i32, i32) {
    %c0_i32 = arith.constant 0 : i32
    %c0_i32_0 = arith.constant 0 : i32
    %c0_i32_1 = arith.constant 0 : i32
    return %c0_i32, %c0_i32_0 : i32, i32
  }
  func.func @transform_17(%arg0: i32, %arg1: i32) -> (i32, i32) {
    %c0_i32 = arith.constant 0 : i32
    %c0_i32_0 = arith.constant 0 : i32
    %c0_i32_1 = arith.constant 0 : i32
    return %c0_i32, %c0_i32_0 : i32, i32
  }
  func.func @transform_18(%arg0: i32, %arg1: i32) -> (i32, i32, i32) {
    %c0_i32 = arith.constant 0 : i32
    %c0_i32_0 = arith.constant 0 : i32
    %c0_i32_1 = arith.constant 0 : i32
    return %arg0, %c0_i32, %c0_i32_0 : i32, i32, i32
  }
}

</mosaic_0001>

<llo_original>
// kernel: tpu_custom_call.1
$region0: #{tpu_custom_call.1}
  #allocation0 [shape = 'u32[]', space=smem, size = 0x4, offset = 0x4, fixed_abs, tag = 'smem constant byte address 0x4 - core index']
  #allocation1 [shape = 'u32[144,128]{1,0:T(1,128)}', space=vmem, size = 0x12000, scoped, tag = 'internal scratch']
  #allocation2 [shape = 'f32[8,32]{1,0:T(8,128)}', space=vmem, size = 0x1000, scoped, tag = 'scratch operand']
  %s0 = inlined_call_operand.hbm [shape: f32[2,8,16], index: 0, kind: input, shape index: {}]
  %s1 = inlined_call_operand.hbm [shape: f32[2,1,8], index: 1, kind: input, shape index: {}]
  %s2 = inlined_call_operand.hbm [shape: bf16[16,32], index: 2, kind: input, shape index: {}]
  %s3 = inlined_call_operand.hbm [shape: f32[1,32], index: 3, kind: input, shape index: {}]
  %s4 = inlined_call_operand.hbm [shape: f32[1,32], index: 4, kind: input, shape index: {}]
  %s5 = inlined_call_operand.hbm [shape: f32[1,32], index: 5, kind: input, shape index: {}]
  %s6 = inlined_call_operand.hbm [shape: bf16[32,96], index: 6, kind: input, shape index: {}]
  %s7 = inlined_call_operand.hbm [shape: f32[1,96], index: 7, kind: input, shape index: {}]
  %s8 = inlined_call_operand.hbm [shape: bf16[32,32], index: 8, kind: input, shape index: {}]
  %s9 = inlined_call_operand.hbm [shape: f32[1,32], index: 9, kind: input, shape index: {}]
  %s10 = inlined_call_operand.hbm [shape: f32[1,32], index: 10, kind: input, shape index: {}]
  %s11 = inlined_call_operand.hbm [shape: f32[1,32], index: 11, kind: input, shape index: {}]
  %s12 = inlined_call_operand.hbm [shape: bf16[32,64], index: 12, kind: input, shape index: {}]
  %s13 = inlined_call_operand.hbm [shape: f32[1,64], index: 13, kind: input, shape index: {}]
  %s14 = inlined_call_operand.hbm [shape: bf16[64,32], index: 14, kind: input, shape index: {}]
  %s15 = inlined_call_operand.hbm [shape: f32[1,32], index: 15, kind: input, shape index: {}]
  %s16 = inlined_call_operand.hbm [shape: f32[1,32], index: 16, kind: input, shape index: {}]
  %s17 = inlined_call_operand.hbm [shape: f32[1,32], index: 17, kind: input, shape index: {}]
  %s18 = inlined_call_operand.hbm [shape: f32[2,8,32], index: 18, kind: output, shape index: {}]
  %s19 = sld [smem:[#allocation0]]
  $region185: #{tpu_custom_call.1} parent=0
    _
  %s21 = ssub.s32 1, %s19
  %s22 = scalar_select 0, %s21, %s19
  $region1: #{tpu_custom_call.1} parent=0
    #allocation3 [shape = 'u8[8192]{0}', space=vmem, size = 0x2000, scoped, tag = 'input window, operand 0']
    #allocation4 [shape = 's32[2]{0}', space=sflag, size = 0x8, scoped, tag = 'scoped memory for tpu_custom_call.1']
    #allocation5 [shape = 's32[2]{0}', space=sflag, size = 0x8, scoped, tag = 'scoped memory for tpu_custom_call.1']
    #allocation6 [shape = 'u8[1024]{0}', space=vmem, size = 0x400, scoped, tag = 'input window, operand 1']
    #allocation7 [shape = 's32[2]{0}', space=sflag, size = 0x8, scoped, tag = 'scoped memory for tpu_custom_call.1']
    #allocation8 [shape = 'u8[4096]{0}', space=vmem, size = 0x1000, scoped, tag = 'input window, operand 2, single buffered']
    #allocation9 [shape = 'u8[512]{0}', space=vmem, size = 0x400, scoped, tag = 'input window, operand 3, single buffered']
    #allocation10 [shape = 's32[1]{0}', space=sflag, size = 0x4, scoped, tag = 'scoped memory for tpu_custom_call.1']
    #allocation11 [shape = 'u8[512]{0}', space=vmem, size = 0x400, scoped, tag = 'input window, operand 4, single buffered']
    #allocation12 [shape = 'u8[512]{0}', space=vmem, size = 0x400, scoped, tag = 'input window, operand 5, single buffered']
    #allocation13 [shape = 's32[1]{0}', space=sflag, size = 0x4, scoped, tag = 'scoped memory for tpu_custom_call.1']
    #allocation14 [shape = 'u8[8192]{0}', space=vmem, size = 0x2000, scoped, tag = 'input window, operand 6, single buffered']
    #allocation15 [shape = 'u8[512]{0}', space=vmem, size = 0x400, scoped, tag = 'input window, operand 7, single buffered']
    #allocation16 [shape = 's32[1]{0}', space=sflag, size = 0x4, scoped, tag = 'scoped memory for tpu_custom_call.1']
    #allocation17 [shape = 'u8[8192]{0}', space=vmem, size = 0x2000, scoped, tag = 'input window, operand 8, single buffered']
    #allocation18 [shape = 'u8[512]{0}', space=vmem, size = 0x400, scoped, tag = 'input window, operand 9, single buffered']
    #allocation19 [shape = 's32[1]{0}', space=sflag, size = 0x4, scoped, tag = 'scoped memory for tpu_custom_call.1']
    #allocation20 [shape = 'u8[512]{0}', space=vmem, size = 0x400, scoped, tag = 'input window, operand 10, single buffered']
    #allocation21 [shape = 'u8[512]{0}', space=vmem, size = 0x400, scoped, tag = 'input window, operand 11, single buffered']
    #allocation22 [shape = 's32[1]{0}', space=sflag, size = 0x4, scoped, tag = 'scoped memory for tpu_custom_call.1']
    #allocation23 [shape = 'u8[8192]{0}', space=vmem, size = 0x2000, scoped, tag = 'input window, operand 12, single buffered']
    #allocation24 [shape = 'u8[512]{0}', space=vmem, size = 0x400, scoped, tag = 'input window, operand 13, single buffered']
    #allocation25 [shape = 's32[1]{0}', space=sflag, size = 0x4, scoped, tag = 'scoped memory for tpu_custom_call.1']
    #allocation26 [shape = 'u8[16384]{0}', space=vmem, size = 0x4000, scoped, tag = 'input window, operand 14, single buffered']
    #allocation27 [shape = 'u8[512]{0}', space=vmem, size = 0x400, scoped, tag = 'input window, operand 15, single buffered']
    #allocation28 [shape = 's32[1]{0}', space=sflag, size = 0x4, scoped, tag = 'scoped memory for tpu_custom_call.1']
    #allocation29 [shape = 'u8[512]{0}', space=vmem, size = 0x400, scoped, tag = 'input window, operand 16, single buffered']
    #allocation30 [shape = 'u8[512]{0}', space=vmem, size = 0x400, scoped, tag = 'input window, operand 17, single buffered']
    #allocation31 [shape = 's32[1]{0}', space=sflag, size = 0x4, scoped, tag = 'scoped memory for tpu_custom_call.1']
    #allocation32 [shape = 'u8[8192]{0}', space=vmem, size = 0x2000, scoped, tag = 'output window, operand 0']
    %23 = vsyncpa [#allocation4], 0
    %s24 = scalar_lea.sflag [#allocation4], 1
    %25 = vsyncpa %s24, 0
    %26 = vsyncpa [#allocation7], 0
    %s27 = scalar_lea.sflag [#allocation7], 1
    %28 = vsyncpa %s27, 0
    %29 = vsyncpa [#allocation10], 0
    %30 = vsyncpa [#allocation13], 0
    %31 = vsyncpa [#allocation16], 0
    %32 = vsyncpa [#allocation19], 0
    %33 = vsyncpa [#allocation22], 0
    %34 = vsyncpa [#allocation25], 0
    %35 = vsyncpa [#allocation28], 0
    %36 = vsyncpa [#allocation31], 0
    %37 = vsyncpa [#allocation5], 0
    %s38 = scalar_lea.sflag [#allocation5], 1
    %39 = vsyncpa %s38, 0
    loop: start=0, step=1, limit=6
    $region2: #{tpu_custom_call.1} parent=1 // loop_pre_header
      _
    $region3: #{tpu_custom_call.1} parent=1 // loop_header
      %s41 = sphi 0, %s45
      %p42 = scmp.ge.s32.totalorder %s41, 6
      %s48 = sphi 0, %s60
      %s49 = sphi 0, %s56
      %s50 = sphi 0, %s48
      %s51 = sphi 0, %s49
      %s52 = sphi 0, %s50
      %s53 = sphi 0, %s51
      %s63 = sphi 0, %s65
      %s66 = sphi 0, %s63
      %s67 = sphi 0, %s66
      %s83 = sphi 0, %s67
      %s89 = sphi 0, %s91
      %s92 = sphi 0, %s89
      %s93 = sphi 0, %s92
      %s109 = sphi 0, %s93
      %s113 = sphi 0, %s113
      %s115 = sphi 0, %s113
      %s116 = sphi 0, %s115
      %s130 = sphi 0, %s116
      %s134 = sphi 0, %s134
      %s136 = sphi 0, %s134
      %s137 = sphi 0, %s136
      %s151 = sphi 0, %s137
      %s155 = sphi 0, %s155
      %s157 = sphi 0, %s155
      %s158 = sphi 0, %s157
      %s172 = sphi 0, %s158
      %s176 = sphi 0, %s176
      %s178 = sphi 0, %s176
      %s179 = sphi 0, %s178
      %s193 = sphi 0, %s179
      %s197 = sphi 0, %s197
      %s199 = sphi 0, %s197
      %s200 = sphi 0, %s199
      %s214 = sphi 0, %s200
      %s218 = sphi 0, %s218
      %s220 = sphi 0, %s218
      %s221 = sphi 0, %s220
      %s235 = sphi 0, %s221
      %s239 = sphi 0, %s239
      %s241 = sphi 0, %s239
      %s242 = sphi 0, %s241
      %s256 = sphi 0, %s242
      %s260 = sphi 0, %s260
      %s262 = sphi 0, %s260
      %s263 = sphi 0, %s262
      %s277 = sphi 0, %s263
      %s281 = sphi 0, %s281
      %s283 = sphi 0, %s281
      %s284 = sphi 0, %s283
      %s298 = sphi 0, %s284
      %s302 = sphi 0, %s302
      %s304 = sphi 0, %s302
      %s305 = sphi 0, %s304
      %s319 = sphi 0, %s305
      %s323 = sphi 0, %s323
      %s325 = sphi 0, %s323
      %s326 = sphi 0, %s325
      %s340 = sphi 0, %s326
      %s344 = sphi 0, %s344
      %s346 = sphi 0, %s344
      %s347 = sphi 0, %s346
      %s361 = sphi 0, %s347
      %s365 = sphi 0, %s365
      %s367 = sphi 0, %s365
      %s368 = sphi 0, %s367
      %s382 = sphi 0, %s368
      %s386 = sphi 0, %s386
      %s388 = sphi 0, %s386
      %s389 = sphi 0, %s388
      %s403 = sphi 0, %s389
      %s407 = sphi 0, %s407
      %s409 = sphi 0, %s407
      %s410 = sphi 0, %s409
      %s424 = sphi 0, %s410
      %s428 = sphi 0, %s428
      %s430 = sphi 0, %s428
      %s431 = sphi 0, %s430
      %s445 = sphi 0, %s431
      %s451 = sphi 0, %s453
      %s454 = sphi 0, %s451
      %s455 = sphi 0, %s454
      %s471 = sphi 0, %s455
    $region4: #{tpu_custom_call.1} parent=1 // loop_header_branch
      %44 = sbr.rel (%p42) target = $region8
    $region5: #{tpu_custom_call.1} parent=1 // loop_body
      %s46 = ssub.s32 %s41, 1
      %s47 = ssub.s32 %s41, 2
      %s54 = sadd.s32 1, %s49
      %p55 = scmp.ge.s32.totalorder %s54, 2
      %s56 = scalar_select %p55, 0, %s54
      %s57 = sadd.s32 1, %s48
      %s58 = scalar_select %p55, %s57, %s48
      %p59 = scmp.ge.s32.totalorder %s58, 2
      %s60 = scalar_select %p59, 0, %s58
      %s61 = ssub.s32 %s48, %s60
      %p62 = scmp.eq.s32.totalorder %s61, 0
      %s64 = sadd.s32 %s63, 1
      %s65 = scalar_select %p62, %s63, %s64
      %p68 = pneg %p62
      %p69 = scmp.eq.s32.totalorder %s41, 3
      %p70 = por %p68, %p69
      %p71 = scmp.ne.s32.totalorder %s63, %s66
      %p72 = scmp.eq.s32.totalorder %s41, 0
      %p73 = por %p71, %p72
      %p74 = scmp.ne.s32.totalorder %s63, %s66
      %p75 = scmp.eq.s32.totalorder %s46, 3
      %p76 = por %p74, %p75
      %p77 = scmp.ne.s32.totalorder %s66, %s67
      %p78 = scmp.eq.s32.totalorder %s46, 0
      %p79 = por %p77, %p78
      %p80 = scmp.ne.s32.totalorder %s66, %s67
      %p81 = scmp.eq.s32.totalorder %s47, 3
      %p82 = por %p80, %p81
      %p84 = scmp.ne.s32.totalorder %s67, %s83
      %p85 = scmp.eq.s32.totalorder %s47, 0
      %p86 = por %p84, %p85
      %s87 = ssub.s32 %s48, %s60
      %p88 = scmp.eq.s32.totalorder %s87, 0
      %s90 = sadd.s32 %s89, 1
      %s91 = scalar_select %p88, %s89, %s90
      %p94 = pneg %p88
      %p95 = scmp.eq.s32.totalorder %s41, 3
      %p96 = por %p94, %p95
      %p97 = scmp.ne.s32.totalorder %s89, %s92
      %p98 = scmp.eq.s32.totalorder %s41, 0
      %p99 = por %p97, %p98
      %p100 = scmp.ne.s32.totalorder %s89, %s92
      %p101 = scmp.eq.s32.totalorder %s46, 3
      %p102 = por %p100, %p101
      %p103 = scmp.ne.s32.totalorder %s92, %s93
      %p104 = scmp.eq.s32.totalorder %s46, 0
      %p105 = por %p103, %p104
      %p106 = scmp.ne.s32.totalorder %s92, %s93
      %p107 = scmp.eq.s32.totalorder %s47, 3
      %p108 = por %p106, %p107
      %p110 = scmp.ne.s32.totalorder %s93, %s109
      %p111 = scmp.eq.s32.totalorder %s47, 0
      %p112 = por %p110, %p111
      %s114 = sadd.s32 %s113, 1
      %p117 = scmp.eq.s32.totalorder %s41, 3
      %p118 = scmp.ne.s32.totalorder %s113, %s115
      %p119 = scmp.eq.s32.totalorder %s41, 0
      %p120 = por %p118, %p119
      %p121 = scmp.ne.s32.totalorder %s113, %s115
      %p122 = scmp.eq.s32.totalorder %s46, 3
      %p123 = por %p121, %p122
      %p124 = scmp.ne.s32.totalorder %s115, %s116
      %p125 = scmp.eq.s32.totalorder %s46, 0
      %p126 = por %p124, %p125
      %p127 = scmp.ne.s32.totalorder %s115, %s116
      %p128 = scmp.eq.s32.totalorder %s47, 3
      %p129 = por %p127, %p128
      %p131 = scmp.ne.s32.totalorder %s116, %s130
      %p132 = scmp.eq.s32.totalorder %s47, 0
      %p133 = por %p131, %p132
      %s135 = sadd.s32 %s134, 1
      %p138 = scmp.eq.s32.totalorder %s41, 3
      %p139 = scmp.ne.s32.totalorder %s134, %s136
      %p140 = scmp.eq.s32.totalorder %s41, 0
      %p141 = por %p139, %p140
      %p142 = scmp.ne.s32.totalorder %s134, %s136
      %p143 = scmp.eq.s32.totalorder %s46, 3
      %p144 = por %p142, %p143
      %p145 = scmp.ne.s32.totalorder %s136, %s137
      %p146 = scmp.eq.s32.totalorder %s46, 0
      %p147 = por %p145, %p146
      %p148 = scmp.ne.s32.totalorder %s136, %s137
      %p149 = scmp.eq.s32.totalorder %s47, 3
      %p150 = por %p148, %p149
      %p152 = scmp.ne.s32.totalorder %s137, %s151
      %p153 = scmp.eq.s32.totalorder %s47, 0
      %p154 = por %p152, %p153
      %s156 = sadd.s32 %s155, 1
      %p159 = scmp.eq.s32.totalorder %s41, 3
      %p160 = scmp.ne.s32.totalorder %s155, %s157
      %p161 = scmp.eq.s32.totalorder %s41, 0
      %p162 = por %p160, %p161
      %p163 = scmp.ne.s32.totalorder %s155, %s157
      %p164 = scmp.eq.s32.totalorder %s46, 3
      %p165 = por %p163, %p164
      %p166 = scmp.ne.s32.totalorder %s157, %s158
      %p167 = scmp.eq.s32.totalorder %s46, 0
      %p168 = por %p166, %p167
      %p169 = scmp.ne.s32.totalorder %s157, %s158
      %p170 = scmp.eq.s32.totalorder %s47, 3
      %p171 = por %p169, %p170
      %p173 = scmp.ne.s32.totalorder %s158, %s172
      %p174 = scmp.eq.s32.totalorder %s47, 0
      %p175 = por %p173, %p174
      %s177 = sadd.s32 %s176, 1
      %p180 = scmp.eq.s32.totalorder %s41, 3
      %p181 = scmp.ne.s32.totalorder %s176, %s178
      %p182 = scmp.eq.s32.totalorder %s41, 0
      %p183 = por %p181, %p182
      %p184 = scmp.ne.s32.totalorder %s176, %s178
      %p185 = scmp.eq.s32.totalorder %s46, 3
      %p186 = por %p184, %p185
      %p187 = scmp.ne.s32.totalorder %s178, %s179
      %p188 = scmp.eq.s32.totalorder %s46, 0
      %p189 = por %p187, %p188
      %p190 = scmp.ne.s32.totalorder %s178, %s179
      %p191 = scmp.eq.s32.totalorder %s47, 3
      %p192 = por %p190, %p191
      %p194 = scmp.ne.s32.totalorder %s179, %s193
      %p195 = scmp.eq.s32.totalorder %s47, 0
      %p196 = por %p194, %p195
      %s198 = sadd.s32 %s197, 1
      %p201 = scmp.eq.s32.totalorder %s41, 3
      %p202 = scmp.ne.s32.totalorder %s197, %s199
      %p203 = scmp.eq.s32.totalorder %s41, 0
      %p204 = por %p202, %p203
      %p205 = scmp.ne.s32.totalorder %s197, %s199
      %p206 = scmp.eq.s32.totalorder %s46, 3
      %p207 = por %p205, %p206
      %p208 = scmp.ne.s32.totalorder %s199, %s200
      %p209 = scmp.eq.s32.totalorder %s46, 0
      %p210 = por %p208, %p209
      %p211 = scmp.ne.s32.totalorder %s199, %s200
      %p212 = scmp.eq.s32.totalorder %s47, 3
      %p213 = por %p211, %p212
      %p215 = scmp.ne.s32.totalorder %s200, %s214
      %p216 = scmp.eq.s32.totalorder %s47, 0
      %p217 = por %p215, %p216
      %s219 = sadd.s32 %s218, 1
      %p222 = scmp.eq.s32.totalorder %s41, 3
      %p223 = scmp.ne.s32.totalorder %s218, %s220
      %p224 = scmp.eq.s32.totalorder %s41, 0
      %p225 = por %p223, %p224
      %p226 = scmp.ne.s32.totalorder %s218, %s220
      %p227 = scmp.eq.s32.totalorder %s46, 3
      %p228 = por %p226, %p227
      %p229 = scmp.ne.s32.totalorder %s220, %s221
      %p230 = scmp.eq.s32.totalorder %s46, 0
      %p231 = por %p229, %p230
      %p232 = scmp.ne.s32.totalorder %s220, %s221
      %p233 = scmp.eq.s32.totalorder %s47, 3
      %p234 = por %p232, %p233
      %p236 = scmp.ne.s32.totalorder %s221, %s235
      %p237 = scmp.eq.s32.totalorder %s47, 0
      %p238 = por %p236, %p237
      %s240 = sadd.s32 %s239, 1
      %p243 = scmp.eq.s32.totalorder %s41, 3
      %p244 = scmp.ne.s32.totalorder %s239, %s241
      %p245 = scmp.eq.s32.totalorder %s41, 0
      %p246 = por %p244, %p245
      %p247 = scmp.ne.s32.totalorder %s239, %s241
      %p248 = scmp.eq.s32.totalorder %s46, 3
      %p249 = por %p247, %p248
      %p250 = scmp.ne.s32.totalorder %s241, %s242
      %p251 = scmp.eq.s32.totalorder %s46, 0
      %p252 = por %p250, %p251
      %p253 = scmp.ne.s32.totalorder %s241, %s242
      %p254 = scmp.eq.s32.totalorder %s47, 3
      %p255 = por %p253, %p254
      %p257 = scmp.ne.s32.totalorder %s242, %s256
      %p258 = scmp.eq.s32.totalorder %s47, 0
      %p259 = por %p257, %p258
      %s261 = sadd.s32 %s260, 1
      %p264 = scmp.eq.s32.totalorder %s41, 3
      %p265 = scmp.ne.s32.totalorder %s260, %s262
      %p266 = scmp.eq.s32.totalorder %s41, 0
      %p267 = por %p265, %p266
      %p268 = scmp.ne.s32.totalorder %s260, %s262
      %p269 = scmp.eq.s32.totalorder %s46, 3
      %p270 = por %p268, %p269
      %p271 = scmp.ne.s32.totalorder %s262, %s263
      %p272 = scmp.eq.s32.totalorder %s46, 0
      %p273 = por %p271, %p272
      %p274 = scmp.ne.s32.totalorder %s262, %s263
      %p275 = scmp.eq.s32.totalorder %s47, 3
      %p276 = por %p274, %p275
      %p278 = scmp.ne.s32.totalorder %s263, %s277
      %p279 = scmp.eq.s32.totalorder %s47, 0
      %p280 = por %p278, %p279
      %s282 = sadd.s32 %s281, 1
      %p285 = scmp.eq.s32.totalorder %s41, 3
      %p286 = scmp.ne.s32.totalorder %s281, %s283
      %p287 = scmp.eq.s32.totalorder %s41, 0
      %p288 = por %p286, %p287
      %p289 = scmp.ne.s32.totalorder %s281, %s283
      %p290 = scmp.eq.s32.totalorder %s46, 3
      %p291 = por %p289, %p290
      %p292 = scmp.ne.s32.totalorder %s283, %s284
      %p293 = scmp.eq.s32.totalorder %s46, 0
      %p294 = por %p292, %p293
      %p295 = scmp.ne.s32.totalorder %s283, %s284
      %p296 = scmp.eq.s32.totalorder %s47, 3
      %p297 = por %p295, %p296
      %p299 = scmp.ne.s32.totalorder %s284, %s298
      %p300 = scmp.eq.s32.totalorder %s47, 0
      %p301 = por %p299, %p300
      %s303 = sadd.s32 %s302, 1
      %p306 = scmp.eq.s32.totalorder %s41, 3
      %p307 = scmp.ne.s32.totalorder %s302, %s304
      %p308 = scmp.eq.s32.totalorder %s41, 0
      %p309 = por %p307, %p308
      %p310 = scmp.ne.s32.totalorder %s302, %s304
      %p311 = scmp.eq.s32.totalorder %s46, 3
      %p312 = por %p310, %p311
      %p313 = scmp.ne.s32.totalorder %s304, %s305
      %p314 = scmp.eq.s32.totalorder %s46, 0
      %p315 = por %p313, %p314
      %p316 = scmp.ne.s32.totalorder %s304, %s305
      %p317 = scmp.eq.s32.totalorder %s47, 3
      %p318 = por %p316, %p317
      %p320 = scmp.ne.s32.totalorder %s305, %s319
      %p321 = scmp.eq.s32.totalorder %s47, 0
      %p322 = por %p320, %p321
      %s324 = sadd.s32 %s323, 1
      %p327 = scmp.eq.s32.totalorder %s41, 3
      %p328 = scmp.ne.s32.totalorder %s323, %s325
      %p329 = scmp.eq.s32.totalorder %s41, 0
      %p330 = por %p328, %p329
      %p331 = scmp.ne.s32.totalorder %s323, %s325
      %p332 = scmp.eq.s32.totalorder %s46, 3
      %p333 = por %p331, %p332
      %p334 = scmp.ne.s32.totalorder %s325, %s326
      %p335 = scmp.eq.s32.totalorder %s46, 0
      %p336 = por %p334, %p335
      %p337 = scmp.ne.s32.totalorder %s325, %s326
      %p338 = scmp.eq.s32.totalorder %s47, 3
      %p339 = por %p337, %p338
      %p341 = scmp.ne.s32.totalorder %s326, %s340
      %p342 = scmp.eq.s32.totalorder %s47, 0
      %p343 = por %p341, %p342
      %s345 = sadd.s32 %s344, 1
      %p348 = scmp.eq.s32.totalorder %s41, 3
      %p349 = scmp.ne.s32.totalorder %s344, %s346
      %p350 = scmp.eq.s32.totalorder %s41, 0
      %p351 = por %p349, %p350
      %p352 = scmp.ne.s32.totalorder %s344, %s346
      %p353 = scmp.eq.s32.totalorder %s46, 3
      %p354 = por %p352, %p353
      %p355 = scmp.ne.s32.totalorder %s346, %s347
      %p356 = scmp.eq.s32.totalorder %s46, 0
      %p357 = por %p355, %p356
      %p358 = scmp.ne.s32.totalorder %s346, %s347
      %p359 = scmp.eq.s32.totalorder %s47, 3
      %p360 = por %p358, %p359
      %p362 = scmp.ne.s32.totalorder %s347, %s361
      %p363 = scmp.eq.s32.totalorder %s47, 0
      %p364 = por %p362, %p363
      %s366 = sadd.s32 %s365, 1
      %p369 = scmp.eq.s32.totalorder %s41, 3
      %p370 = scmp.ne.s32.totalorder %s365, %s367
      %p371 = scmp.eq.s32.totalorder %s41, 0
      %p372 = por %p370, %p371
      %p373 = scmp.ne.s32.totalorder %s365, %s367
      %p374 = scmp.eq.s32.totalorder %s46, 3
      %p375 = por %p373, %p374
      %p376 = scmp.ne.s32.totalorder %s367, %s368
      %p377 = scmp.eq.s32.totalorder %s46, 0
      %p378 = por %p376, %p377
      %p379 = scmp.ne.s32.totalorder %s367, %s368
      %p380 = scmp.eq.s32.totalorder %s47, 3
      %p381 = por %p379, %p380
      %p383 = scmp.ne.s32.totalorder %s368, %s382
      %p384 = scmp.eq.s32.totalorder %s47, 0
      %p385 = por %p383, %p384
      %s387 = sadd.s32 %s386, 1
      %p390 = scmp.eq.s32.totalorder %s41, 3
      %p391 = scmp.ne.s32.totalorder %s386, %s388
      %p392 = scmp.eq.s32.totalorder %s41, 0
      %p393 = por %p391, %p392
      %p394 = scmp.ne.s32.totalorder %s386, %s388
      %p395 = scmp.eq.s32.totalorder %s46, 3
      %p396 = por %p394, %p395
      %p397 = scmp.ne.s32.totalorder %s388, %s389
      %p398 = scmp.eq.s32.totalorder %s46, 0
      %p399 = por %p397, %p398
      %p400 = scmp.ne.s32.totalorder %s388, %s389
      %p401 = scmp.eq.s32.totalorder %s47, 3
      %p402 = por %p400, %p401
      %p404 = scmp.ne.s32.totalorder %s389, %s403
      %p405 = scmp.eq.s32.totalorder %s47, 0
      %p406 = por %p404, %p405
      %s408 = sadd.s32 %s407, 1
      %p411 = scmp.eq.s32.totalorder %s41, 3
      %p412 = scmp.ne.s32.totalorder %s407, %s409
      %p413 = scmp.eq.s32.totalorder %s41, 0
      %p414 = por %p412, %p413
      %p415 = scmp.ne.s32.totalorder %s407, %s409
      %p416 = scmp.eq.s32.totalorder %s46, 3
      %p417 = por %p415, %p416
      %p418 = scmp.ne.s32.totalorder %s409, %s410
      %p419 = scmp.eq.s32.totalorder %s46, 0
      %p420 = por %p418, %p419
      %p421 = scmp.ne.s32.totalorder %s409, %s410
      %p422 = scmp.eq.s32.totalorder %s47, 3
      %p423 = por %p421, %p422
      %p425 = scmp.ne.s32.totalorder %s410, %s424
      %p426 = scmp.eq.s32.totalorder %s47, 0
      %p427 = por %p425, %p426
      %s429 = sadd.s32 %s428, 1
      %p432 = scmp.eq.s32.totalorder %s41, 3
      %p433 = scmp.ne.s32.totalorder %s428, %s430
      %p434 = scmp.eq.s32.totalorder %s41, 0
      %p435 = por %p433, %p434
      %p436 = scmp.ne.s32.totalorder %s428, %s430
      %p437 = scmp.eq.s32.totalorder %s46, 3
      %p438 = por %p436, %p437
      %p439 = scmp.ne.s32.totalorder %s430, %s431
      %p440 = scmp.eq.s32.totalorder %s46, 0
      %p441 = por %p439, %p440
      %p442 = scmp.ne.s32.totalorder %s430, %s431
      %p443 = scmp.eq.s32.totalorder %s47, 3
      %p444 = por %p442, %p443
      %p446 = scmp.ne.s32.totalorder %s431, %s445
      %p447 = scmp.eq.s32.totalorder %s47, 0
      %p448 = por %p446, %p447
      %s449 = ssub.s32 %s48, %s60
      %p450 = scmp.eq.s32.totalorder %s449, 0
      %s452 = sadd.s32 %s451, 1
      %s453 = scalar_select %p450, %s451, %s452
      %p456 = pneg %p450
      %p457 = scmp.eq.s32.totalorder %s41, 3
      %p458 = por %p456, %p457
      %p459 = scmp.ne.s32.totalorder %s451, %s454
      %p460 = scmp.eq.s32.totalorder %s41, 0
      %p461 = por %p459, %p460
      %p462 = scmp.ne.s32.totalorder %s451, %s454
      %p463 = scmp.eq.s32.totalorder %s46, 3
      %p464 = por %p462, %p463
      %p465 = scmp.ne.s32.totalorder %s454, %s455
      %p466 = scmp.eq.s32.totalorder %s46, 0
      %p467 = por %p465, %p466
      %p468 = scmp.ne.s32.totalorder %s454, %s455
      %p469 = scmp.eq.s32.totalorder %s47, 3
      %p470 = por %p468, %p469
      %p472 = scmp.ne.s32.totalorder %s455, %s471
      %p473 = scmp.eq.s32.totalorder %s47, 0
      %p474 = por %p472, %p473
      %p475 = scmp.le.s32.totalorder 1, %s41
      %p476 = scmp.lt.s32.totalorder %s41, 5
      %p477 = pnand %p475, %p476
      %p478 = pneg %p477
      // Predicated region
      $region9: #{tpu_custom_call.1} parent=5 // pred_check
        _
      $region10: #{tpu_custom_call.1} parent=5 // pred_check_branch
        %480 = sbr.rel (%p477) target = $region12
      $region11: #{tpu_custom_call.1} parent=5 // pred_region
        %s481 = ssub.s32 %s41, 1
        // Predicated region
        $region13: #{tpu_custom_call.1} parent=11 // pred_check
          %p482 = pneg %p126
        $region14: #{tpu_custom_call.1} parent=11 // pred_check_branch
          %484 = sbr.rel (%p482) target = $region16
        $region15: #{tpu_custom_call.1} parent=11 // pred_region
          %s486 = ssub.s32 128, 128
          %487 = vsyncadd [#allocation7], %s486
          %s488 = sshll.u32 [#allocation8], 4
          %s489 = int_to_ptr.vmem [resolvable:$true] %s488
          %494 = dma.hbm_to_vmem [thread:$0]  %s2, 128, %s489, [#allocation7], 64, 64, 4
        $region16: #{tpu_custom_call.1} parent=11 // pred_fallthru
          _
        // Predicated region
        $region17: #{tpu_custom_call.1} parent=11 // pred_check
          %p495 = pneg %p147
        $region18: #{tpu_custom_call.1} parent=11 // pred_check_branch
          %497 = sbr.rel (%p495) target = $region20
        $region19: #{tpu_custom_call.1} parent=11 // pred_region
          %s499 = ssub.s32 16, 16
          %500 = vsyncadd [#allocation10], %s499
          %s502 = sshll.u32 [#allocation9], 4
          %s503 = int_to_ptr.vmem [resolvable:$true] %s502
          %505 = dma.hbm_to_vmem [thread:$0]  %s3, 16, %s503, [#allocation10]
        $region20: #{tpu_custom_call.1} parent=11 // pred_fallthru
          _
        // Predicated region
        $region21: #{tpu_custom_call.1} parent=11 // pred_check
          %p506 = pneg %p168
        $region22: #{tpu_custom_call.1} parent=11 // pred_check_branch
          %508 = sbr.rel (%p506) target = $region24
        $region23: #{tpu_custom_call.1} parent=11 // pred_region
          %s510 = ssub.s32 16, 16
          %511 = vsyncadd [#allocation10], %s510
          %s513 = sshll.u32 [#allocation11], 4
          %s514 = int_to_ptr.vmem [resolvable:$true] %s513
          %516 = dma.hbm_to_vmem [thread:$0]  %s4, 16, %s514, [#allocation10]
        $region24: #{tpu_custom_call.1} parent=11 // pred_fallthru
          _
        // Predicated region
        $region25: #{tpu_custom_call.1} parent=11 // pred_check
          %p517 = pneg %p189
        $region26: #{tpu_custom_call.1} parent=11 // pred_check_branch
          %519 = sbr.rel (%p517) target = $region28
        $region27: #{tpu_custom_call.1} parent=11 // pred_region
          %s521 = ssub.s32 16, 16
          %522 = vsyncadd [#allocation13], %s521
          %s524 = sshll.u32 [#allocation12], 4
          %s525 = int_to_ptr.vmem [resolvable:$true] %s524
          %527 = dma.hbm_to_vmem [thread:$0]  %s5, 16, %s525, [#allocation13]
        $region28: #{tpu_custom_call.1} parent=11 // pred_fallthru
          _
        // Predicated region
        $region29: #{tpu_custom_call.1} parent=11 // pred_check
          %p528 = pneg %p210
        $region30: #{tpu_custom_call.1} parent=11 // pred_check_branch
          %530 = sbr.rel (%p528) target = $region32
        $region31: #{tpu_custom_call.1} parent=11 // pred_region
          %s532 = ssub.s32 256, 256
          %533 = vsyncadd [#allocation13], %s532
          %s534 = sshll.u32 [#allocation14], 4
          %s535 = int_to_ptr.vmem [resolvable:$true] %s534
          %540 = dma.hbm_to_vmem [thread:$0]  %s6, 256, %s535, [#allocation13], 64, 64, 4
        $region32: #{tpu_custom_call.1} parent=11 // pred_fallthru
          _
        // Predicated region
        $region33: #{tpu_custom_call.1} parent=11 // pred_check
          %p541 = pneg %p231
        $region34: #{tpu_custom_call.1} parent=11 // pred_check_branch
          %543 = sbr.rel (%p541) target = $region36
        $region35: #{tpu_custom_call.1} parent=11 // pred_region
          %s545 = ssub.s32 16, 16
          %546 = vsyncadd [#allocation16], %s545
          %s548 = sshll.u32 [#allocation15], 4
          %s549 = int_to_ptr.vmem [resolvable:$true] %s548
          %551 = dma.hbm_to_vmem [thread:$0]  %s7, 16, %s549, [#allocation16]
        $region36: #{tpu_custom_call.1} parent=11 // pred_fallthru
          _
        // Predicated region
        $region37: #{tpu_custom_call.1} parent=11 // pred_check
          %p552 = pneg %p252
        $region38: #{tpu_custom_call.1} parent=11 // pred_check_branch
          %554 = sbr.rel (%p552) target = $region40
        $region39: #{tpu_custom_call.1} parent=11 // pred_region
          %s556 = ssub.s32 256, 256
          %557 = vsyncadd [#allocation16], %s556
          %s558 = sshll.u32 [#allocation17], 4
          %s559 = int_to_ptr.vmem [resolvable:$true] %s558
          %564 = dma.hbm_to_vmem [thread:$0]  %s8, 256, %s559, [#allocation16], 64, 64, 4
        $region40: #{tpu_custom_call.1} parent=11 // pred_fallthru
          _
        // Predicated region
        $region41: #{tpu_custom_call.1} parent=11 // pred_check
          %p565 = pneg %p273
        $region42: #{tpu_custom_call.1} parent=11 // pred_check_branch
          %567 = sbr.rel (%p565) target = $region44
        $region43: #{tpu_custom_call.1} parent=11 // pred_region
          %s569 = ssub.s32 16, 16
          %570 = vsyncadd [#allocation19], %s569
          %s572 = sshll.u32 [#allocation18], 4
          %s573 = int_to_ptr.vmem [resolvable:$true] %s572
          %575 = dma.hbm_to_vmem [thread:$0]  %s9, 16, %s573, [#allocation19]
        $region44: #{tpu_custom_call.1} parent=11 // pred_fallthru
          _
        // Predicated region
        $region45: #{tpu_custom_call.1} parent=11 // pred_check
          %p576 = pneg %p294
        $region46: #{tpu_custom_call.1} parent=11 // pred_check_branch
          %578 = sbr.rel (%p576) target = $region48
        $region47: #{tpu_custom_call.1} parent=11 // pred_region
          %s580 = ssub.s32 16, 16
          %581 = vsyncadd [#allocation19], %s580
          %s583 = sshll.u32 [#allocation20], 4
          %s584 = int_to_ptr.vmem [resolvable:$true] %s583
          %586 = dma.hbm_to_vmem [thread:$0]  %s10, 16, %s584, [#allocation19]
        $region48: #{tpu_custom_call.1} parent=11 // pred_fallthru
          _
        // Predicated region
        $region49: #{tpu_custom_call.1} parent=11 // pred_check
          %p587 = pneg %p315
        $region50: #{tpu_custom_call.1} parent=11 // pred_check_branch
          %589 = sbr.rel (%p587) target = $region52
        $region51: #{tpu_custom_call.1} parent=11 // pred_region
          %s591 = ssub.s32 16, 16
          %592 = vsyncadd [#allocation22], %s591
          %s594 = sshll.u32 [#allocation21], 4
          %s595 = int_to_ptr.vmem [resolvable:$true] %s594
          %597 = dma.hbm_to_vmem [thread:$0]  %s11, 16, %s595, [#allocation22]
        $region52: #{tpu_custom_call.1} parent=11 // pred_fallthru
          _
        // Predicated region
        $region53: #{tpu_custom_call.1} parent=11 // pred_check
          %p598 = pneg %p336
        $region54: #{tpu_custom_call.1} parent=11 // pred_check_branch
          %600 = sbr.rel (%p598) target = $region56
        $region55: #{tpu_custom_call.1} parent=11 // pred_region
          %s602 = ssub.s32 256, 256
          %603 = vsyncadd [#allocation22], %s602
          %s604 = sshll.u32 [#allocation23], 4
          %s605 = int_to_ptr.vmem [resolvable:$true] %s604
          %610 = dma.hbm_to_vmem [thread:$0]  %s12, 256, %s605, [#allocation22], 64, 64, 4
        $region56: #{tpu_custom_call.1} parent=11 // pred_fallthru
          _
        // Predicated region
        $region57: #{tpu_custom_call.1} parent=11 // pred_check
          %p611 = pneg %p357
        $region58: #{tpu_custom_call.1} parent=11 // pred_check_branch
          %613 = sbr.rel (%p611) target = $region60
        $region59: #{tpu_custom_call.1} parent=11 // pred_region
          %s615 = ssub.s32 16, 16
          %616 = vsyncadd [#allocation25], %s615
          %s618 = sshll.u32 [#allocation24], 4
          %s619 = int_to_ptr.vmem [resolvable:$true] %s618
          %621 = dma.hbm_to_vmem [thread:$0]  %s13, 16, %s619, [#allocation25]
        $region60: #{tpu_custom_call.1} parent=11 // pred_fallthru
          _
        // Predicated region
        $region61: #{tpu_custom_call.1} parent=11 // pred_check
          %p622 = pneg %p378
        $region62: #{tpu_custom_call.1} parent=11 // pred_check_branch
          %624 = sbr.rel (%p622) target = $region64
        $region63: #{tpu_custom_call.1} parent=11 // pred_region
          %s626 = ssub.s32 512, 512
          %627 = vsyncadd [#allocation25], %s626
          %s628 = sshll.u32 [#allocation26], 4
          %s629 = int_to_ptr.vmem [resolvable:$true] %s628
          %634 = dma.hbm_to_vmem [thread:$0]  %s14, 512, %s629, [#allocation25], 64, 64, 4
        $region64: #{tpu_custom_call.1} parent=11 // pred_fallthru
          _
        // Predicated region
        $region65: #{tpu_custom_call.1} parent=11 // pred_check
          %p635 = pneg %p399
        $region66: #{tpu_custom_call.1} parent=11 // pred_check_branch
          %637 = sbr.rel (%p635) target = $region68
        $region67: #{tpu_custom_call.1} parent=11 // pred_region
          %s639 = ssub.s32 16, 16
          %640 = vsyncadd [#allocation28], %s639
          %s642 = sshll.u32 [#allocation27], 4
          %s643 = int_to_ptr.vmem [resolvable:$true] %s642
          %645 = dma.hbm_to_vmem [thread:$0]  %s15, 16, %s643, [#allocation28]
        $region68: #{tpu_custom_call.1} parent=11 // pred_fallthru
          _
        // Predicated region
        $region69: #{tpu_custom_call.1} parent=11 // pred_check
          %p646 = pneg %p420
        $region70: #{tpu_custom_call.1} parent=11 // pred_check_branch
          %648 = sbr.rel (%p646) target = $region72
        $region71: #{tpu_custom_call.1} parent=11 // pred_region
          %s650 = ssub.s32 16, 16
          %651 = vsyncadd [#allocation28], %s650
          %s653 = sshll.u32 [#allocation29], 4
          %s654 = int_to_ptr.vmem [resolvable:$true] %s653
          %656 = dma.hbm_to_vmem [thread:$0]  %s16, 16, %s654, [#allocation28]
        $region72: #{tpu_custom_call.1} parent=11 // pred_fallthru
          _
        // Predicated region
        $region73: #{tpu_custom_call.1} parent=11 // pred_check
          %p657 = pneg %p441
        $region74: #{tpu_custom_call.1} parent=11 // pred_check_branch
          %659 = sbr.rel (%p657) target = $region76
        $region75: #{tpu_custom_call.1} parent=11 // pred_region
          %s661 = ssub.s32 16, 16
          %662 = vsyncadd [#allocation31], %s661
          %s664 = sshll.u32 [#allocation30], 4
          %s665 = int_to_ptr.vmem [resolvable:$true] %s664
          %667 = dma.hbm_to_vmem [thread:$0]  %s17, 16, %s665, [#allocation31]
        $region76: #{tpu_custom_call.1} parent=11 // pred_fallthru
          _
      $region12: #{tpu_custom_call.1} parent=5 // pred_fallthru
        _
      %p668 = scmp.lt.s32.totalorder %s41, 4
      // Predicated region
      $region77: #{tpu_custom_call.1} parent=5 // pred_check
        %p669 = pneg %p668
      $region78: #{tpu_custom_call.1} parent=5 // pred_check_branch
        %671 = sbr.rel (%p669) target = $region80
      $region79: #{tpu_custom_call.1} parent=5 // pred_region
        // Predicated region
        $region81: #{tpu_custom_call.1} parent=79 // pred_check
          %p672 = pneg %p73
        $region82: #{tpu_custom_call.1} parent=79 // pred_check_branch
          %674 = sbr.rel (%p672) target = $region84
        $region83: #{tpu_custom_call.1} parent=79 // pred_region
          %s675 = sand.u32 %s63, 1
          %s676 = scalar_lea.sflag [#allocation4], %s675
          %s677 = sand.u32 %s63, 1
          %s678 = smul.addr %s677, 8
          %s679 = scalar_lea.vmem [#allocation3], %s678
          %s681 = ssub.s32 128, 128
          %682 = vsyncadd %s676, %s681
          %s683 = smul.addr %s48, 128
          %s684 = scalar_lea.hbm %s0, %s683
          %s686 = sshll.u32 %s679, 4
          %s687 = int_to_ptr.vmem [resolvable:$true] %s686
          %689 = dma.hbm_to_vmem [thread:$0]  %s684, 128, %s687, %s676
        $region84: #{tpu_custom_call.1} parent=79 // pred_fallthru
          _
        // Predicated region
        $region85: #{tpu_custom_call.1} parent=79 // pred_check
          %p690 = pneg %p99
        $region86: #{tpu_custom_call.1} parent=79 // pred_check_branch
          %692 = sbr.rel (%p690) target = $region88
        $region87: #{tpu_custom_call.1} parent=79 // pred_region
          %s693 = sand.u32 %s41, 1
          %s694 = scalar_lea.sflag [#allocation7], %s693
          %s695 = sand.u32 %s89, 1
          %s696 = scalar_lea.vmem [#allocation6], %s695
          %s698 = ssub.s32 16, 16
          %699 = vsyncadd %s694, %s698
          %s700 = smul.addr %s48, 16
          %s701 = scalar_lea.hbm %s1, %s700
          %s703 = sshll.u32 %s696, 4
          %s704 = int_to_ptr.vmem [resolvable:$true] %s703
          %706 = dma.hbm_to_vmem [thread:$0]  %s701, 16, %s704, %s694
        $region88: #{tpu_custom_call.1} parent=79 // pred_fallthru
          _
      $region80: #{tpu_custom_call.1} parent=5 // pred_fallthru
        _
      %p707 = scmp.le.s32.totalorder 1, %s41
      %p708 = scmp.lt.s32.totalorder %s41, 5
      %p709 = pnand %p707, %p708
      %p710 = pneg %p709
      // Predicated region
      $region89: #{tpu_custom_call.1} parent=5 // pred_check
        _
      $region90: #{tpu_custom_call.1} parent=5 // pred_check_branch
        %712 = sbr.rel (%p709) target = $region92
      $region91: #{tpu_custom_call.1} parent=5 // pred_region
        %s713 = ssub.s32 %s41, 1
        %s714 = sand.u32 %s66, 1
        %s715 = scalar_lea.sflag [#allocation4], %s714
        %s716 = sand.u32 %s66, 1
        %s717 = smul.addr %s716, 8
        %s718 = scalar_lea.vmem [#allocation3], %s717
        // Predicated region
        $region93: #{tpu_custom_call.1} parent=91 // pred_check
          %p719 = pneg %p79
        $region94: #{tpu_custom_call.1} parent=91 // pred_check_branch
          %721 = sbr.rel (%p719) target = $region96
        $region95: #{tpu_custom_call.1} parent=91 // pred_region
          %722 = dma.done %s715, 128
        $region96: #{tpu_custom_call.1} parent=91 // pred_fallthru
          _
        %s723 = sand.u32 %s46, 1
        %s724 = scalar_lea.sflag [#allocation7], %s723
        %s725 = sand.u32 %s92, 1
        %s726 = scalar_lea.vmem [#allocation6], %s725
        // Predicated region
        $region97: #{tpu_custom_call.1} parent=91 // pred_check
          %p727 = pneg %p105
        $region98: #{tpu_custom_call.1} parent=91 // pred_check_branch
          %729 = sbr.rel (%p727) target = $region100
        $region99: #{tpu_custom_call.1} parent=91 // pred_region
          %730 = dma.done %s724, 16
        $region100: #{tpu_custom_call.1} parent=91 // pred_fallthru
          _
        // Predicated region
        $region101: #{tpu_custom_call.1} parent=91 // pred_check
          %p731 = pneg %p126
        $region102: #{tpu_custom_call.1} parent=91 // pred_check_branch
          %733 = sbr.rel (%p731) target = $region104
        $region103: #{tpu_custom_call.1} parent=91 // pred_region
          %734 = dma.done [#allocation7], 128
        $region104: #{tpu_custom_call.1} parent=91 // pred_fallthru
          _
        // Predicated region
        $region105: #{tpu_custom_call.1} parent=91 // pred_check
          %p735 = pneg %p147
        $region106: #{tpu_custom_call.1} parent=91 // pred_check_branch
          %737 = sbr.rel (%p735) target = $region108
        $region107: #{tpu_custom_call.1} parent=91 // pred_region
          %738 = dma.done [#allocation10], 16
        $region108: #{tpu_custom_call.1} parent=91 // pred_fallthru
          _
        // Predicated region
        $region109: #{tpu_custom_call.1} parent=91 // pred_check
          %p739 = pneg %p168
        $region110: #{tpu_custom_call.1} parent=91 // pred_check_branch
          %741 = sbr.rel (%p739) target = $region112
        $region111: #{tpu_custom_call.1} parent=91 // pred_region
          %742 = dma.done [#allocation10], 16
        $region112: #{tpu_custom_call.1} parent=91 // pred_fallthru
          _
        // Predicated region
        $region113: #{tpu_custom_call.1} parent=91 // pred_check
          %p743 = pneg %p189
        $region114: #{tpu_custom_call.1} parent=91 // pred_check_branch
          %745 = sbr.rel (%p743) target = $region116
        $region115: #{tpu_custom_call.1} parent=91 // pred_region
          %746 = dma.done [#allocation13], 16
        $region116: #{tpu_custom_call.1} parent=91 // pred_fallthru
          _
        // Predicated region
        $region117: #{tpu_custom_call.1} parent=91 // pred_check
          %p747 = pneg %p210
        $region118: #{tpu_custom_call.1} parent=91 // pred_check_branch
          %749 = sbr.rel (%p747) target = $region120
        $region119: #{tpu_custom_call.1} parent=91 // pred_region
          %750 = dma.done [#allocation13], 256
        $region120: #{tpu_custom_call.1} parent=91 // pred_fallthru
          _
        // Predicated region
        $region121: #{tpu_custom_call.1} parent=91 // pred_check
          %p751 = pneg %p231
        $region122: #{tpu_custom_call.1} parent=91 // pred_check_branch
          %753 = sbr.rel (%p751) target = $region124
        $region123: #{tpu_custom_call.1} parent=91 // pred_region
          %754 = dma.done [#allocation16], 16
        $region124: #{tpu_custom_call.1} parent=91 // pred_fallthru
          _
        // Predicated region
        $region125: #{tpu_custom_call.1} parent=91 // pred_check
          %p755 = pneg %p252
        $region126: #{tpu_custom_call.1} parent=91 // pred_check_branch
          %757 = sbr.rel (%p755) target = $region128
        $region127: #{tpu_custom_call.1} parent=91 // pred_region
          %758 = dma.done [#allocation16], 256
        $region128: #{tpu_custom_call.1} parent=91 // pred_fallthru
          _
        // Predicated region
        $region129: #{tpu_custom_call.1} parent=91 // pred_check
          %p759 = pneg %p273
        $region130: #{tpu_custom_call.1} parent=91 // pred_check_branch
          %761 = sbr.rel (%p759) target = $region132
        $region131: #{tpu_custom_call.1} parent=91 // pred_region
          %762 = dma.done [#allocation19], 16
        $region132: #{tpu_custom_call.1} parent=91 // pred_fallthru
          _
        // Predicated region
        $region133: #{tpu_custom_call.1} parent=91 // pred_check
          %p763 = pneg %p294
        $region134: #{tpu_custom_call.1} parent=91 // pred_check_branch
          %765 = sbr.rel (%p763) target = $region136
        $region135: #{tpu_custom_call.1} parent=91 // pred_region
          %766 = dma.done [#allocation19], 16
        $region136: #{tpu_custom_call.1} parent=91 // pred_fallthru
          _
        // Predicated region
        $region137: #{tpu_custom_call.1} parent=91 // pred_check
          %p767 = pneg %p315
        $region138: #{tpu_custom_call.1} parent=91 // pred_check_branch
          %769 = sbr.rel (%p767) target = $region140
        $region139: #{tpu_custom_call.1} parent=91 // pred_region
          %770 = dma.done [#allocation22], 16
        $region140: #{tpu_custom_call.1} parent=91 // pred_fallthru
          _
        // Predicated region
        $region141: #{tpu_custom_call.1} parent=91 // pred_check
          %p771 = pneg %p336
        $region142: #{tpu_custom_call.1} parent=91 // pred_check_branch
          %773 = sbr.rel (%p771) target = $region144
        $region143: #{tpu_custom_call.1} parent=91 // pred_region
          %774 = dma.done [#allocation22], 256
        $region144: #{tpu_custom_call.1} parent=91 // pred_fallthru
          _
        // Predicated region
        $region145: #{tpu_custom_call.1} parent=91 // pred_check
          %p775 = pneg %p357
        $region146: #{tpu_custom_call.1} parent=91 // pred_check_branch
          %777 = sbr.rel (%p775) target = $region148
        $region147: #{tpu_custom_call.1} parent=91 // pred_region
          %778 = dma.done [#allocation25], 16
        $region148: #{tpu_custom_call.1} parent=91 // pred_fallthru
          _
        // Predicated region
        $region149: #{tpu_custom_call.1} parent=91 // pred_check
          %p779 = pneg %p378
        $region150: #{tpu_custom_call.1} parent=91 // pred_check_branch
          %781 = sbr.rel (%p779) target = $region152
        $region151: #{tpu_custom_call.1} parent=91 // pred_region
          %782 = dma.done [#allocation25], 512
        $region152: #{tpu_custom_call.1} parent=91 // pred_fallthru
          _
        // Predicated region
        $region153: #{tpu_custom_call.1} parent=91 // pred_check
          %p783 = pneg %p399
        $region154: #{tpu_custom_call.1} parent=91 // pred_check_branch
          %785 = sbr.rel (%p783) target = $region156
        $region155: #{tpu_custom_call.1} parent=91 // pred_region
          %786 = dma.done [#allocation28], 16
        $region156: #{tpu_custom_call.1} parent=91 // pred_fallthru
          _
        // Predicated region
        $region157: #{tpu_custom_call.1} parent=91 // pred_check
          %p787 = pneg %p420
        $region158: #{tpu_custom_call.1} parent=91 // pred_check_branch
          %789 = sbr.rel (%p787) target = $region160
        $region159: #{tpu_custom_call.1} parent=91 // pred_region
          %790 = dma.done [#allocation28], 16
        $region160: #{tpu_custom_call.1} parent=91 // pred_fallthru
          _
        // Predicated region
        $region161: #{tpu_custom_call.1} parent=91 // pred_check
          %p791 = pneg %p441
        $region162: #{tpu_custom_call.1} parent=91 // pred_check_branch
          %793 = sbr.rel (%p791) target = $region164
        $region163: #{tpu_custom_call.1} parent=91 // pred_region
          %794 = dma.done [#allocation31], 16
        $region164: #{tpu_custom_call.1} parent=91 // pred_fallthru
          _
        %s795 = sand.u32 %s66, 1
        %s796 = scalar_lea.sflag [#allocation4], %s795
        %s797 = sand.u32 %s66, 1
        %s798 = smul.addr %s797, 8
        %s799 = scalar_lea.vmem [#allocation3], %s798
        %p800 = pneg %p79
        %p801 = pneg %p76
        %s802 = sand.u32 %s46, 1
        %s803 = scalar_lea.sflag [#allocation7], %s802
        %s804 = sand.u32 %s92, 1
        %s805 = scalar_lea.vmem [#allocation6], %s804
        %p806 = pneg %p105
        %p807 = pneg %p102
        %p808 = pneg %p126
        %p809 = pneg %p123
        %p810 = pneg %p147
        %p811 = pneg %p144
        %p812 = pneg %p168
        %p813 = pneg %p165
        %p814 = pneg %p189
        %p815 = pneg %p186
        %p816 = pneg %p210
        %p817 = pneg %p207
        %p818 = pneg %p231
        %p819 = pneg %p228
        %p820 = pneg %p252
        %p821 = pneg %p249
        %p822 = pneg %p273
        %p823 = pneg %p270
        %p824 = pneg %p294
        %p825 = pneg %p291
        %p826 = pneg %p315
        %p827 = pneg %p312
        %p828 = pneg %p336
        %p829 = pneg %p333
        %p830 = pneg %p357
        %p831 = pneg %p354
        %p832 = pneg %p378
        %p833 = pneg %p375
        %p834 = pneg %p399
        %p835 = pneg %p396
        %p836 = pneg %p420
        %p837 = pneg %p417
        %p838 = pneg %p441
        %p839 = pneg %p438
        %p840 = pneg %p467
        %p841 = pneg %p464
        %s842 = sand.u32 %s454, 1
        %s843 = scalar_lea.sflag [#allocation5], %s842
        %s844 = sand.u32 %s454, 1
        %s845 = smul.addr %s844, 8
        %s846 = scalar_lea.vmem [#allocation32], %s845
        %v848 = vld [vmem:[#allocation11] sm:$0x1]
        %v849 = vld [vmem:[#allocation12] sm:$0x1]
        %p850 = scmp.eq.s32.totalorder %s51, 0
        // Predicated region
        $region165: #{tpu_custom_call.1} parent=91 // pred_check
          %p851 = pneg %p850
        $region166: #{tpu_custom_call.1} parent=91 // pred_check_branch
          %853 = sbr.rel (%p851) target = $region168
        $region167: #{tpu_custom_call.1} parent=91 // pred_region
          %v854 = vld [vmem:[%s718] sm:$0xff]
          %v855 = vpack.c.bf16 %v854, %v854
          %v856 = vld [vmem:[#allocation8] sm:$0xf]
          %v857 = vld [vmem:[#allocation8 + $0x4] sm:$0xf]
          %v858 = vld [vmem:[#allocation9] sm:$0x1]
          %v860 = vlaneseq
          %v861 = vshrl.u32 %v860, 7
          %v862 = vsub.s32 0, %v861
          %v863 = vrot.slane %v858, %v862
          %v867 = vunpack.c.l.b16 %v856
          %v868 = vunpack.c.l.b16 %v857
          %v869 = vpack.c.b16 %v868, %v867
          %vm871 = vcmask 130048
          %v873 = vsel %vm871, %v855, 0
          %875 = vmatprep.subr.bf16.mxu0 0
          %876 = vmatpush1.bf16.msra.mxu0 %v869
          %877 = vmatprep.subr.bf16.mxu0 0
          %878 = vmatpush1.bf16.msra.mxu0 0
          %879 = vmatprep.subr.bf16.mxu0 0
          %880 = vmatpush1.bf16.msra.mxu0 0
          %881 = vmatprep.subr.bf16.mxu0 0
          %882 = vmatpush1.bf16.msra.mxu0 0
          %883 = vmatprep.subr.bf16.mxu0 0
          %884 = vmatpush1.bf16.msra.mxu0 0
          %885 = vmatprep.subr.bf16.mxu0 0
          %886 = vmatpush1.bf16.msra.mxu0 0
          %887 = vmatprep.subr.bf16.mxu0 0
          %888 = vmatpush1.bf16.msra.mxu0 0
          %889 = vmatprep.subr.bf16.mxu0 0
          %890 = vmatpush1.bf16.msra.mxu0 0
          %891 = vmatprep.subr.bf16.mxu0 0
          %892 = vmatpush1.bf16.msra.mxu0 0
          %893 = vmatprep.subr.bf16.mxu0 0
          %894 = vmatpush1.bf16.msra.mxu0 0
          %895 = vmatprep.subr.bf16.mxu0 0
          %896 = vmatpush1.bf16.msra.mxu0 0
          %897 = vmatprep.subr.bf16.mxu0 0
          %898 = vmatpush1.bf16.msra.mxu0 0
          %899 = vmatprep.subr.bf16.mxu0 0
          %900 = vmatpush1.bf16.msra.mxu0 0
          %901 = vmatprep.subr.bf16.mxu0 0
          %902 = vmatpush1.bf16.msra.mxu0 0
          %903 = vmatprep.subr.bf16.mxu0 0
          %904 = vmatpush1.bf16.msra.mxu0 0
          %905 = vmatprep.subr.bf16.mxu0 0
          %906 = vmatpush1.bf16.msra.mxu0 0
          %907 = vmatprep.mubr.bf16.mxu0 0
          %908 = vmatmul.mubr.bf16.gmra.mrb[0].mxu0 %v873
          %v909 = vpop.f32.mrb[0].mxu0
          %v910 = vadd.f32 %v863, %v909
          %v911 = vpop.f32.mrb[0].mxu0
          %v912 = vpop.f32.mrb[0].mxu0
          %v913 = vpop.f32.mrb[0].mxu0
          %914 = vdwg.mxu0
          %vm915 = vcmask 261120
          %v916 = vsel %vm915, %v910, 0.0
          %917 = vadd.xlane.f32.xlu0 %v916
          %v918 = vpop.xlane.xlu0 %917
          %v919 = vrcp.pop 32.0
          %v920 = vmul.f32 %v918, %v919
          %v921 = vsub.f32 %v910, %v920
          %v922 = vmul.f32 %v921, %v921
          %v923 = vsel %vm915, %v922, 0.0
          %924 = vadd.xlane.f32.xlu0 %v923
          %v925 = vpop.xlane.xlu0 %924
          %v926 = vmul.f32 %v925, %v919
          %v927 = vadd.f32 %v926, 1e-12
          %v928 = vrsqrt.pop %v927
          %v929 = vmul.f32 %v921, %v928
          %v931 = vlaneseq
          %v932 = vshrl.u32 %v931, 7
          %v933 = vsub.s32 0, %v932
          %v934 = vrot.slane %v848, %v933
          %v936 = vmul.f32 %v929, %v934
          %v938 = vlaneseq
          %v939 = vshrl.u32 %v938, 7
          %v940 = vsub.s32 0, %v939
          %v941 = vrot.slane %v849, %v940
          %v943 = vadd.f32 %v936, %v941
          %944 = vst.msk [vmem:[#allocation2] sm:$0xff] %vm915, %v943
        $region168: #{tpu_custom_call.1} parent=91 // pred_fallthru
          _
        %v945 = vld [vmem:[#allocation2] sm:$0xff]
        %v946 = vld [vmem:[%s726] sm:$0x1]
        %v947 = vpack.c.bf16 %v945, %v945
        %v948 = vld [vmem:[#allocation14] sm:$0xf]
        %v949 = vld [vmem:[#allocation14 + $0x4] sm:$0xf]
        %v950 = vld [vmem:[#allocation14 + $0x8] sm:$0xf]
        %v951 = vld [vmem:[#allocation14 + $0xc] sm:$0xf]
        %v952 = vld [vmem:[#allocation15] sm:$0x1]
        %v954 = vlaneseq
        %v955 = vshrl.u32 %v954, 7
        %v956 = vsub.s32 0, %v955
        %v957 = vrot.slane %v952, %v956
        %v963 = vunpack.c.l.b16 %v948
        %v964 = vunpack.c.l.b16 %v949
        %v965 = vunpack.c.l.b16 %v950
        %v966 = vunpack.c.l.b16 %v951
        %v967 = vpack.c.b16 %v964, %v963
        %v968 = vpack.c.b16 %v966, %v965
        %vm971 = vcmask 261120
        %v973 = vsel %vm971, %v947, 0
        %975 = vmatprep.subr.bf16.mxu0 0
        %976 = vmatpush1.bf16.msra.mxu0 %v967
        %977 = vmatprep.subr.bf16.mxu0 0
        %978 = vmatpush1.bf16.msra.mxu0 %v968
        %979 = vmatprep.subr.bf16.mxu0 0
        %980 = vmatpush1.bf16.msra.mxu0 0
        %981 = vmatprep.subr.bf16.mxu0 0
        %982 = vmatpush1.bf16.msra.mxu0 0
        %983 = vmatprep.subr.bf16.mxu0 0
        %984 = vmatpush1.bf16.msra.mxu0 0
        %985 = vmatprep.subr.bf16.mxu0 0
        %986 = vmatpush1.bf16.msra.mxu0 0
        %987 = vmatprep.subr.bf16.mxu0 0
        %988 = vmatpush1.bf16.msra.mxu0 0
        %989 = vmatprep.subr.bf16.mxu0 0
        %990 = vmatpush1.bf16.msra.mxu0 0
        %991 = vmatprep.subr.bf16.mxu0 0
        %992 = vmatpush1.bf16.msra.mxu0 0
        %993 = vmatprep.subr.bf16.mxu0 0
        %994 = vmatpush1.bf16.msra.mxu0 0
        %995 = vmatprep.subr.bf16.mxu0 0
        %996 = vmatpush1.bf16.msra.mxu0 0
        %997 = vmatprep.subr.bf16.mxu0 0
        %998 = vmatpush1.bf16.msra.mxu0 0
        %999 = vmatprep.subr.bf16.mxu0 0
        %1000 = vmatpush1.bf16.msra.mxu0 0
        %1001 = vmatprep.subr.bf16.mxu0 0
        %1002 = vmatpush1.bf16.msra.mxu0 0
        %1003 = vmatprep.subr.bf16.mxu0 0
        %1004 = vmatpush1.bf16.msra.mxu0 0
        %1005 = vmatprep.subr.bf16.mxu0 0
        %1006 = vmatpush1.bf16.msra.mxu0 0
        %1007 = vmatprep.mubr.bf16.mxu0 0
        %1008 = vmatmul.mubr.bf16.gmra.mrb[0].mxu0 %v973
        %v1009 = vpop.f32.mrb[0].mxu0
        %v1010 = vadd.f32 %v957, %v1009
        %v1011 = vpop.f32.mrb[0].mxu0
        %v1012 = vpop.f32.mrb[0].mxu0
        %v1013 = vpop.f32.mrb[0].mxu0
        %1014 = vdwg.mxu0
        %v1015 = vmul.f32 %v1010, 0.35355338
        %v1016 = vpack.c.bf16 %v1015, %v1015
        %v1017 = vpack.c.bf16 %v1010, %v1010
        %v1019 = vlaneseq
        %v1020 = vshrl.u32 %v1019, 7
        %v1021 = vsub.s32 0, %v1020
        %v1022 = vrot.slane %v946, %v1021
        %1025 = vrot.lane.b32.xlu0 %v1017, 96
        %v1026 = vpop.permute.xlu0 %1025
        %vm1027 = vcmask 64512
        %v1029 = vsel %vm1027, %v1016, 0
        %v1032 = vsel %vm1027, %v1026, 0
        %1034 = vmatprep.subr.bf16.mxu0 0
        %1035 = vmatpush1.bf16.xpose.msra.mxu0 %v1032
        %1036 = vmatprep.subr.bf16.mxu0 0
        %1037 = vmatpush1.bf16.xpose.msra.mxu0 0
        %1038 = vmatprep.subr.bf16.mxu0 0
        %1039 = vmatpush1.bf16.xpose.msra.mxu0 0
        %1040 = vmatprep.subr.bf16.mxu0 0
        %1041 = vmatpush1.bf16.xpose.msra.mxu0 0
        %1042 = vmatprep.subr.bf16.mxu0 0
        %1043 = vmatpush1.bf16.xpose.msra.mxu0 0
        %1044 = vmatprep.subr.bf16.mxu0 0
        %1045 = vmatpush1.bf16.xpose.msra.mxu0 0
        %1046 = vmatprep.subr.bf16.mxu0 0
        %1047 = vmatpush1.bf16.xpose.msra.mxu0 0
        %1048 = vmatprep.subr.bf16.mxu0 0
        %1049 = vmatpush1.bf16.xpose.msra.mxu0 0
        %1050 = vmatprep.subr.bf16.mxu0 0
        %1051 = vmatpush1.bf16.xpose.msra.mxu0 0
        %1052 = vmatprep.subr.bf16.mxu0 0
        %1053 = vmatpush1.bf16.xpose.msra.mxu0 0
        %1054 = vmatprep.subr.bf16.mxu0 0
        %1055 = vmatpush1.bf16.xpose.msra.mxu0 0
        %1056 = vmatprep.subr.bf16.mxu0 0
        %1057 = vmatpush1.bf16.xpose.msra.mxu0 0
        %1058 = vmatprep.subr.bf16.mxu0 0
        %1059 = vmatpush1.bf16.xpose.msra.mxu0 0
        %1060 = vmatprep.subr.bf16.mxu0 0
        %1061 = vmatpush1.bf16.xpose.msra.mxu0 0
        %1062 = vmatprep.subr.bf16.mxu0 0
        %1063 = vmatpush1.bf16.xpose.msra.mxu0 0
        %1064 = vmatprep.subr.bf16.mxu0 0
        %1065 = vmatpush1.bf16.xpose.msra.mxu0 0
        %1066 = vmatprep.mubr.bf16.mxu0 0
        %1067 = vmatmul.mubr.bf16.gmra.mrb[0].mxu0 %v1029
        %v1068 = vpop.f32.mrb[0].mxu0
        %v1069 = vadd.f32 %v1022, %v1068
        %v1070 = vpop.f32.mrb[0].mxu0
        %v1071 = vpop.f32.mrb[0].mxu0
        %v1072 = vpop.f32.mrb[0].mxu0
        %1073 = vdwg.mxu0
        %v1074 = vsel %vm1027, %v1069, -inf
        %1075 = vmax.xlane.f32.xlu0 %v1074
        %v1076 = vpop.xlane.xlu0 %1075
        %v1077 = vsub.f32 %v1069, %v1076
        %v1078 = vmul.f32 %v1077, 1.442695
        %v1079 = vpow.pop %v1078
        %v1080 = vsel %vm1027, %v1079, 0.0
        %1081 = vadd.xlane.f32.xlu0 %v1080
        %v1082 = vpop.xlane.xlu0 %1081
        %v1083 = vrcp.pop %v1082
        %v1084 = vmul.f32 %v1079, %v1083
        %v1085 = vpack.c.bf16 %v1084, %v1084
        %1086 = vrot.lane.b32.xlu0 %v1017, 64
        %v1087 = vpop.permute.xlu0 %1086
        %v1089 = vsel %vm1027, %v1085, 0
        %vm1091 = vcmask 1043456
        %v1093 = vsel %vm1091, %v1087, 0
        %1095 = vmatprep.subr.bf16.mxu0 0
        %1096 = vmatpush1.bf16.msra.mxu0 %v1093
        %1097 = vmatprep.subr.bf16.mxu0 0
        %1098 = vmatpush1.bf16.msra.mxu0 0
        %1099 = vmatprep.subr.bf16.mxu0 0
        %1100 = vmatpush1.bf16.msra.mxu0 0
        %1101 = vmatprep.subr.bf16.mxu0 0
        %1102 = vmatpush1.bf16.msra.mxu0 0
        %1103 = vmatprep.subr.bf16.mxu0 0
        %1104 = vmatpush1.bf16.msra.mxu0 0
        %1105 = vmatprep.subr.bf16.mxu0 0
        %1106 = vmatpush1.bf16.msra.mxu0 0
        %1107 = vmatprep.subr.bf16.mxu0 0
        %1108 = vmatpush1.bf16.msra.mxu0 0
        %1109 = vmatprep.subr.bf16.mxu0 0
        %1110 = vmatpush1.bf16.msra.mxu0 0
        %1111 = vmatprep.subr.bf16.mxu0 0
        %1112 = vmatpush1.bf16.msra.mxu0 0
        %1113 = vmatprep.subr.bf16.mxu0 0
        %1114 = vmatpush1.bf16.msra.mxu0 0
        %1115 = vmatprep.subr.bf16.mxu0 0
        %1116 = vmatpush1.bf16.msra.mxu0 0
        %1117 = vmatprep.subr.bf16.mxu0 0
        %1118 = vmatpush1.bf16.msra.mxu0 0
        %1119 = vmatprep.subr.bf16.mxu0 0
        %1120 = vmatpush1.bf16.msra.mxu0 0
        %1121 = vmatprep.subr.bf16.mxu0 0
        %1122 = vmatpush1.bf16.msra.mxu0 0
        %1123 = vmatprep.subr.bf16.mxu0 0
        %1124 = vmatpush1.bf16.msra.mxu0 0
        %1125 = vmatprep.subr.bf16.mxu0 0
        %1126 = vmatpush1.bf16.msra.mxu0 0
        %1127 = vmatprep.mubr.bf16.mxu0 0
        %1128 = vmatmul.mubr.bf16.gmra.mrb[0].mxu0 %v1089
        %v1129 = vpop.f32.mrb[0].mxu0
        %v1130 = vadd.f32 0.0, %v1129
        %v1131 = vpop.f32.mrb[0].mxu0
        %v1132 = vpop.f32.mrb[0].mxu0
        %v1133 = vpop.f32.mrb[0].mxu0
        %1134 = vdwg.mxu0
        %1136 = vrot.lane.b32.xlu0 %v1016, 120
        %v1137 = vpop.permute.xlu0 %1136
        %1138 = vrot.lane.b32.xlu0 %v1017, 88
        %v1139 = vpop.permute.xlu0 %1138
        %v1141 = vsel %vm1027, %v1137, 0
        %v1144 = vsel %vm1027, %v1139, 0
        %1146 = vmatprep.subr.bf16.mxu0 0
        %1147 = vmatpush1.bf16.xpose.msra.mxu0 %v1144
        %1148 = vmatprep.subr.bf16.mxu0 0
        %1149 = vmatpush1.bf16.xpose.msra.mxu0 0
        %1150 = vmatprep.subr.bf16.mxu0 0
        %1151 = vmatpush1.bf16.xpose.msra.mxu0 0
        %1152 = vmatprep.subr.bf16.mxu0 0
        %1153 = vmatpush1.bf16.xpose.msra.mxu0 0
        %1154 = vmatprep.subr.bf16.mxu0 0
        %1155 = vmatpush1.bf16.xpose.msra.mxu0 0
        %1156 = vmatprep.subr.bf16.mxu0 0
        %1157 = vmatpush1.bf16.xpose.msra.mxu0 0
        %1158 = vmatprep.subr.bf16.mxu0 0
        %1159 = vmatpush1.bf16.xpose.msra.mxu0 0
        %1160 = vmatprep.subr.bf16.mxu0 0
        %1161 = vmatpush1.bf16.xpose.msra.mxu0 0
        %1162 = vmatprep.subr.bf16.mxu0 0
        %1163 = vmatpush1.bf16.xpose.msra.mxu0 0
        %1164 = vmatprep.subr.bf16.mxu0 0
        %1165 = vmatpush1.bf16.xpose.msra.mxu0 0
        %1166 = vmatprep.subr.bf16.mxu0 0
        %1167 = vmatpush1.bf16.xpose.msra.mxu0 0
        %1168 = vmatprep.subr.bf16.mxu0 0
        %1169 = vmatpush1.bf16.xpose.msra.mxu0 0
        %1170 = vmatprep.subr.bf16.mxu0 0
        %1171 = vmatpush1.bf16.xpose.msra.mxu0 0
        %1172 = vmatprep.subr.bf16.mxu0 0
        %1173 = vmatpush1.bf16.xpose.msra.mxu0 0
        %1174 = vmatprep.subr.bf16.mxu0 0
        %1175 = vmatpush1.bf16.xpose.msra.mxu0 0
        %1176 = vmatprep.subr.bf16.mxu0 0
        %1177 = vmatpush1.bf16.xpose.msra.mxu0 0
        %1178 = vmatprep.mubr.bf16.mxu0 0
        %1179 = vmatmul.mubr.bf16.gmra.mrb[0].mxu0 %v1141
        %v1180 = vpop.f32.mrb[0].mxu0
        %v1181 = vadd.f32 %v1022, %v1180
        %v1182 = vpop.f32.mrb[0].mxu0
        %v1183 = vpop.f32.mrb[0].mxu0
        %v1184 = vpop.f32.mrb[0].mxu0
        %1185 = vdwg.mxu0
        %v1186 = vsel %vm1027, %v1181, -inf
        %1187 = vmax.xlane.f32.xlu0 %v1186
        %v1188 = vpop.xlane.xlu0 %1187
        %v1189 = vsub.f32 %v1181, %v1188
        %v1190 = vmul.f32 %v1189, 1.442695
        %v1191 = vpow.pop %v1190
        %v1192 = vsel %vm1027, %v1191, 0.0
        %1193 = vadd.xlane.f32.xlu0 %v1192
        %v1194 = vpop.xlane.xlu0 %1193
        %v1195 = vrcp.pop %v1194
        %v1196 = vmul.f32 %v1191, %v1195
        %v1197 = vpack.c.bf16 %v1196, %v1196
        %1198 = vrot.lane.b32.xlu0 %v1017, 56
        %v1199 = vpop.permute.xlu0 %1198
        %v1201 = vsel %vm1027, %v1197, 0
        %v1204 = vsel %vm1091, %v1199, 0
        %1206 = vmatprep.subr.bf16.mxu0 0
        %1207 = vmatpush1.bf16.msra.mxu0 %v1204
        %1208 = vmatprep.subr.bf16.mxu0 0
        %1209 = vmatpush1.bf16.msra.mxu0 0
        %1210 = vmatprep.subr.bf16.mxu0 0
        %1211 = vmatpush1.bf16.msra.mxu0 0
        %1212 = vmatprep.subr.bf16.mxu0 0
        %1213 = vmatpush1.bf16.msra.mxu0 0
        %1214 = vmatprep.subr.bf16.mxu0 0
        %1215 = vmatpush1.bf16.msra.mxu0 0
        %1216 = vmatprep.subr.bf16.mxu0 0
        %1217 = vmatpush1.bf16.msra.mxu0 0
        %1218 = vmatprep.subr.bf16.mxu0 0
        %1219 = vmatpush1.bf16.msra.mxu0 0
        %1220 = vmatprep.subr.bf16.mxu0 0
        %1221 = vmatpush1.bf16.msra.mxu0 0
        %1222 = vmatprep.subr.bf16.mxu0 0
        %1223 = vmatpush1.bf16.msra.mxu0 0
        %1224 = vmatprep.subr.bf16.mxu0 0
        %1225 = vmatpush1.bf16.msra.mxu0 0
        %1226 = vmatprep.subr.bf16.mxu0 0
        %1227 = vmatpush1.bf16.msra.mxu0 0
        %1228 = vmatprep.subr.bf16.mxu0 0
        %1229 = vmatpush1.bf16.msra.mxu0 0
        %1230 = vmatprep.subr.bf16.mxu0 0
        %1231 = vmatpush1.bf16.msra.mxu0 0
        %1232 = vmatprep.subr.bf16.mxu0 0
        %1233 = vmatpush1.bf16.msra.mxu0 0
        %1234 = vmatprep.subr.bf16.mxu0 0
        %1235 = vmatpush1.bf16.msra.mxu0 0
        %1236 = vmatprep.subr.bf16.mxu0 0
        %1237 = vmatpush1.bf16.msra.mxu0 0
        %1238 = vmatprep.mubr.bf16.mxu0 0
        %1239 = vmatmul.mubr.bf16.gmra.mrb[0].mxu0 %v1201
        %v1240 = vpop.f32.mrb[0].mxu0
        %v1241 = vadd.f32 0.0, %v1240
        %v1242 = vpop.f32.mrb[0].mxu0
        %v1243 = vpop.f32.mrb[0].mxu0
        %v1244 = vpop.f32.mrb[0].mxu0
        %1245 = vdwg.mxu0
        %1246 = vrot.lane.b32.xlu0 %v1016, 112
        %v1247 = vpop.permute.xlu0 %1246
        %1248 = vrot.lane.b32.xlu0 %v1017, 80
        %v1249 = vpop.permute.xlu0 %1248
        %v1251 = vsel %vm1027, %v1247, 0
        %v1254 = vsel %vm1027, %v1249, 0
        %1256 = vmatprep.subr.bf16.mxu0 0
        %1257 = vmatpush1.bf16.xpose.msra.mxu0 %v1254
        %1258 = vmatprep.subr.bf16.mxu0 0
        %1259 = vmatpush1.bf16.xpose.msra.mxu0 0
        %1260 = vmatprep.subr.bf16.mxu0 0
        %1261 = vmatpush1.bf16.xpose.msra.mxu0 0
        %1262 = vmatprep.subr.bf16.mxu0 0
        %1263 = vmatpush1.bf16.xpose.msra.mxu0 0
        %1264 = vmatprep.subr.bf16.mxu0 0
        %1265 = vmatpush1.bf16.xpose.msra.mxu0 0
        %1266 = vmatprep.subr.bf16.mxu0 0
        %1267 = vmatpush1.bf16.xpose.msra.mxu0 0
        %1268 = vmatprep.subr.bf16.mxu0 0
        %1269 = vmatpush1.bf16.xpose.msra.mxu0 0
        %1270 = vmatprep.subr.bf16.mxu0 0
        %1271 = vmatpush1.bf16.xpose.msra.mxu0 0
        %1272 = vmatprep.subr.bf16.mxu0 0
        %1273 = vmatpush1.bf16.xpose.msra.mxu0 0
        %1274 = vmatprep.subr.bf16.mxu0 0
        %1275 = vmatpush1.bf16.xpose.msra.mxu0 0
        %1276 = vmatprep.subr.bf16.mxu0 0
        %1277 = vmatpush1.bf16.xpose.msra.mxu0 0
        %1278 = vmatprep.subr.bf16.mxu0 0
        %1279 = vmatpush1.bf16.xpose.msra.mxu0 0
        %1280 = vmatprep.subr.bf16.mxu0 0
        %1281 = vmatpush1.bf16.xpose.msra.mxu0 0
        %1282 = vmatprep.subr.bf16.mxu0 0
        %1283 = vmatpush1.bf16.xpose.msra.mxu0 0
        %1284 = vmatprep.subr.bf16.mxu0 0
        %1285 = vmatpush1.bf16.xpose.msra.mxu0 0
        %1286 = vmatprep.subr.bf16.mxu0 0
        %1287 = vmatpush1.bf16.xpose.msra.mxu0 0
        %1288 = vmatprep.mubr.bf16.mxu0 0
        %1289 = vmatmul.mubr.bf16.gmra.mrb[0].mxu0 %v1251
        %v1290 = vpop.f32.mrb[0].mxu0
        %v1291 = vadd.f32 %v1022, %v1290
        %v1292 = vpop.f32.mrb[0].mxu0
        %v1293 = vpop.f32.mrb[0].mxu0
        %v1294 = vpop.f32.mrb[0].mxu0
        %1295 = vdwg.mxu0
        %v1296 = vsel %vm1027, %v1291, -inf
        %1297 = vmax.xlane.f32.xlu0 %v1296
        %v1298 = vpop.xlane.xlu0 %1297
        %v1299 = vsub.f32 %v1291, %v1298
        %v1300 = vmul.f32 %v1299, 1.442695
        %v1301 = vpow.pop %v1300
        %v1302 = vsel %vm1027, %v1301, 0.0
        %1303 = vadd.xlane.f32.xlu0 %v1302
        %v1304 = vpop.xlane.xlu0 %1303
        %v1305 = vrcp.pop %v1304
        %v1306 = vmul.f32 %v1301, %v1305
        %v1307 = vpack.c.bf16 %v1306, %v1306
        %1308 = vrot.lane.b32.xlu0 %v1017, 48
        %v1309 = vpop.permute.xlu0 %1308
        %v1311 = vsel %vm1027, %v1307, 0
        %v1314 = vsel %vm1091, %v1309, 0
        %1316 = vmatprep.subr.bf16.mxu0 0
        %1317 = vmatpush1.bf16.msra.mxu0 %v1314
        %1318 = vmatprep.subr.bf16.mxu0 0
        %1319 = vmatpush1.bf16.msra.mxu0 0
        %1320 = vmatprep.subr.bf16.mxu0 0
        %1321 = vmatpush1.bf16.msra.mxu0 0
        %1322 = vmatprep.subr.bf16.mxu0 0
        %1323 = vmatpush1.bf16.msra.mxu0 0
        %1324 = vmatprep.subr.bf16.mxu0 0
        %1325 = vmatpush1.bf16.msra.mxu0 0
        %1326 = vmatprep.subr.bf16.mxu0 0
        %1327 = vmatpush1.bf16.msra.mxu0 0
        %1328 = vmatprep.subr.bf16.mxu0 0
        %1329 = vmatpush1.bf16.msra.mxu0 0
        %1330 = vmatprep.subr.bf16.mxu0 0
        %1331 = vmatpush1.bf16.msra.mxu0 0
        %1332 = vmatprep.subr.bf16.mxu0 0
        %1333 = vmatpush1.bf16.msra.mxu0 0
        %1334 = vmatprep.subr.bf16.mxu0 0
        %1335 = vmatpush1.bf16.msra.mxu0 0
        %1336 = vmatprep.subr.bf16.mxu0 0
        %1337 = vmatpush1.bf16.msra.mxu0 0
        %1338 = vmatprep.subr.bf16.mxu0 0
        %1339 = vmatpush1.bf16.msra.mxu0 0
        %1340 = vmatprep.subr.bf16.mxu0 0
        %1341 = vmatpush1.bf16.msra.mxu0 0
        %1342 = vmatprep.subr.bf16.mxu0 0
        %1343 = vmatpush1.bf16.msra.mxu0 0
        %1344 = vmatprep.subr.bf16.mxu0 0
        %1345 = vmatpush1.bf16.msra.mxu0 0
        %1346 = vmatprep.subr.bf16.mxu0 0
        %1347 = vmatpush1.bf16.msra.mxu0 0
        %1348 = vmatprep.mubr.bf16.mxu0 0
        %1349 = vmatmul.mubr.bf16.gmra.mrb[0].mxu0 %v1311
        %v1350 = vpop.f32.mrb[0].mxu0
        %v1351 = vadd.f32 0.0, %v1350
        %v1352 = vpop.f32.mrb[0].mxu0
        %v1353 = vpop.f32.mrb[0].mxu0
        %v1354 = vpop.f32.mrb[0].mxu0
        %1355 = vdwg.mxu0
        %1356 = vrot.lane.b32.xlu0 %v1016, 104
        %v1357 = vpop.permute.xlu0 %1356
        %1358 = vrot.lane.b32.xlu0 %v1017, 72
        %v1359 = vpop.permute.xlu0 %1358
        %v1361 = vsel %vm1027, %v1357, 0
        %v1364 = vsel %vm1027, %v1359, 0
        %1366 = vmatprep.subr.bf16.mxu0 0
        %1367 = vmatpush1.bf16.xpose.msra.mxu0 %v1364
        %1368 = vmatprep.subr.bf16.mxu0 0
        %1369 = vmatpush1.bf16.xpose.msra.mxu0 0
        %1370 = vmatprep.subr.bf16.mxu0 0
        %1371 = vmatpush1.bf16.xpose.msra.mxu0 0
        %1372 = vmatprep.subr.bf16.mxu0 0
        %1373 = vmatpush1.bf16.xpose.msra.mxu0 0
        %1374 = vmatprep.subr.bf16.mxu0 0
        %1375 = vmatpush1.bf16.xpose.msra.mxu0 0
        %1376 = vmatprep.subr.bf16.mxu0 0
        %1377 = vmatpush1.bf16.xpose.msra.mxu0 0
        %1378 = vmatprep.subr.bf16.mxu0 0
        %1379 = vmatpush1.bf16.xpose.msra.mxu0 0
        %1380 = vmatprep.subr.bf16.mxu0 0
        %1381 = vmatpush1.bf16.xpose.msra.mxu0 0
        %1382 = vmatprep.subr.bf16.mxu0 0
        %1383 = vmatpush1.bf16.xpose.msra.mxu0 0
        %1384 = vmatprep.subr.bf16.mxu0 0
        %1385 = vmatpush1.bf16.xpose.msra.mxu0 0
        %1386 = vmatprep.subr.bf16.mxu0 0
        %1387 = vmatpush1.bf16.xpose.msra.mxu0 0
        %1388 = vmatprep.subr.bf16.mxu0 0
        %1389 = vmatpush1.bf16.xpose.msra.mxu0 0
        %1390 = vmatprep.subr.bf16.mxu0 0
        %1391 = vmatpush1.bf16.xpose.msra.mxu0 0
        %1392 = vmatprep.subr.bf16.mxu0 0
        %1393 = vmatpush1.bf16.xpose.msra.mxu0 0
        %1394 = vmatprep.subr.bf16.mxu0 0
        %1395 = vmatpush1.bf16.xpose.msra.mxu0 0
        %1396 = vmatprep.subr.bf16.mxu0 0
        %1397 = vmatpush1.bf16.xpose.msra.mxu0 0
        %1398 = vmatprep.mubr.bf16.mxu0 0
        %1399 = vmatmul.mubr.bf16.gmra.mrb[0].mxu0 %v1361
        %v1400 = vpop.f32.mrb[0].mxu0
        %v1401 = vadd.f32 %v1022, %v1400
        %v1402 = vpop.f32.mrb[0].mxu0
        %v1403 = vpop.f32.mrb[0].mxu0
        %v1404 = vpop.f32.mrb[0].mxu0
        %1405 = vdwg.mxu0
        %v1406 = vsel %vm1027, %v1401, -inf
        %1407 = vmax.xlane.f32.xlu0 %v1406
        %v1408 = vpop.xlane.xlu0 %1407
        %v1409 = vsub.f32 %v1401, %v1408
        %v1410 = vmul.f32 %v1409, 1.442695
        %v1411 = vpow.pop %v1410
        %v1412 = vsel %vm1027, %v1411, 0.0
        %1413 = vadd.xlane.f32.xlu0 %v1412
        %v1414 = vpop.xlane.xlu0 %1413
        %v1415 = vrcp.pop %v1414
        %v1416 = vmul.f32 %v1411, %v1415
        %v1417 = vpack.c.bf16 %v1416, %v1416
        %1418 = vrot.lane.b32.xlu0 %v1017, 40
        %v1419 = vpop.permute.xlu0 %1418
        %v1421 = vsel %vm1027, %v1417, 0
        %v1424 = vsel %vm1091, %v1419, 0
        %1426 = vmatprep.subr.bf16.mxu0 0
        %1427 = vmatpush1.bf16.msra.mxu0 %v1424
        %1428 = vmatprep.subr.bf16.mxu0 0
        %1429 = vmatpush1.bf16.msra.mxu0 0
        %1430 = vmatprep.subr.bf16.mxu0 0
        %1431 = vmatpush1.bf16.msra.mxu0 0
        %1432 = vmatprep.subr.bf16.mxu0 0
        %1433 = vmatpush1.bf16.msra.mxu0 0
        %1434 = vmatprep.subr.bf16.mxu0 0
        %1435 = vmatpush1.bf16.msra.mxu0 0
        %1436 = vmatprep.subr.bf16.mxu0 0
        %1437 = vmatpush1.bf16.msra.mxu0 0
        %1438 = vmatprep.subr.bf16.mxu0 0
        %1439 = vmatpush1.bf16.msra.mxu0 0
        %1440 = vmatprep.subr.bf16.mxu0 0
        %1441 = vmatpush1.bf16.msra.mxu0 0
        %1442 = vmatprep.subr.bf16.mxu0 0
        %1443 = vmatpush1.bf16.msra.mxu0 0
        %1444 = vmatprep.subr.bf16.mxu0 0
        %1445 = vmatpush1.bf16.msra.mxu0 0
        %1446 = vmatprep.subr.bf16.mxu0 0
        %1447 = vmatpush1.bf16.msra.mxu0 0
        %1448 = vmatprep.subr.bf16.mxu0 0
        %1449 = vmatpush1.bf16.msra.mxu0 0
        %1450 = vmatprep.subr.bf16.mxu0 0
        %1451 = vmatpush1.bf16.msra.mxu0 0
        %1452 = vmatprep.subr.bf16.mxu0 0
        %1453 = vmatpush1.bf16.msra.mxu0 0
        %1454 = vmatprep.subr.bf16.mxu0 0
        %1455 = vmatpush1.bf16.msra.mxu0 0
        %1456 = vmatprep.subr.bf16.mxu0 0
        %1457 = vmatpush1.bf16.msra.mxu0 0
        %1458 = vmatprep.mubr.bf16.mxu0 0
        %1459 = vmatmul.mubr.bf16.gmra.mrb[0].mxu0 %v1421
        %v1460 = vpop.f32.mrb[0].mxu0
        %v1461 = vadd.f32 0.0, %v1460
        %v1462 = vpop.f32.mrb[0].mxu0
        %v1463 = vpop.f32.mrb[0].mxu0
        %v1464 = vpop.f32.mrb[0].mxu0
        %1465 = vdwg.mxu0
        %1467 = vrot.lane.b32.xlu0 %v1241, 8
        %v1468 = vpop.permute.xlu0 %1467
        %1471 = vrot.lane.b32.xlu0 %v1351, 16
        %v1472 = vpop.permute.xlu0 %1471
        %1475 = vrot.lane.b32.xlu0 %v1461, 24
        %v1476 = vpop.permute.xlu0 %1475
        %v1478 = vsel %vm1027, %v1130, %v1468
        %vm1479 = vcmask 130048
        %v1480 = vsel %vm1479, %v1478, %v1472
        %vm1481 = vcmask 195584
        %v1482 = vsel %vm1481, %v1480, %v1476
        %v1483 = vpack.c.bf16 %v1482, %v1482
        %v1484 = vld [vmem:[#allocation17] sm:$0xf]
        %v1485 = vld [vmem:[#allocation17 + $0x4] sm:$0xf]
        %v1486 = vld [vmem:[#allocation17 + $0x8] sm:$0xf]
        %v1487 = vld [vmem:[#allocation17 + $0xc] sm:$0xf]
        %v1488 = vld [vmem:[#allocation18] sm:$0x1]
        %v1490 = vlaneseq
        %v1491 = vshrl.u32 %v1490, 7
        %v1492 = vsub.s32 0, %v1491
        %v1493 = vrot.slane %v1488, %v1492
        %v1499 = vunpack.c.l.b16 %v1484
        %v1500 = vunpack.c.l.b16 %v1485
        %v1501 = vunpack.c.l.b16 %v1486
        %v1502 = vunpack.c.l.b16 %v1487
        %v1503 = vpack.c.b16 %v1500, %v1499
        %v1504 = vpack.c.b16 %v1502, %v1501
        %v1508 = vsel %vm971, %v1483, 0
        %1510 = vmatprep.subr.bf16.mxu0 0
        %1511 = vmatpush1.bf16.msra.mxu0 %v1503
        %1512 = vmatprep.subr.bf16.mxu0 0
        %1513 = vmatpush1.bf16.msra.mxu0 %v1504
        %1514 = vmatprep.subr.bf16.mxu0 0
        %1515 = vmatpush1.bf16.msra.mxu0 0
        %1516 = vmatprep.subr.bf16.mxu0 0
        %1517 = vmatpush1.bf16.msra.mxu0 0
        %1518 = vmatprep.subr.bf16.mxu0 0
        %1519 = vmatpush1.bf16.msra.mxu0 0
        %1520 = vmatprep.subr.bf16.mxu0 0
        %1521 = vmatpush1.bf16.msra.mxu0 0
        %1522 = vmatprep.subr.bf16.mxu0 0
        %1523 = vmatpush1.bf16.msra.mxu0 0
        %1524 = vmatprep.subr.bf16.mxu0 0
        %1525 = vmatpush1.bf16.msra.mxu0 0
        %1526 = vmatprep.subr.bf16.mxu0 0
        %1527 = vmatpush1.bf16.msra.mxu0 0
        %1528 = vmatprep.subr.bf16.mxu0 0
        %1529 = vmatpush1.bf16.msra.mxu0 0
        %1530 = vmatprep.subr.bf16.mxu0 0
        %1531 = vmatpush1.bf16.msra.mxu0 0
        %1532 = vmatprep.subr.bf16.mxu0 0
        %1533 = vmatpush1.bf16.msra.mxu0 0
        %1534 = vmatprep.subr.bf16.mxu0 0
        %1535 = vmatpush1.bf16.msra.mxu0 0
        %1536 = vmatprep.subr.bf16.mxu0 0
        %1537 = vmatpush1.bf16.msra.mxu0 0
        %1538 = vmatprep.subr.bf16.mxu0 0
        %1539 = vmatpush1.bf16.msra.mxu0 0
        %1540 = vmatprep.subr.bf16.mxu0 0
        %1541 = vmatpush1.bf16.msra.mxu0 0
        %1542 = vmatprep.mubr.bf16.mxu0 0
        %1543 = vmatmul.mubr.bf16.gmra.mrb[0].mxu0 %v1508
        %v1544 = vpop.f32.mrb[0].mxu0
        %v1545 = vadd.f32 %v1493, %v1544
        %v1546 = vpop.f32.mrb[0].mxu0
        %v1547 = vpop.f32.mrb[0].mxu0
        %v1548 = vpop.f32.mrb[0].mxu0
        %1549 = vdwg.mxu0
        %v1550 = vadd.f32 %v1545, %v945
        %v1551 = vld [vmem:[#allocation20] sm:$0x1]
        %v1552 = vld [vmem:[#allocation21] sm:$0x1]
        %v1553 = vsel %vm971, %v1550, 0.0
        %1554 = vadd.xlane.f32.xlu0 %v1553
        %v1555 = vpop.xlane.xlu0 %1554
        %v1556 = vrcp.pop 32.0
        %v1557 = vmul.f32 %v1555, %v1556
        %v1558 = vsub.f32 %v1550, %v1557
        %v1559 = vmul.f32 %v1558, %v1558
        %v1560 = vsel %vm971, %v1559, 0.0
        %1561 = vadd.xlane.f32.xlu0 %v1560
        %v1562 = vpop.xlane.xlu0 %1561
        %v1563 = vmul.f32 %v1562, %v1556
        %v1564 = vadd.f32 %v1563, 1e-12
        %v1565 = vrsqrt.pop %v1564
        %v1566 = vmul.f32 %v1558, %v1565
        %v1568 = vlaneseq
        %v1569 = vshrl.u32 %v1568, 7
        %v1570 = vsub.s32 0, %v1569
        %v1571 = vrot.slane %v1551, %v1570
        %v1573 = vmul.f32 %v1566, %v1571
        %v1575 = vlaneseq
        %v1576 = vshrl.u32 %v1575, 7
        %v1577 = vsub.s32 0, %v1576
        %v1578 = vrot.slane %v1552, %v1577
        %v1580 = vadd.f32 %v1573, %v1578
        %v1581 = vsel %vm971, %v1580, 0.0
        %1582 = vadd.xlane.f32.xlu0 %v1581
        %v1583 = vpop.xlane.xlu0 %1582
        %v1584 = vmul.f32 %v1583, %v1556
        %v1585 = vsub.f32 %v1580, %v1584
        %v1586 = vmul.f32 %v1585, %v1585
        %v1587 = vsel %vm971, %v1586, 0.0
        %1588 = vadd.xlane.f32.xlu0 %v1587
        %v1589 = vpop.xlane.xlu0 %1588
        %v1590 = vmul.f32 %v1589, %v1556
        %v1591 = vadd.f32 %v1590, 1e-12
        %v1592 = vrsqrt.pop %v1591
        %v1593 = vmul.f32 %v1585, %v1592
        %v1595 = vlaneseq
        %v1596 = vshrl.u32 %v1595, 7
        %v1597 = vsub.s32 0, %v1596
        %v1598 = vrot.slane %v848, %v1597
        %v1600 = vmul.f32 %v1593, %v1598
        %v1602 = vlaneseq
        %v1603 = vshrl.u32 %v1602, 7
        %v1604 = vsub.s32 0, %v1603
        %v1605 = vrot.slane %v849, %v1604
        %v1607 = vadd.f32 %v1600, %v1605
        %v1608 = vpack.c.bf16 %v1607, %v1607
        %v1609 = vld [vmem:[#allocation23] sm:$0xf]
        %v1610 = vld [vmem:[#allocation23 + $0x4] sm:$0xf]
        %v1611 = vld [vmem:[#allocation23 + $0x8] sm:$0xf]
        %v1612 = vld [vmem:[#allocation23 + $0xc] sm:$0xf]
        %v1613 = vld [vmem:[#allocation24] sm:$0x1]
        %v1615 = vlaneseq
        %v1616 = vshrl.u32 %v1615, 7
        %v1617 = vsub.s32 0, %v1616
        %v1618 = vrot.slane %v1613, %v1617
        %v1624 = vunpack.c.l.b16 %v1609
        %v1625 = vunpack.c.l.b16 %v1610
        %v1626 = vunpack.c.l.b16 %v1611
        %v1627 = vunpack.c.l.b16 %v1612
        %v1628 = vpack.c.b16 %v1625, %v1624
        %v1629 = vpack.c.b16 %v1627, %v1626
        %v1633 = vsel %vm971, %v1608, 0
        %1635 = vmatprep.subr.bf16.mxu0 0
        %1636 = vmatpush1.bf16.msra.mxu0 %v1628
        %1637 = vmatprep.subr.bf16.mxu0 0
        %1638 = vmatpush1.bf16.msra.mxu0 %v1629
        %1639 = vmatprep.subr.bf16.mxu0 0
        %1640 = vmatpush1.bf16.msra.mxu0 0
        %1641 = vmatprep.subr.bf16.mxu0 0
        %1642 = vmatpush1.bf16.msra.mxu0 0
        %1643 = vmatprep.subr.bf16.mxu0 0
        %1644 = vmatpush1.bf16.msra.mxu0 0
        %1645 = vmatprep.subr.bf16.mxu0 0
        %1646 = vmatpush1.bf16.msra.mxu0 0
        %1647 = vmatprep.subr.bf16.mxu0 0
        %1648 = vmatpush1.bf16.msra.mxu0 0
        %1649 = vmatprep.subr.bf16.mxu0 0
        %1650 = vmatpush1.bf16.msra.mxu0 0
        %1651 = vmatprep.subr.bf16.mxu0 0
        %1652 = vmatpush1.bf16.msra.mxu0 0
        %1653 = vmatprep.subr.bf16.mxu0 0
        %1654 = vmatpush1.bf16.msra.mxu0 0
        %1655 = vmatprep.subr.bf16.mxu0 0
        %1656 = vmatpush1.bf16.msra.mxu0 0
        %1657 = vmatprep.subr.bf16.mxu0 0
        %1658 = vmatpush1.bf16.msra.mxu0 0
        %1659 = vmatprep.subr.bf16.mxu0 0
        %1660 = vmatpush1.bf16.msra.mxu0 0
        %1661 = vmatprep.subr.bf16.mxu0 0
        %1662 = vmatpush1.bf16.msra.mxu0 0
        %1663 = vmatprep.subr.bf16.mxu0 0
        %1664 = vmatpush1.bf16.msra.mxu0 0
        %1665 = vmatprep.subr.bf16.mxu0 0
        %1666 = vmatpush1.bf16.msra.mxu0 0
        %1667 = vmatprep.mubr.bf16.mxu0 0
        %1668 = vmatmul.mubr.bf16.gmra.mrb[0].mxu0 %v1633
        %v1669 = vpop.f32.mrb[0].mxu0
        %v1670 = vadd.f32 %v1618, %v1669
        %v1671 = vpop.f32.mrb[0].mxu0
        %v1672 = vpop.f32.mrb[0].mxu0
        %v1673 = vpop.f32.mrb[0].mxu0
        %1674 = vdwg.mxu0
        %v1675 = vmul.f32 %v1670, 0.5
        %v1676 = vrcp.pop 1.4142135
        %v1677 = vmul.f32 %v1670, %v1676
        %v1678 = verf.f32.pop %v1677
        %v1679 = vadd.f32 %v1678, 1.0
        %v1680 = vmul.f32 %v1675, %v1679
        %v1681 = vpack.c.bf16 %v1680, %v1680
        %v1682 = vld [vmem:[#allocation26] sm:$0xf]
        %v1683 = vld [vmem:[#allocation26 + $0x4] sm:$0xf]
        %v1684 = vld [vmem:[#allocation26 + $0x8] sm:$0xf]
        %v1685 = vld [vmem:[#allocation26 + $0xc] sm:$0xf]
        %v1686 = vld [vmem:[#allocation26 + $0x10] sm:$0xf]
        %v1687 = vld [vmem:[#allocation26 + $0x14] sm:$0xf]
        %v1688 = vld [vmem:[#allocation26 + $0x18] sm:$0xf]
        %v1689 = vld [vmem:[#allocation26 + $0x1c] sm:$0xf]
        %v1690 = vld [vmem:[#allocation27] sm:$0x1]
        %v1692 = vlaneseq
        %v1693 = vshrl.u32 %v1692, 7
        %v1694 = vsub.s32 0, %v1693
        %v1695 = vrot.slane %v1690, %v1694
        %v1705 = vunpack.c.l.b16 %v1682
        %v1706 = vunpack.c.l.b16 %v1683
        %v1707 = vunpack.c.l.b16 %v1684
        %v1708 = vunpack.c.l.b16 %v1685
        %v1709 = vunpack.c.l.b16 %v1686
        %v1710 = vunpack.c.l.b16 %v1687
        %v1711 = vunpack.c.l.b16 %v1688
        %v1712 = vunpack.c.l.b16 %v1689
        %v1713 = vpack.c.b16 %v1706, %v1705
        %v1714 = vpack.c.b16 %v1708, %v1707
        %v1715 = vpack.c.b16 %v1710, %v1709
        %v1716 = vpack.c.b16 %v1712, %v1711
        %vm1721 = vcmask 523264
        %v1723 = vsel %vm1721, %v1681, 0
        %1725 = vmatprep.subr.bf16.mxu0 0
        %1726 = vmatpush1.bf16.msra.mxu0 %v1713
        %1727 = vmatprep.subr.bf16.mxu0 0
        %1728 = vmatpush1.bf16.msra.mxu0 %v1714
        %1729 = vmatprep.subr.bf16.mxu0 0
        %1730 = vmatpush1.bf16.msra.mxu0 %v1715
        %1731 = vmatprep.subr.bf16.mxu0 0
        %1732 = vmatpush1.bf16.msra.mxu0 %v1716
        %1733 = vmatprep.subr.bf16.mxu0 0
        %1734 = vmatpush1.bf16.msra.mxu0 0
        %1735 = vmatprep.subr.bf16.mxu0 0
        %1736 = vmatpush1.bf16.msra.mxu0 0
        %1737 = vmatprep.subr.bf16.mxu0 0
        %1738 = vmatpush1.bf16.msra.mxu0 0
        %1739 = vmatprep.subr.bf16.mxu0 0
        %1740 = vmatpush1.bf16.msra.mxu0 0
        %1741 = vmatprep.subr.bf16.mxu0 0
        %1742 = vmatpush1.bf16.msra.mxu0 0
        %1743 = vmatprep.subr.bf16.mxu0 0
        %1744 = vmatpush1.bf16.msra.mxu0 0
        %1745 = vmatprep.subr.bf16.mxu0 0
        %1746 = vmatpush1.bf16.msra.mxu0 0
        %1747 = vmatprep.subr.bf16.mxu0 0
        %1748 = vmatpush1.bf16.msra.mxu0 0
        %1749 = vmatprep.subr.bf16.mxu0 0
        %1750 = vmatpush1.bf16.msra.mxu0 0
        %1751 = vmatprep.subr.bf16.mxu0 0
        %1752 = vmatpush1.bf16.msra.mxu0 0
        %1753 = vmatprep.subr.bf16.mxu0 0
        %1754 = vmatpush1.bf16.msra.mxu0 0
        %1755 = vmatprep.subr.bf16.mxu0 0
        %1756 = vmatpush1.bf16.msra.mxu0 0
        %1757 = vmatprep.mubr.bf16.mxu0 0
        %1758 = vmatmul.mubr.bf16.gmra.mrb[0].mxu0 %v1723
        %v1759 = vpop.f32.mrb[0].mxu0
        %v1760 = vadd.f32 %v1695, %v1759
        %v1761 = vpop.f32.mrb[0].mxu0
        %v1762 = vpop.f32.mrb[0].mxu0
        %v1763 = vpop.f32.mrb[0].mxu0
        %1764 = vdwg.mxu0
        %v1765 = vadd.f32 %v1760, %v1607
        %v1766 = vld [vmem:[#allocation29] sm:$0x1]
        %v1767 = vld [vmem:[#allocation30] sm:$0x1]
        %v1768 = vsel %vm971, %v1765, 0.0
        %1769 = vadd.xlane.f32.xlu0 %v1768
        %v1770 = vpop.xlane.xlu0 %1769
        %v1771 = vmul.f32 %v1770, %v1556
        %v1772 = vsub.f32 %v1765, %v1771
        %v1773 = vmul.f32 %v1772, %v1772
        %v1774 = vsel %vm971, %v1773, 0.0
        %1775 = vadd.xlane.f32.xlu0 %v1774
        %v1776 = vpop.xlane.xlu0 %1775
        %v1777 = vmul.f32 %v1776, %v1556
        %v1778 = vadd.f32 %v1777, 1e-12
        %v1779 = vrsqrt.pop %v1778
        %v1780 = vmul.f32 %v1772, %v1779
        %v1782 = vlaneseq
        %v1783 = vshrl.u32 %v1782, 7
        %v1784 = vsub.s32 0, %v1783
        %v1785 = vrot.slane %v1766, %v1784
        %v1787 = vmul.f32 %v1780, %v1785
        %v1789 = vlaneseq
        %v1790 = vshrl.u32 %v1789, 7
        %v1791 = vsub.s32 0, %v1790
        %v1792 = vrot.slane %v1767, %v1791
        %v1794 = vadd.f32 %v1787, %v1792
        %1795 = vst.msk [vmem:[#allocation2] sm:$0xff] %vm971, %v1794
        %p1796 = scmp.eq.s32.totalorder %s51, 1
        // Predicated region
        $region169: #{tpu_custom_call.1} parent=91 // pred_check
          %p1797 = pneg %p1796
        $region170: #{tpu_custom_call.1} parent=91 // pred_check_branch
          %1799 = sbr.rel (%p1797) target = $region172
        $region171: #{tpu_custom_call.1} parent=91 // pred_region
          %1800 = vst.msk [vmem:[%s846] sm:$0xff] %vm971, %v1794
        $region172: #{tpu_custom_call.1} parent=91 // pred_fallthru
          _
        %s1801 = sand.u32 %s454, 1
        %s1802 = scalar_lea.sflag [#allocation5], %s1801
        %s1803 = sand.u32 %s454, 1
        %s1804 = smul.addr %s1803, 8
        %s1805 = scalar_lea.vmem [#allocation32], %s1804
        // Predicated region
        $region173: #{tpu_custom_call.1} parent=91 // pred_check
          %p1806 = pneg %p464
        $region174: #{tpu_custom_call.1} parent=91 // pred_check_branch
          %1808 = sbr.rel (%p1806) target = $region176
        $region175: #{tpu_custom_call.1} parent=91 // pred_region
          %s1810 = ssub.s32 128, 128
          %1811 = vsyncadd %s1802, %s1810
          %s1812 = smul.addr %s50, 128
          %s1813 = scalar_lea.hbm %s18, %s1812
          %s1815 = sshll.u32 %s1805, 4
          %s1816 = int_to_ptr.vmem [resolvable:$true] %s1815
          %1818 = dma.vmem_to_hbm [thread:$0]  %s1816, 128, %s1813, %s1802
        $region176: #{tpu_custom_call.1} parent=91 // pred_fallthru
          _
      $region92: #{tpu_custom_call.1} parent=5 // pred_fallthru
        _
      %p1819 = scmp.le.s32.totalorder 2, %s41
      // Predicated region
      $region177: #{tpu_custom_call.1} parent=5 // pred_check
        %p1820 = pneg %p1819
      $region178: #{tpu_custom_call.1} parent=5 // pred_check_branch
        %1822 = sbr.rel (%p1820) target = $region180
      $region179: #{tpu_custom_call.1} parent=5 // pred_region
        %s1823 = ssub.s32 %s41, 2
        // Predicated region
        $region181: #{tpu_custom_call.1} parent=179 // pred_check
          %p1824 = pneg %p470
        $region182: #{tpu_custom_call.1} parent=179 // pred_check_branch
          %1826 = sbr.rel (%p1824) target = $region184
        $region183: #{tpu_custom_call.1} parent=179 // pred_region
          %s1827 = sand.u32 %s455, 1
          %s1828 = scalar_lea.sflag [#allocation5], %s1827
          %s1829 = sand.u32 %s455, 1
          %s1830 = smul.addr %s1829, 8
          %s1831 = scalar_lea.vmem [#allocation32], %s1830
          %1832 = dma.done %s1828, 128
        $region184: #{tpu_custom_call.1} parent=179 // pred_fallthru
          _
      $region180: #{tpu_custom_call.1} parent=5 // pred_fallthru
        _
    $region6: #{tpu_custom_call.1} parent=1 // loop_footer
      %s45 = sadd.s32 1, %s41
    $region7: #{tpu_custom_call.1} parent=1 // loop_footer_branch
      %40 = sbr.rel target = $region3
    $region8: #{tpu_custom_call.1} parent=1 // loop_exit
      _
    %1833 = vsyncpa [#allocation4], 1
    %s1834 = scalar_lea.sflag [#allocation4], 1
    %1835 = vsyncpa %s1834, 1
    %1836 = vsyncpa [#allocation7], 1
    %s1837 = scalar_lea.sflag [#allocation7], 1
    %1838 = vsyncpa %s1837, 1
    %1839 = vsyncpa [#allocation10], 1
    %1840 = vsyncpa [#allocation13], 1
    %1841 = vsyncpa [#allocation16], 1
    %1842 = vsyncpa [#allocation19], 1
    %1843 = vsyncpa [#allocation22], 1
    %1844 = vsyncpa [#allocation25], 1
    %1845 = vsyncpa [#allocation28], 1
    %1846 = vsyncpa [#allocation31], 1
    %1847 = vsyncpa [#allocation5], 1
    %s1848 = scalar_lea.sflag [#allocation5], 1
    %1849 = vsyncpa %s1848, 1

// kernel: tpu_custom_call.1
$region0: #{tpu_custom_call.1}
  #allocation0 [shape = 'u32[]', space=smem, size = 0x4, offset = 0x4, fixed_abs, tag = 'smem constant byte address 0x4 - core index']
  #allocation1 [shape = 'u32[144,128]{1,0:T(1,128)}', space=vmem, size = 0x12000, scoped, tag = 'internal scratch']
  #allocation2 [shape = 'f32[8,32]{1,0:T(8,128)}', space=vmem, size = 0x1000, scoped, tag = 'scratch operand']
  %s0 = inlined_call_operand.hbm [shape: f32[2,8,16], index: 0, kind: input, shape index: {}]
  %s1 = inlined_call_operand.hbm [shape: f32[2,1,8], index: 1, kind: input, shape index: {}]
  %s2 = inlined_call_operand.hbm [shape: bf16[16,32], index: 2, kind: input, shape index: {}]
  %s3 = inlined_call_operand.hbm [shape: f32[1,32], index: 3, kind: input, shape index: {}]
  %s4 = inlined_call_operand.hbm [shape: f32[1,32], index: 4, kind: input, shape index: {}]
  %s5 = inlined_call_operand.hbm [shape: f32[1,32], index: 5, kind: input, shape index: {}]
  %s6 = inlined_call_operand.hbm [shape: bf16[32,96], index: 6, kind: input, shape index: {}]
  %s7 = inlined_call_operand.hbm [shape: f32[1,96], index: 7, kind: input, shape index: {}]
  %s8 = inlined_call_operand.hbm [shape: bf16[32,32], index: 8, kind: input, shape index: {}]
  %s9 = inlined_call_operand.hbm [shape: f32[1,32], index: 9, kind: input, shape index: {}]
  %s10 = inlined_call_operand.hbm [shape: f32[1,32], index: 10, kind: input, shape index: {}]
  %s11 = inlined_call_operand.hbm [shape: f32[1,32], index: 11, kind: input, shape index: {}]
  %s12 = inlined_call_operand.hbm [shape: bf16[32,64], index: 12, kind: input, shape index: {}]
  %s13 = inlined_call_operand.hbm [shape: f32[1,64], index: 13, kind: input, shape index: {}]
  %s14 = inlined_call_operand.hbm [shape: bf16[64,32], index: 14, kind: input, shape index: {}]
  %s15 = inlined_call_operand.hbm [shape: f32[1,32], index: 15, kind: input, shape index: {}]
  %s16 = inlined_call_operand.hbm [shape: f32[1,32], index: 16, kind: input, shape index: {}]
  %s17 = inlined_call_operand.hbm [shape: f32[1,32], index: 17, kind: input, shape index: {}]
  %s18 = inlined_call_operand.hbm [shape: f32[2,8,32], index: 18, kind: output, shape index: {}]
  %s19 = sld [smem:[#allocation0]]
  $region185: #{tpu_custom_call.1} parent=0
    _
  %s21 = ssub.s32 1, %s19
  %s22 = scalar_select 0, %s21, %s19
  $region1: #{tpu_custom_call.1} parent=0
    #allocation3 [shape = 'u8[8192]{0}', space=vmem, size = 0x2000, scoped, tag = 'input window, operand 0']
    #allocation4 [shape = 's32[2]{0}', space=sflag, size = 0x8, scoped, tag = 'scoped memory for tpu_custom_call.1']
    #allocation5 [shape = 's32[2]{0}', space=sflag, size = 0x8, scoped, tag = 'scoped memory for tpu_custom_call.1']
    #allocation6 [shape = 'u8[1024]{0}', space=vmem, size = 0x400, scoped, tag = 'input window, operand 1']
    #allocation7 [shape = 's32[2]{0}', space=sflag, size = 0x8, scoped, tag = 'scoped memory for tpu_custom_call.1']
    #allocation8 [shape = 'u8[4096]{0}', space=vmem, size = 0x1000, scoped, tag = 'input window, operand 2, single buffered']
    #allocation9 [shape = 'u8[512]{0}', space=vmem, size = 0x400, scoped, tag = 'input window, operand 3, single buffered']
    #allocation10 [shape = 's32[1]{0}', space=sflag, size = 0x4, scoped, tag = 'scoped memory for tpu_custom_call.1']
    #allocation11 [shape = 'u8[512]{0}', space=vmem, size = 0x400, scoped, tag = 'input window, operand 4, single buffered']
    #allocation12 [shape = 'u8[512]{0}', space=vmem, size = 0x400, scoped, tag = 'input window, operand 5, single buffered']
    #allocation13 [shape = 's32[1]{0}', space=sflag, size = 0x4, scoped, tag = 'scoped memory for tpu_custom_call.1']
    #allocation14 [shape = 'u8[8192]{0}', space=vmem, size = 0x2000, scoped, tag = 'input window, operand 6, single buffered']
    #allocation15 [shape = 'u8[512]{0}', space=vmem, size = 0x400, scoped, tag = 'input window, operand 7, single buffered']
    #allocation16 [shape = 's32[1]{0}', space=sflag, size = 0x4, scoped, tag = 'scoped memory for tpu_custom_call.1']
    #allocation17 [shape = 'u8[8192]{0}', space=vmem, size = 0x2000, scoped, tag = 'input window, operand 8, single buffered']
    #allocation18 [shape = 'u8[512]{0}', space=vmem, size = 0x400, scoped, tag = 'input window, operand 9, single buffered']
    #allocation19 [shape = 's32[1]{0}', space=sflag, size = 0x4, scoped, tag = 'scoped memory for tpu_custom_call.1']
    #allocation20 [shape = 'u8[512]{0}', space=vmem, size = 0x400, scoped, tag = 'input window, operand 10, single buffered']
    #allocation21 [shape = 'u8[512]{0}', space=vmem, size = 0x400, scoped, tag = 'input window, operand 11, single buffered']
    #allocation22 [shape = 's32[1]{0}', space=sflag, size = 0x4, scoped, tag = 'scoped memory for tpu_custom_call.1']
    #allocation23 [shape = 'u8[8192]{0}', space=vmem, size = 0x2000, scoped, tag = 'input window, operand 12, single buffered']
    #allocation24 [shape = 'u8[512]{0}', space=vmem, size = 0x400, scoped, tag = 'input window, operand 13, single buffered']
    #allocation25 [shape = 's32[1]{0}', space=sflag, size = 0x4, scoped, tag = 'scoped memory for tpu_custom_call.1']
    #allocation26 [shape = 'u8[16384]{0}', space=vmem, size = 0x4000, scoped, tag = 'input window, operand 14, single buffered']
    #allocation27 [shape = 'u8[512]{0}', space=vmem, size = 0x400, scoped, tag = 'input window, operand 15, single buffered']
    #allocation28 [shape = 's32[1]{0}', space=sflag, size = 0x4, scoped, tag = 'scoped memory for tpu_custom_call.1']
    #allocation29 [shape = 'u8[512]{0}', space=vmem, size = 0x400, scoped, tag = 'input window, operand 16, single buffered']
    #allocation30 [shape = 'u8[512]{0}', space=vmem, size = 0x400, scoped, tag = 'input window, operand 17, single buffered']
    #allocation31 [shape = 's32[1]{0}', space=sflag, size = 0x4, scoped, tag = 'scoped memory for tpu_custom_call.1']
    #allocation32 [shape = 'u8[8192]{0}', space=vmem, size = 0x2000, scoped, tag = 'output window, operand 0']
    %23 = vsyncpa [#allocation4], 0
    %s24 = scalar_lea.sflag [#allocation4], 1
    %25 = vsyncpa %s24, 0
    %26 = vsyncpa [#allocation7], 0
    %s27 = scalar_lea.sflag [#allocation7], 1
    %28 = vsyncpa %s27, 0
    %29 = vsyncpa [#allocation10], 0
    %30 = vsyncpa [#allocation13], 0
    %31 = vsyncpa [#allocation16], 0
    %32 = vsyncpa [#allocation19], 0
    %33 = vsyncpa [#allocation22], 0
    %34 = vsyncpa [#allocation25], 0
    %35 = vsyncpa [#allocation28], 0
    %36 = vsyncpa [#allocation31], 0
    %37 = vsyncpa [#allocation5], 0
    %s38 = scalar_lea.sflag [#allocation5], 1
    %39 = vsyncpa %s38, 0
    loop: start=0, step=1, limit=6
    $region2: #{tpu_custom_call.1} parent=1 // loop_pre_header
      _
    $region3: #{tpu_custom_call.1} parent=1 // loop_header
      %s41 = sphi 0, %s45
      %p42 = scmp.ge.s32.totalorder %s41, 6
      %s48 = sphi 0, %s60
      %s49 = sphi 0, %s56
      %s50 = sphi 0, %s48
      %s51 = sphi 0, %s49
      %s52 = sphi 0, %s50
      %s53 = sphi 0, %s51
      %s63 = sphi 0, %s65
      %s66 = sphi 0, %s63
      %s67 = sphi 0, %s66
      %s83 = sphi 0, %s67
      %s89 = sphi 0, %s91
      %s92 = sphi 0, %s89
      %s93 = sphi 0, %s92
      %s109 = sphi 0, %s93
      %s113 = sphi 0, %s113
      %s115 = sphi 0, %s113
      %s116 = sphi 0, %s115
      %s130 = sphi 0, %s116
      %s134 = sphi 0, %s134
      %s136 = sphi 0, %s134
      %s137 = sphi 0, %s136
      %s151 = sphi 0, %s137
      %s155 = sphi 0, %s155
      %s157 = sphi 0, %s155
      %s158 = sphi 0, %s157
      %s172 = sphi 0, %s158
      %s176 = sphi 0, %s176
      %s178 = sphi 0, %s176
      %s179 = sphi 0, %s178
      %s193 = sphi 0, %s179
      %s197 = sphi 0, %s197
      %s199 = sphi 0, %s197
      %s200 = sphi 0, %s199
      %s214 = sphi 0, %s200
      %s218 = sphi 0, %s218
      %s220 = sphi 0, %s218
      %s221 = sphi 0, %s220
      %s235 = sphi 0, %s221
      %s239 = sphi 0, %s239
      %s241 = sphi 0, %s239
      %s242 = sphi 0, %s241
      %s256 = sphi 0, %s242
      %s260 = sphi 0, %s260
      %s262 = sphi 0, %s260
      %s263 = sphi 0, %s262
      %s277 = sphi 0, %s263
      %s281 = sphi 0, %s281
      %s283 = sphi 0, %s281
      %s284 = sphi 0, %s283
      %s298 = sphi 0, %s284
      %s302 = sphi 0, %s302
      %s304 = sphi 0, %s302
      %s305 = sphi 0, %s304
      %s319 = sphi 0, %s305
      %s323 = sphi 0, %s323
      %s325 = sphi 0, %s323
      %s326 = sphi 0, %s325
      %s340 = sphi 0, %s326
      %s344 = sphi 0, %s344
      %s346 = sphi 0, %s344
      %s347 = sphi 0, %s346
      %s361 = sphi 0, %s347
      %s365 = sphi 0, %s365
      %s367 = sphi 0, %s365
      %s368 = sphi 0, %s367
      %s382 = sphi 0, %s368
      %s386 = sphi 0, %s386
      %s388 = sphi 0, %s386
      %s389 = sphi 0, %s388
      %s403 = sphi 0, %s389
      %s407 = sphi 0, %s407
      %s409 = sphi 0, %s407
      %s410 = sphi 0, %s409
      %s424 = sphi 0, %s410
      %s428 = sphi 0, %s428
      %s430 = sphi 0, %s428
      %s431 = sphi 0, %s430
      %s445 = sphi 0, %s431
      %s451 = sphi 0, %s453
      %s454 = sphi 0, %s451
      %s455 = sphi 0, %s454
      %s471 = sphi 0, %s455
    $region4: #{tpu_custom_call.1} parent=1 // loop_header_branch
      %44 = sbr.rel (%p42) target = $region8
    $region5: #{tpu_custom_call.1} parent=1 // loop_body
      %s46 = ssub.s32 %s41, 1
      %s47 = ssub.s32 %s41, 2
      %s54 = sadd.s32 1, %s49
      %p55 = scmp.ge.s32.totalorder %s54, 2
      %s56 = scalar_select %p55, 0, %s54
      %s57 = sadd.s32 1, %s48
      %s58 = scalar_select %p55, %s57, %s48
      %p59 = scmp.ge.s32.totalorder %s58, 2
      %s60 = scalar_select %p59, 0, %s58
      %s61 = ssub.s32 %s48, %s60
      %p62 = scmp.eq.s32.totalorder %s61, 0
      %s64 = sadd.s32 %s63, 1
      %s65 = scalar_select %p62, %s63, %s64
      %p68 = pneg %p62
      %p69 = scmp.eq.s32.totalorder %s41, 3
      %p70 = por %p68, %p69
      %p71 = scmp.ne.s32.totalorder %s63, %s66
      %p72 = scmp.eq.s32.totalorder %s41, 0
      %p73 = por %p71, %p72
      %p74 = scmp.ne.s32.totalorder %s63, %s66
      %p75 = scmp.eq.s32.totalorder %s46, 3
      %p76 = por %p74, %p75
      %p77 = scmp.ne.s32.totalorder %s66, %s67
      %p78 = scmp.eq.s32.totalorder %s46, 0
      %p79 = por %p77, %p78
      %p80 = scmp.ne.s32.totalorder %s66, %s67
      %p81 = scmp.eq.s32.totalorder %s47, 3
      %p82 = por %p80, %p81
      %p84 = scmp.ne.s32.totalorder %s67, %s83
      %p85 = scmp.eq.s32.totalorder %s47, 0
      %p86 = por %p84, %p85
      %s87 = ssub.s32 %s48, %s60
      %p88 = scmp.eq.s32.totalorder %s87, 0
      %s90 = sadd.s32 %s89, 1
      %s91 = scalar_select %p88, %s89, %s90
      %p94 = pneg %p88
      %p95 = scmp.eq.s32.totalorder %s41, 3
      %p96 = por %p94, %p95
      %p97 = scmp.ne.s32.totalorder %s89, %s92
      %p98 = scmp.eq.s32.totalorder %s41, 0
      %p99 = por %p97, %p98
      %p100 = scmp.ne.s32.totalorder %s89, %s92
      %p101 = scmp.eq.s32.totalorder %s46, 3
      %p102 = por %p100, %p101
      %p103 = scmp.ne.s32.totalorder %s92, %s93
      %p104 = scmp.eq.s32.totalorder %s46, 0
      %p105 = por %p103, %p104
      %p106 = scmp.ne.s32.totalorder %s92, %s93
      %p107 = scmp.eq.s32.totalorder %s47, 3
      %p108 = por %p106, %p107
      %p110 = scmp.ne.s32.totalorder %s93, %s109
      %p111 = scmp.eq.s32.totalorder %s47, 0
      %p112 = por %p110, %p111
      %s114 = sadd.s32 %s113, 1
      %p117 = scmp.eq.s32.totalorder %s41, 3
      %p118 = scmp.ne.s32.totalorder %s113, %s115
      %p119 = scmp.eq.s32.totalorder %s41, 0
      %p120 = por %p118, %p119
      %p121 = scmp.ne.s32.totalorder %s113, %s115
      %p122 = scmp.eq.s32.totalorder %s46, 3
      %p123 = por %p121, %p122
      %p124 = scmp.ne.s32.totalorder %s115, %s116
      %p125 = scmp.eq.s32.totalorder %s46, 0
      %p126 = por %p124, %p125
      %p127 = scmp.ne.s32.totalorder %s115, %s116
      %p128 = scmp.eq.s32.totalorder %s47, 3
      %p129 = por %p127, %p128
      %p131 = scmp.ne.s32.totalorder %s116, %s130
      %p132 = scmp.eq.s32.totalorder %s47, 0
      %p133 = por %p131, %p132
      %s135 = sadd.s32 %s134, 1
      %p138 = scmp.eq.s32.totalorder %s41, 3
      %p139 = scmp.ne.s32.totalorder %s134, %s136
      %p140 = scmp.eq.s32.totalorder %s41, 0
      %p141 = por %p139, %p140
      %p142 = scmp.ne.s32.totalorder %s134, %s136
      %p143 = scmp.eq.s32.totalorder %s46, 3
      %p144 = por %p142, %p143
      %p145 = scmp.ne.s32.totalorder %s136, %s137
      %p146 = scmp.eq.s32.totalorder %s46, 0
      %p147 = por %p145, %p146
      %p148 = scmp.ne.s32.totalorder %s136, %s137
      %p149 = scmp.eq.s32.totalorder %s47, 3
      %p150 = por %p148, %p149
      %p152 = scmp.ne.s32.totalorder %s137, %s151
      %p153 = scmp.eq.s32.totalorder %s47, 0
      %p154 = por %p152, %p153
      %s156 = sadd.s32 %s155, 1
      %p159 = scmp.eq.s32.totalorder %s41, 3
      %p160 = scmp.ne.s32.totalorder %s155, %s157
      %p161 = scmp.eq.s32.totalorder %s41, 0
      %p162 = por %p160, %p161
      %p163 = scmp.ne.s32.totalorder %s155, %s157
      %p164 = scmp.eq.s32.totalorder %s46, 3
      %p165 = por %p163, %p164
      %p166 = scmp.ne.s32.totalorder %s157, %s158
      %p167 = scmp.eq.s32.totalorder %s46, 0
      %p168 = por %p166, %p167
      %p169 = scmp.ne.s32.totalorder %s157, %s158
      %p170 = scmp.eq.s32.totalorder %s47, 3
      %p171 = por %p169, %p170
      %p173 = scmp.ne.s32.totalorder %s158, %s172
      %p174 = scmp.eq.s32.totalorder %s47, 0
      %p175 = por %p173, %p174
      %s177 = sadd.s32 %s176, 1
      %p180 = scmp.eq.s32.totalorder %s41, 3
      %p181 = scmp.ne.s32.totalorder %s176, %s178
      %p182 = scmp.eq.s32.totalorder %s41, 0
      %p183 = por %p181, %p182
      %p184 = scmp.ne.s32.totalorder %s176, %s178
      %p185 = scmp.eq.s32.totalorder %s46, 3
      %p186 = por %p184, %p185
      %p187 = scmp.ne.s32.totalorder %s178, %s179
      %p188 = scmp.eq.s32.totalorder %s46, 0
      %p189 = por %p187, %p188
      %p190 = scmp.ne.s32.totalorder %s178, %s179
      %p191 = scmp.eq.s32.totalorder %s47, 3
      %p192 = por %p190, %p191
      %p194 = scmp.ne.s32.totalorder %s179, %s193
      %p195 = scmp.eq.s32.totalorder %s47, 0
      %p196 = por %p194, %p195
      %s198 = sadd.s32 %s197, 1
      %p201 = scmp.eq.s32.totalorder %s41, 3
      %p202 = scmp.ne.s32.totalorder %s197, %s199
      %p203 = scmp.eq.s32.totalorder %s41, 0
      %p204 = por %p202, %p203
      %p205 = scmp.ne.s32.totalorder %s197, %s199
      %p206 = scmp.eq.s32.totalorder %s46, 3
      %p207 = por %p205, %p206
      %p208 = scmp.ne.s32.totalorder %s199, %s200
      %p209 = scmp.eq.s32.totalorder %s46, 0
      %p210 = por %p208, %p209
      %p211 = scmp.ne.s32.totalorder %s199, %s200
      %p212 = scmp.eq.s32.totalorder %s47, 3
      %p213 = por %p211, %p212
      %p215 = scmp.ne.s32.totalorder %s200, %s214
      %p216 = scmp.eq.s32.totalorder %s47, 0
      %p217 = por %p215, %p216
      %s219 = sadd.s32 %s218, 1
      %p222 = scmp.eq.s32.totalorder %s41, 3
      %p223 = scmp.ne.s32.totalorder %s218, %s220
      %p224 = scmp.eq.s32.totalorder %s41, 0
      %p225 = por %p223, %p224
      %p226 = scmp.ne.s32.totalorder %s218, %s220
      %p227 = scmp.eq.s32.totalorder %s46, 3
      %p228 = por %p226, %p227
      %p229 = scmp.ne.s32.totalorder %s220, %s221
      %p230 = scmp.eq.s32.totalorder %s46, 0
      %p231 = por %p229, %p230
      %p232 = scmp.ne.s32.totalorder %s220, %s221
      %p233 = scmp.eq.s32.totalorder %s47, 3
      %p234 = por %p232, %p233
      %p236 = scmp.ne.s32.totalorder %s221, %s235
      %p237 = scmp.eq.s32.totalorder %s47, 0
      %p238 = por %p236, %p237
      %s240 = sadd.s32 %s239, 1
      %p243 = scmp.eq.s32.totalorder %s41, 3
      %p244 = scmp.ne.s32.totalorder %s239, %s241
      %p245 = scmp.eq.s32.totalorder %s41, 0
      %p246 = por %p244, %p245
      %p247 = scmp.ne.s32.totalorder %s239, %s241
      %p248 = scmp.eq.s32.totalorder %s46, 3
      %p249 = por %p247, %p248
      %p250 = scmp.ne.s32.totalorder %s241, %s242
      %p251 = scmp.eq.s32.totalorder %s46, 0
      %p252 = por %p250, %p251
      %p253 = scmp.ne.s32.totalorder %s241, %s242
      %p254 = scmp.eq.s32.totalorder %s47, 3
      %p255 = por %p253, %p254
      %p257 = scmp.ne.s32.totalorder %s242, %s256
      %p258 = scmp.eq.s32.totalorder %s47, 0
      %p259 = por %p257, %p258
      %s261 = sadd.s32 %s260, 1
      %p264 = scmp.eq.s32.totalorder %s41, 3
      %p265 = scmp.ne.s32.totalorder %s260, %s262
      %p266 = scmp.eq.s32.totalorder %s41, 0
      %p267 = por %p265, %p266
      %p268 = scmp.ne.s32.totalorder %s260, %s262
      %p269 = scmp.eq.s32.totalorder %s46, 3
      %p270 = por %p268, %p269
      %p271 = scmp.ne.s32.totalorder %s262, %s263
      %p272 = scmp.eq.s32.totalorder %s46, 0
      %p273 = por %p271, %p272
      %p274 = scmp.ne.s32.totalorder %s262, %s263
      %p275 = scmp.eq.s32.totalorder %s47, 3
      %p276 = por %p274, %p275
      %p278 = scmp.ne.s32.totalorder %s263, %s277
      %p279 = scmp.eq.s32.totalorder %s47, 0
      %p280 = por %p278, %p279
      %s282 = sadd.s32 %s281, 1
      %p285 = scmp.eq.s32.totalorder %s41, 3
      %p286 = scmp.ne.s32.totalorder %s281, %s283
      %p287 = scmp.eq.s32.totalorder %s41, 0
      %p288 = por %p286, %p287
      %p289 = scmp.ne.s32.totalorder %s281, %s283
      %p290 = scmp.eq.s32.totalorder %s46, 3
      %p291 = por %p289, %p290
      %p292 = scmp.ne.s32.totalorder %s283, %s284
      %p293 = scmp.eq.s32.totalorder %s46, 0
      %p294 = por %p292, %p293
      %p295 = scmp.ne.s32.totalorder %s283, %s284
      %p296 = scmp.eq.s32.totalorder %s47, 3
      %p297 = por %p295, %p296
      %p299 = scmp.ne.s32.totalorder %s284, %s298
      %p300 = scmp.eq.s32.totalorder %s47, 0
      %p301 = por %p299, %p300
      %s303 = sadd.s32 %s302, 1
      %p306 = scmp.eq.s32.totalorder %s41, 3
      %p307 = scmp.ne.s32.totalorder %s302, %s304
      %p308 = scmp.eq.s32.totalorder %s41, 0
      %p309 = por %p307, %p308
      %p310 = scmp.ne.s32.totalorder %s302, %s304
      %p311 = scmp.eq.s32.totalorder %s46, 3
      %p312 = por %p310, %p311
      %p313 = scmp.ne.s32.totalorder %s304, %s305
      %p314 = scmp.eq.s32.totalorder %s46, 0
      %p315 = por %p313, %p314
      %p316 = scmp.ne.s32.totalorder %s304, %s305
      %p317 = scmp.eq.s32.totalorder %s47, 3
      %p318 = por %p316, %p317
      %p320 = scmp.ne.s32.totalorder %s305, %s319
      %p321 = scmp.eq.s32.totalorder %s47, 0
      %p322 = por %p320, %p321
      %s324 = sadd.s32 %s323, 1
      %p327 = scmp.eq.s32.totalorder %s41, 3
      %p328 = scmp.ne.s32.totalorder %s323, %s325
      %p329 = scmp.eq.s32.totalorder %s41, 0
      %p330 = por %p328, %p329
      %p331 = scmp.ne.s32.totalorder %s323, %s325
      %p332 = scmp.eq.s32.totalorder %s46, 3
      %p333 = por %p331, %p332
      %p334 = scmp.ne.s32.totalorder %s325, %s326
      %p335 = scmp.eq.s32.totalorder %s46, 0
      %p336 = por %p334, %p335
      %p337 = scmp.ne.s32.totalorder %s325, %s326
      %p338 = scmp.eq.s32.totalorder %s47, 3
      %p339 = por %p337, %p338
      %p341 = scmp.ne.s32.totalorder %s326, %s340
      %p342 = scmp.eq.s32.totalorder %s47, 0
      %p343 = por %p341, %p342
      %s345 = sadd.s32 %s344, 1
      %p348 = scmp.eq.s32.totalorder %s41, 3
      %p349 = scmp.ne.s32.totalorder %s344, %s346
      %p350 = scmp.eq.s32.totalorder %s41, 0
      %p351 = por %p349, %p350
      %p352 = scmp.ne.s32.totalorder %s344, %s346
      %p353 = scmp.eq.s32.totalorder %s46, 3
      %p354 = por %p352, %p353
      %p355 = scmp.ne.s32.totalorder %s346, %s347
      %p356 = scmp.eq.s32.totalorder %s46, 0
      %p357 = por %p355, %p356
      %p358 = scmp.ne.s32.totalorder %s346, %s347
      %p359 = scmp.eq.s32.totalorder %s47, 3
      %p360 = por %p358, %p359
      %p362 = scmp.ne.s32.totalorder %s347, %s361
      %p363 = scmp.eq.s32.totalorder %s47, 0
      %p364 = por %p362, %p363
      %s366 = sadd.s32 %s365, 1
      %p369 = scmp.eq.s32.totalorder %s41, 3
      %p370 = scmp.ne.s32.totalorder %s365, %s367
      %p371 = scmp.eq.s32.totalorder %s41, 0
      %p372 = por %p370, %p371
      %p373 = scmp.ne.s32.totalorder %s365, %s367
      %p374 = scmp.eq.s32.totalorder %s46, 3
      %p375 = por %p373, %p374
      %p376 = scmp.ne.s32.totalorder %s367, %s368
      %p377 = scmp.eq.s32.totalorder %s46, 0
      %p378 = por %p376, %p377
      %p379 = scmp.ne.s32.totalorder %s367, %s368
      %p380 = scmp.eq.s32.totalorder %s47, 3
      %p381 = por %p379, %p380
      %p383 = scmp.ne.s32.totalorder %s368, %s382
      %p384 = scmp.eq.s32.totalorder %s47, 0
      %p385 = por %p383, %p384
      %s387 = sadd.s32 %s386, 1
      %p390 = scmp.eq.s32.totalorder %s41, 3
      %p391 = scmp.ne.s32.totalorder %s386, %s388
      %p392 = scmp.eq.s32.totalorder %s41, 0
      %p393 = por %p391, %p392
      %p394 = scmp.ne.s32.totalorder %s386, %s388
      %p395 = scmp.eq.s32.totalorder %s46, 3
      %p396 = por %p394, %p395
      %p397 = scmp.ne.s32.totalorder %s388, %s389
      %p398 = scmp.eq.s32.totalorder %s46, 0
      %p399 = por %p397, %p398
      %p400 = scmp.ne.s32.totalorder %s388, %s389
      %p401 = scmp.eq.s32.totalorder %s47, 3
      %p402 = por %p400, %p401
      %p404 = scmp.ne.s32.totalorder %s389, %s403
      %p405 = scmp.eq.s32.totalorder %s47, 0
      %p406 = por %p404, %p405
      %s408 = sadd.s32 %s407, 1
      %p411 = scmp.eq.s32.totalorder %s41, 3
      %p412 = scmp.ne.s32.totalorder %s407, %s409
      %p413 = scmp.eq.s32.totalorder %s41, 0
      %p414 = por %p412, %p413
      %p415 = scmp.ne.s32.totalorder %s407, %s409
      %p416 = scmp.eq.s32.totalorder %s46, 3
      %p417 = por %p415, %p416
      %p418 = scmp.ne.s32.totalorder %s409, %s410
      %p419 = scmp.eq.s32.totalorder %s46, 0
      %p420 = por %p418, %p419
      %p421 = scmp.ne.s32.totalorder %s409, %s410
      %p422 = scmp.eq.s32.totalorder %s47, 3
      %p423 = por %p421, %p422
      %p425 = scmp.ne.s32.totalorder %s410, %s424
      %p426 = scmp.eq.s32.totalorder %s47, 0
      %p427 = por %p425, %p426
      %s429 = sadd.s32 %s428, 1
      %p432 = scmp.eq.s32.totalorder %s41, 3
      %p433 = scmp.ne.s32.totalorder %s428, %s430
      %p434 = scmp.eq.s32.totalorder %s41, 0
      %p435 = por %p433, %p434
      %p436 = scmp.ne.s32.totalorder %s428, %s430
      %p437 = scmp.eq.s32.totalorder %s46, 3
      %p438 = por %p436, %p437
      %p439 = scmp.ne.s32.totalorder %s430, %s431
      %p440 = scmp.eq.s32.totalorder %s46, 0
      %p441 = por %p439, %p440
      %p442 = scmp.ne.s32.totalorder %s430, %s431
      %p443 = scmp.eq.s32.totalorder %s47, 3
      %p444 = por %p442, %p443
      %p446 = scmp.ne.s32.totalorder %s431, %s445
      %p447 = scmp.eq.s32.totalorder %s47, 0
      %p448 = por %p446, %p447
      %s449 = ssub.s32 %s48, %s60
      %p450 = scmp.eq.s32.totalorder %s449, 0
      %s452 = sadd.s32 %s451, 1
      %s453 = scalar_select %p450, %s451, %s452
      %p456 = pneg %p450
      %p457 = scmp.eq.s32.totalorder %s41, 3
      %p458 = por %p456, %p457
      %p459 = scmp.ne.s32.totalorder %s451, %s454
      %p460 = scmp.eq.s32.totalorder %s41, 0
      %p461 = por %p459, %p460
      %p462 = scmp.ne.s32.totalorder %s451, %s454
      %p463 = scmp.eq.s32.totalorder %s46, 3
      %p464 = por %p462, %p463
      %p465 = scmp.ne.s32.totalorder %s454, %s455
      %p466 = scmp.eq.s32.totalorder %s46, 0
      %p467 = por %p465, %p466
      %p468 = scmp.ne.s32.totalorder %s454, %s455
      %p469 = scmp.eq.s32.totalorder %s47, 3
      %p470 = por %p468, %p469
      %p472 = scmp.ne.s32.totalorder %s455, %s471
      %p473 = scmp.eq.s32.totalorder %s47, 0
      %p474 = por %p472, %p473
      %p475 = scmp.le.s32.totalorder 1, %s41
      %p476 = scmp.lt.s32.totalorder %s41, 5
      %p477 = pnand %p475, %p476
      %p478 = pneg %p477
      // Predicated region
      $region9: #{tpu_custom_call.1} parent=5 // pred_check
        _
      $region10: #{tpu_custom_call.1} parent=5 // pred_check_branch
        %480 = sbr.rel (%p477) target = $region12
      $region11: #{tpu_custom_call.1} parent=5 // pred_region
        %s481 = ssub.s32 %s41, 1
        // Predicated region
        $region13: #{tpu_custom_call.1} parent=11 // pred_check
          %p482 = pneg %p126
        $region14: #{tpu_custom_call.1} parent=11 // pred_check_branch
          %484 = sbr.rel (%p482) target = $region16
        $region15: #{tpu_custom_call.1} parent=11 // pred_region
          %s486 = ssub.s32 128, 128
          %487 = vsyncadd [#allocation7], %s486
          %s488 = sshll.u32 [#allocation8], 4
          %s489 = int_to_ptr.vmem [resolvable:$true] %s488
          %494 = dma.hbm_to_vmem [thread:$0]  %s2, 128, %s489, [#allocation7], 64, 64, 4
        $region16: #{tpu_custom_call.1} parent=11 // pred_fallthru
          _
        // Predicated region
        $region17: #{tpu_custom_call.1} parent=11 // pred_check
          %p495 = pneg %p147
        $region18: #{tpu_custom_call.1} parent=11 // pred_check_branch
          %497 = sbr.rel (%p495) target = $region20
        $region19: #{tpu_custom_call.1} parent=11 // pred_region
          %s499 = ssub.s32 16, 16
          %500 = vsyncadd [#allocation10], %s499
          %s502 = sshll.u32 [#allocation9], 4
          %s503 = int_to_ptr.vmem [resolvable:$true] %s502
          %505 = dma.hbm_to_vmem [thread:$0]  %s3, 16, %s503, [#allocation10]
        $region20: #{tpu_custom_call.1} parent=11 // pred_fallthru
          _
        // Predicated region
        $region21: #{tpu_custom_call.1} parent=11 // pred_check
          %p506 = pneg %p168
        $region22: #{tpu_custom_call.1} parent=11 // pred_check_branch
          %508 = sbr.rel (%p506) target = $region24
        $region23: #{tpu_custom_call.1} parent=11 // pred_region
          %s510 = ssub.s32 16, 16
          %511 = vsyncadd [#allocation10], %s510
          %s513 = sshll.u32 [#allocation11], 4
          %s514 = int_to_ptr.vmem [resolvable:$true] %s513
          %516 = dma.hbm_to_vmem [thread:$0]  %s4, 16, %s514, [#allocation10]
        $region24: #{tpu_custom_call.1} parent=11 // pred_fallthru
          _
        // Predicated region
        $region25: #{tpu_custom_call.1} parent=11 // pred_check
          %p517 = pneg %p189
        $region26: #{tpu_custom_call.1} parent=11 // pred_check_branch
          %519 = sbr.rel (%p517) target = $region28
        $region27: #{tpu_custom_call.1} parent=11 // pred_region
          %s521 = ssub.s32 16, 16
          %522 = vsyncadd [#allocation13], %s521
          %s524 = sshll.u32 [#allocation12], 4
          %s525 = int_to_ptr.vmem [resolvable:$true] %s524
          %527 = dma.hbm_to_vmem [thread:$0]  %s5, 16, %s525, [#allocation13]
        $region28: #{tpu_custom_call.1} parent=11 // pred_fallthru
          _
        // Predicated region
        $region29: #{tpu_custom_call.1} parent=11 // pred_check
          %p528 = pneg %p210
        $region30: #{tpu_custom_call.1} parent=11 // pred_check_branch
          %530 = sbr.rel (%p528) target = $region32
        $region31: #{tpu_custom_call.1} parent=11 // pred_region
          %s532 = ssub.s32 256, 256
          %533 = vsyncadd [#allocation13], %s532
          %s534 = sshll.u32 [#allocation14], 4
          %s535 = int_to_ptr.vmem [resolvable:$true] %s534
          %540 = dma.hbm_to_vmem [thread:$0]  %s6, 256, %s535, [#allocation13], 64, 64, 4
        $region32: #{tpu_custom_call.1} parent=11 // pred_fallthru
          _
        // Predicated region
        $region33: #{tpu_custom_call.1} parent=11 // pred_check
          %p541 = pneg %p231
        $region34: #{tpu_custom_call.1} parent=11 // pred_check_branch
          %543 = sbr.rel (%p541) target = $region36
        $region35: #{tpu_custom_call.1} parent=11 // pred_region
          %s545 = ssub.s32 16, 16
          %546 = vsyncadd [#allocation16], %s545
          %s548 = sshll.u32 [#allocation15], 4
          %s549 = int_to_ptr.vmem [resolvable:$true] %s548
          %551 = dma.hbm_to_vmem [thread:$0]  %s7, 16, %s549, [#allocation16]
        $region36: #{tpu_custom_call.1} parent=11 // pred_fallthru
          _
        // Predicated region
        $region37: #{tpu_custom_call.1} parent=11 // pred_check
          %p552 = pneg %p252
        $region38: #{tpu_custom_call.1} parent=11 // pred_check_branch
          %554 = sbr.rel (%p552) target = $region40
        $region39: #{tpu_custom_call.1} parent=11 // pred_region
          %s556 = ssub.s32 256, 256
          %557 = vsyncadd [#allocation16], %s556
          %s558 = sshll.u32 [#allocation17], 4
          %s559 = int_to_ptr.vmem [resolvable:$true] %s558
          %564 = dma.hbm_to_vmem [thread:$0]  %s8, 256, %s559, [#allocation16], 64, 64, 4
        $region40: #{tpu_custom_call.1} parent=11 // pred_fallthru
          _
        // Predicated region
        $region41: #{tpu_custom_call.1} parent=11 // pred_check
          %p565 = pneg %p273
        $region42: #{tpu_custom_call.1} parent=11 // pred_check_branch
          %567 = sbr.rel (%p565) target = $region44
        $region43: #{tpu_custom_call.1} parent=11 // pred_region
          %s569 = ssub.s32 16, 16
          %570 = vsyncadd [#allocation19], %s569
          %s572 = sshll.u32 [#allocation18], 4
          %s573 = int_to_ptr.vmem [resolvable:$true] %s572
          %575 = dma.hbm_to_vmem [thread:$0]  %s9, 16, %s573, [#allocation19]
        $region44: #{tpu_custom_call.1} parent=11 // pred_fallthru
          _
        // Predicated region
        $region45: #{tpu_custom_call.1} parent=11 // pred_check
          %p576 = pneg %p294
        $region46: #{tpu_custom_call.1} parent=11 // pred_check_branch
          %578 = sbr.rel (%p576) target = $region48
        $region47: #{tpu_custom_call.1} parent=11 // pred_region
          %s580 = ssub.s32 16, 16
          %581 = vsyncadd [#allocation19], %s580
          %s583 = sshll.u32 [#allocation20], 4
          %s584 = int_to_ptr.vmem [resolvable:$true] %s583
          %586 = dma.hbm_to_vmem [thread:$0]  %s10, 16, %s584, [#allocation19]
        $region48: #{tpu_custom_call.1} parent=11 // pred_fallthru
          _
        // Predicated region
        $region49: #{tpu_custom_call.1} parent=11 // pred_check
          %p587 = pneg %p315
        $region50: #{tpu_custom_call.1} parent=11 // pred_check_branch
          %589 = sbr.rel (%p587) target = $region52
        $region51: #{tpu_custom_call.1} parent=11 // pred_region
          %s591 = ssub.s32 16, 16
          %592 = vsyncadd [#allocation22], %s591
          %s594 = sshll.u32 [#allocation21], 4
          %s595 = int_to_ptr.vmem [resolvable:$true] %s594
          %597 = dma.hbm_to_vmem [thread:$0]  %s11, 16, %s595, [#allocation22]
        $region52: #{tpu_custom_call.1} parent=11 // pred_fallthru
          _
        // Predicated region
        $region53: #{tpu_custom_call.1} parent=11 // pred_check
          %p598 = pneg %p336
        $region54: #{tpu_custom_call.1} parent=11 // pred_check_branch
          %600 = sbr.rel (%p598) target = $region56
        $region55: #{tpu_custom_call.1} parent=11 // pred_region
          %s602 = ssub.s32 256, 256
          %603 = vsyncadd [#allocation22], %s602
          %s604 = sshll.u32 [#allocation23], 4
          %s605 = int_to_ptr.vmem [resolvable:$true] %s604
          %610 = dma.hbm_to_vmem [thread:$0]  %s12, 256, %s605, [#allocation22], 64, 64, 4
        $region56: #{tpu_custom_call.1} parent=11 // pred_fallthru
          _
        // Predicated region
        $region57: #{tpu_custom_call.1} parent=11 // pred_check
          %p611 = pneg %p357
        $region58: #{tpu_custom_call.1} parent=11 // pred_check_branch
          %613 = sbr.rel (%p611) target = $region60
        $region59: #{tpu_custom_call.1} parent=11 // pred_region
          %s615 = ssub.s32 16, 16
          %616 = vsyncadd [#allocation25], %s615
          %s618 = sshll.u32 [#allocation24], 4
          %s619 = int_to_ptr.vmem [resolvable:$true] %s618
          %621 = dma.hbm_to_vmem [thread:$0]  %s13, 16, %s619, [#allocation25]
        $region60: #{tpu_custom_call.1} parent=11 // pred_fallthru
          _
        // Predicated region
        $region61: #{tpu_custom_call.1} parent=11 // pred_check
          %p622 = pneg %p378
        $region62: #{tpu_custom_call.1} parent=11 // pred_check_branch
          %624 = sbr.rel (%p622) target = $region64
        $region63: #{tpu_custom_call.1} parent=11 // pred_region
          %s626 = ssub.s32 512, 512
          %627 = vsyncadd [#allocation25], %s626
          %s628 = sshll.u32 [#allocation26], 4
          %s629 = int_to_ptr.vmem [resolvable:$true] %s628
          %634 = dma.hbm_to_vmem [thread:$0]  %s14, 512, %s629, [#allocation25], 64, 64, 4
        $region64: #{tpu_custom_call.1} parent=11 // pred_fallthru
          _
        // Predicated region
        $region65: #{tpu_custom_call.1} parent=11 // pred_check
          %p635 = pneg %p399
        $region66: #{tpu_custom_call.1} parent=11 // pred_check_branch
          %637 = sbr.rel (%p635) target = $region68
        $region67: #{tpu_custom_call.1} parent=11 // pred_region
          %s639 = ssub.s32 16, 16
          %640 = vsyncadd [#allocation28], %s639
          %s642 = sshll.u32 [#allocation27], 4
          %s643 = int_to_ptr.vmem [resolvable:$true] %s642
          %645 = dma.hbm_to_vmem [thread:$0]  %s15, 16, %s643, [#allocation28]
        $region68: #{tpu_custom_call.1} parent=11 // pred_fallthru
          _
        // Predicated region
        $region69: #{tpu_custom_call.1} parent=11 // pred_check
          %p646 = pneg %p420
        $region70: #{tpu_custom_call.1} parent=11 // pred_check_branch
          %648 = sbr.rel (%p646) target = $region72
        $region71: #{tpu_custom_call.1} parent=11 // pred_region
          %s650 = ssub.s32 16, 16
          %651 = vsyncadd [#allocation28], %s650
          %s653 = sshll.u32 [#allocation29], 4
          %s654 = int_to_ptr.vmem [resolvable:$true] %s653
          %656 = dma.hbm_to_vmem [thread:$0]  %s16, 16, %s654, [#allocation28]
        $region72: #{tpu_custom_call.1} parent=11 // pred_fallthru
          _
        // Predicated region
        $region73: #{tpu_custom_call.1} parent=11 // pred_check
          %p657 = pneg %p441
        $region74: #{tpu_custom_call.1} parent=11 // pred_check_branch
          %659 = sbr.rel (%p657) target = $region76
        $region75: #{tpu_custom_call.1} parent=11 // pred_region
          %s661 = ssub.s32 16, 16
          %662 = vsyncadd [#allocation31], %s661
          %s664 = sshll.u32 [#allocation30], 4
          %s665 = int_to_ptr.vmem [resolvable:$true] %s664
          %667 = dma.hbm_to_vmem [thread:$0]  %s17, 16, %s665, [#allocation31]
        $region76: #{tpu_custom_call.1} parent=11 // pred_fallthru
          _
      $region12: #{tpu_custom_call.1} parent=5 // pred_fallthru
        _
      %p668 = scmp.lt.s32.totalorder %s41, 4
      // Predicated region
      $region77: #{tpu_custom_call.1} parent=5 // pred_check
        %p669 = pneg %p668
      $region78: #{tpu_custom_call.1} parent=5 // pred_check_branch
        %671 = sbr.rel (%p669) target = $region80
      $region79: #{tpu_custom_call.1} parent=5 // pred_region
        // Predicated region
        $region81: #{tpu_custom_call.1} parent=79 // pred_check
          %p672 = pneg %p73
        $region82: #{tpu_custom_call.1} parent=79 // pred_check_branch
          %674 = sbr.rel (%p672) target = $region84
        $region83: #{tpu_custom_call.1} parent=79 // pred_region
          %s675 = sand.u32 %s63, 1
          %s676 = scalar_lea.sflag [#allocation4], %s675
          %s677 = sand.u32 %s63, 1
          %s678 = smul.addr %s677, 8
          %s679 = scalar_lea.vmem [#allocation3], %s678
          %s681 = ssub.s32 128, 128
          %682 = vsyncadd %s676, %s681
          %s683 = smul.addr %s48, 128
          %s684 = scalar_lea.hbm %s0, %s683
          %s686 = sshll.u32 %s679, 4
          %s687 = int_to_ptr.vmem [resolvable:$true] %s686
          %689 = dma.hbm_to_vmem [thread:$0]  %s684, 128, %s687, %s676
        $region84: #{tpu_custom_call.1} parent=79 // pred_fallthru
          _
        // Predicated region
        $region85: #{tpu_custom_call.1} parent=79 // pred_check
          %p690 = pneg %p99
        $region86: #{tpu_custom_call.1} parent=79 // pred_check_branch
          %692 = sbr.rel (%p690) target = $region88
        $region87: #{tpu_custom_call.1} parent=79 // pred_region
          %s693 = sand.u32 %s41, 1
          %s694 = scalar_lea.sflag [#allocation7], %s693
          %s695 = sand.u32 %s89, 1
          %s696 = scalar_lea.vmem [#allocation6], %s695
          %s698 = ssub.s32 16, 16
          %699 = vsyncadd %s694, %s698
          %s700 = smul.addr %s48, 16
          %s701 = scalar_lea.hbm %s1, %s700
          %s703 = sshll.u32 %s696, 4
          %s704 = int_to_ptr.vmem [resolvable:$true] %s703
          %706 = dma.hbm_to_vmem [thread:$0]  %s701, 16, %s704, %s694
        $region88: #{tpu_custom_call.1} parent=79 // pred_fallthru
          _
      $region80: #{tpu_custom_call.1} parent=5 // pred_fallthru
        _
      %p707 = scmp.le.s32.totalorder 1, %s41
      %p708 = scmp.lt.s32.totalorder %s41, 5
      %p709 = pnand %p707, %p708
      %p710 = pneg %p709
      // Predicated region
      $region89: #{tpu_custom_call.1} parent=5 // pred_check
        _
      $region90: #{tpu_custom_call.1} parent=5 // pred_check_branch
        %712 = sbr.rel (%p709) target = $region92
      $region91: #{tpu_custom_call.1} parent=5 // pred_region
        %s713 = ssub.s32 %s41, 1
        %s714 = sand.u32 %s66, 1
        %s715 = scalar_lea.sflag [#allocation4], %s714
        %s716 = sand.u32 %s66, 1
        %s717 = smul.addr %s716, 8
        %s718 = scalar_lea.vmem [#allocation3], %s717
        // Predicated region
        $region93: #{tpu_custom_call.1} parent=91 // pred_check
          %p719 = pneg %p79
        $region94: #{tpu_custom_call.1} parent=91 // pred_check_branch
          %721 = sbr.rel (%p719) target = $region96
        $region95: #{tpu_custom_call.1} parent=91 // pred_region
          %722 = dma.done %s715, 128
        $region96: #{tpu_custom_call.1} parent=91 // pred_fallthru
          _
        %s723 = sand.u32 %s46, 1
        %s724 = scalar_lea.sflag [#allocation7], %s723
        %s725 = sand.u32 %s92, 1
        %s726 = scalar_lea.vmem [#allocation6], %s725
        // Predicated region
        $region97: #{tpu_custom_call.1} parent=91 // pred_check
          %p727 = pneg %p105
        $region98: #{tpu_custom_call.1} parent=91 // pred_check_branch
          %729 = sbr.rel (%p727) target = $region100
        $region99: #{tpu_custom_call.1} parent=91 // pred_region
          %730 = dma.done %s724, 16
        $region100: #{tpu_custom_call.1} parent=91 // pred_fallthru
          _
        // Predicated region
        $region101: #{tpu_custom_call.1} parent=91 // pred_check
          %p731 = pneg %p126
        $region102: #{tpu_custom_call.1} parent=91 // pred_check_branch
          %733 = sbr.rel (%p731) target = $region104
        $region103: #{tpu_custom_call.1} parent=91 // pred_region
          %734 = dma.done [#allocation7], 128
        $region104: #{tpu_custom_call.1} parent=91 // pred_fallthru
          _
        // Predicated region
        $region105: #{tpu_custom_call.1} parent=91 // pred_check
          %p735 = pneg %p147
        $region106: #{tpu_custom_call.1} parent=91 // pred_check_branch
          %737 = sbr.rel (%p735) target = $region108
        $region107: #{tpu_custom_call.1} parent=91 // pred_region
          %738 = dma.done [#allocation10], 16
        $region108: #{tpu_custom_call.1} parent=91 // pred_fallthru
          _
        // Predicated region
        $region109: #{tpu_custom_call.1} parent=91 // pred_check
          %p739 = pneg %p168
        $region110: #{tpu_custom_call.1} parent=91 // pred_check_branch
          %741 = sbr.rel (%p739) target = $region112
        $region111: #{tpu_custom_call.1} parent=91 // pred_region
          %742 = dma.done [#allocation10], 16
        $region112: #{tpu_custom_call.1} parent=91 // pred_fallthru
          _
        // Predicated region
        $region113: #{tpu_custom_call.1} parent=91 // pred_check
          %p743 = pneg %p189
        $region114: #{tpu_custom_call.1} parent=91 // pred_check_branch
          %745 = sbr.rel (%p743) target = $region116
        $region115: #{tpu_custom_call.1} parent=91 // pred_region
          %746 = dma.done [#allocation13], 16
        $region116: #{tpu_custom_call.1} parent=91 // pred_fallthru
          _
        // Predicated region
        $region117: #{tpu_custom_call.1} parent=91 // pred_check
          %p747 = pneg %p210
        $region118: #{tpu_custom_call.1} parent=91 // pred_check_branch
          %749 = sbr.rel (%p747) target = $region120
        $region119: #{tpu_custom_call.1} parent=91 // pred_region
          %750 = dma.done [#allocation13], 256
        $region120: #{tpu_custom_call.1} parent=91 // pred_fallthru
          _
        // Predicated region
        $region121: #{tpu_custom_call.1} parent=91 // pred_check
          %p751 = pneg %p231
        $region122: #{tpu_custom_call.1} parent=91 // pred_check_branch
          %753 = sbr.rel (%p751) target = $region124
        $region123: #{tpu_custom_call.1} parent=91 // pred_region
          %754 = dma.done [#allocation16], 16
        $region124: #{tpu_custom_call.1} parent=91 // pred_fallthru
          _
        // Predicated region
        $region125: #{tpu_custom_call.1} parent=91 // pred_check
          %p755 = pneg %p252
        $region126: #{tpu_custom_call.1} parent=91 // pred_check_branch
          %757 = sbr.rel (%p755) target = $region128
        $region127: #{tpu_custom_call.1} parent=91 // pred_region
          %758 = dma.done [#allocation16], 256
        $region128: #{tpu_custom_call.1} parent=91 // pred_fallthru
          _
        // Predicated region
        $region129: #{tpu_custom_call.1} parent=91 // pred_check
          %p759 = pneg %p273
        $region130: #{tpu_custom_call.1} parent=91 // pred_check_branch
          %761 = sbr.rel (%p759) target = $region132
        $region131: #{tpu_custom_call.1} parent=91 // pred_region
          %762 = dma.done [#allocation19], 16
        $region132: #{tpu_custom_call.1} parent=91 // pred_fallthru
          _
        // Predicated region
        $region133: #{tpu_custom_call.1} parent=91 // pred_check
          %p763 = pneg %p294
        $region134: #{tpu_custom_call.1} parent=91 // pred_check_branch
          %765 = sbr.rel (%p763) target = $region136
        $region135: #{tpu_custom_call.1} parent=91 // pred_region
          %766 = dma.done [#allocation19], 16
        $region136: #{tpu_custom_call.1} parent=91 // pred_fallthru
          _
        // Predicated region
        $region137: #{tpu_custom_call.1} parent=91 // pred_check
          %p767 = pneg %p315
        $region138: #{tpu_custom_call.1} parent=91 // pred_check_branch
          %769 = sbr.rel (%p767) target = $region140
        $region139: #{tpu_custom_call.1} parent=91 // pred_region
          %770 = dma.done [#allocation22], 16
        $region140: #{tpu_custom_call.1} parent=91 // pred_fallthru
          _
        // Predicated region
        $region141: #{tpu_custom_call.1} parent=91 // pred_check
          %p771 = pneg %p336
        $region142: #{tpu_custom_call.1} parent=91 // pred_check_branch
          %773 = sbr.rel (%p771) target = $region144
        $region143: #{tpu_custom_call.1} parent=91 // pred_region
          %774 = dma.done [#allocation22], 256
        $region144: #{tpu_custom_call.1} parent=91 // pred_fallthru
          _
        // Predicated region
        $region145: #{tpu_custom_call.1} parent=91 // pred_check
          %p775 = pneg %p357
        $region146: #{tpu_custom_call.1} parent=91 // pred_check_branch
          %777 = sbr.rel (%p775) target = $region148
        $region147: #{tpu_custom_call.1} parent=91 // pred_region
          %778 = dma.done [#allocation25], 16
        $region148: #{tpu_custom_call.1} parent=91 // pred_fallthru
          _
        // Predicated region
        $region149: #{tpu_custom_call.1} parent=91 // pred_check
          %p779 = pneg %p378
        $region150: #{tpu_custom_call.1} parent=91 // pred_check_branch
          %781 = sbr.rel (%p779) target = $region152
        $region151: #{tpu_custom_call.1} parent=91 // pred_region
          %782 = dma.done [#allocation25], 512
        $region152: #{tpu_custom_call.1} parent=91 // pred_fallthru
          _
        // Predicated region
        $region153: #{tpu_custom_call.1} parent=91 // pred_check
          %p783 = pneg %p399
        $region154: #{tpu_custom_call.1} parent=91 // pred_check_branch
          %785 = sbr.rel (%p783) target = $region156
        $region155: #{tpu_custom_call.1} parent=91 // pred_region
          %786 = dma.done [#allocation28], 16
        $region156: #{tpu_custom_call.1} parent=91 // pred_fallthru
          _
        // Predicated region
        $region157: #{tpu_custom_call.1} parent=91 // pred_check
          %p787 = pneg %p420
        $region158: #{tpu_custom_call.1} parent=91 // pred_check_branch
          %789 = sbr.rel (%p787) target = $region160
        $region159: #{tpu_custom_call.1} parent=91 // pred_region
          %790 = dma.done [#allocation28], 16
        $region160: #{tpu_custom_call.1} parent=91 // pred_fallthru
          _
        // Predicated region
        $region161: #{tpu_custom_call.1} parent=91 // pred_check
          %p791 = pneg %p441
        $region162: #{tpu_custom_call.1} parent=91 // pred_check_branch
          %793 = sbr.rel (%p791) target = $region164
        $region163: #{tpu_custom_call.1} parent=91 // pred_region
          %794 = dma.done [#allocation31], 16
        $region164: #{tpu_custom_call.1} parent=91 // pred_fallthru
          _
        %s795 = sand.u32 %s66, 1
        %s796 = scalar_lea.sflag [#allocation4], %s795
        %s797 = sand.u32 %s66, 1
        %s798 = smul.addr %s797, 8
        %s799 = scalar_lea.vmem [#allocation3], %s798
        %p800 = pneg %p79
        %p801 = pneg %p76
        %s802 = sand.u32 %s46, 1
        %s803 = scalar_lea.sflag [#allocation7], %s802
        %s804 = sand.u32 %s92, 1
        %s805 = scalar_lea.vmem [#allocation6], %s804
        %p806 = pneg %p105
        %p807 = pneg %p102
        %p808 = pneg %p126
        %p809 = pneg %p123
        %p810 = pneg %p147
        %p811 = pneg %p144
        %p812 = pneg %p168
        %p813 = pneg %p165
        %p814 = pneg %p189
        %p815 = pneg %p186
        %p816 = pneg %p210
        %p817 = pneg %p207
        %p818 = pneg %p231
        %p819 = pneg %p228
        %p820 = pneg %p252
        %p821 = pneg %p249
        %p822 = pneg %p273
        %p823 = pneg %p270
        %p824 = pneg %p294
        %p825 = pneg %p291
        %p826 = pneg %p315
        %p827 = pneg %p312
        %p828 = pneg %p336
        %p829 = pneg %p333
        %p830 = pneg %p357
        %p831 = pneg %p354
        %p832 = pneg %p378
        %p833 = pneg %p375
        %p834 = pneg %p399
        %p835 = pneg %p396
        %p836 = pneg %p420
        %p837 = pneg %p417
        %p838 = pneg %p441
        %p839 = pneg %p438
        %p840 = pneg %p467
        %p841 = pneg %p464
        %s842 = sand.u32 %s454, 1
        %s843 = scalar_lea.sflag [#allocation5], %s842
        %s844 = sand.u32 %s454, 1
        %s845 = smul.addr %s844, 8
        %s846 = scalar_lea.vmem [#allocation32], %s845
        %v848 = vld [vmem:[#allocation11] sm:$0x1]
        %v849 = vld [vmem:[#allocation12] sm:$0x1]
        %p850 = scmp.eq.s32.totalorder %s51, 0
        // Predicated region
        $region165: #{tpu_custom_call.1} parent=91 // pred_check
          %p851 = pneg %p850
        $region166: #{tpu_custom_call.1} parent=91 // pred_check_branch
          %853 = sbr.rel (%p851) target = $region168
        $region167: #{tpu_custom_call.1} parent=91 // pred_region
          %v854 = vld [vmem:[%s718] sm:$0xff]
          %v855 = vpack.c.bf16 %v854, %v854
          %v856 = vld [vmem:[#allocation8] sm:$0xf]
          %v857 = vld [vmem:[#allocation8 + $0x4] sm:$0xf]
          %v858 = vld [vmem:[#allocation9] sm:$0x1]
          %v860 = vlaneseq
          %v861 = vshrl.u32 %v860, 7
          %v862 = vsub.s32 0, %v861
          %v863 = vrot.slane %v858, %v862
          %v867 = vunpack.c.l.b16 %v856
          %v868 = vunpack.c.l.b16 %v857
          %v869 = vpack.c.b16 %v868, %v867
          %vm871 = vcmask 130048
          %v873 = vsel %vm871, %v855, 0
          %875 = vmatprep.subr.bf16.mxu0 0
          %876 = vmatpush1.bf16.msra.mxu0 %v869
          %877 = vmatprep.subr.bf16.mxu0 0
          %878 = vmatpush1.bf16.msra.mxu0 0
          %879 = vmatprep.subr.bf16.mxu0 0
          %880 = vmatpush1.bf16.msra.mxu0 0
          %881 = vmatprep.subr.bf16.mxu0 0
          %882 = vmatpush1.bf16.msra.mxu0 0
          %883 = vmatprep.subr.bf16.mxu0 0
          %884 = vmatpush1.bf16.msra.mxu0 0
          %885 = vmatprep.subr.bf16.mxu0 0
          %886 = vmatpush1.bf16.msra.mxu0 0
          %887 = vmatprep.subr.bf16.mxu0 0
          %888 = vmatpush1.bf16.msra.mxu0 0
          %889 = vmatprep.subr.bf16.mxu0 0
          %890 = vmatpush1.bf16.msra.mxu0 0
          %891 = vmatprep.subr.bf16.mxu0 0
          %892 = vmatpush1.bf16.msra.mxu0 0
          %893 = vmatprep.subr.bf16.mxu0 0
          %894 = vmatpush1.bf16.msra.mxu0 0
          %895 = vmatprep.subr.bf16.mxu0 0
          %896 = vmatpush1.bf16.msra.mxu0 0
          %897 = vmatprep.subr.bf16.mxu0 0
          %898 = vmatpush1.bf16.msra.mxu0 0
          %899 = vmatprep.subr.bf16.mxu0 0
          %900 = vmatpush1.bf16.msra.mxu0 0
          %901 = vmatprep.subr.bf16.mxu0 0
          %902 = vmatpush1.bf16.msra.mxu0 0
          %903 = vmatprep.subr.bf16.mxu0 0
          %904 = vmatpush1.bf16.msra.mxu0 0
          %905 = vmatprep.subr.bf16.mxu0 0
          %906 = vmatpush1.bf16.msra.mxu0 0
          %907 = vmatprep.mubr.bf16.mxu0 0
          %908 = vmatmul.mubr.bf16.gmra.mrb[0].mxu0 %v873
          %v909 = vpop.f32.mrb[0].mxu0
          %v910 = vadd.f32 %v863, %v909
          %v911 = vpop.f32.mrb[0].mxu0
          %v912 = vpop.f32.mrb[0].mxu0
          %v913 = vpop.f32.mrb[0].mxu0
          %914 = vdwg.mxu0
          %vm915 = vcmask 261120
          %v916 = vsel %vm915, %v910, 0.0
          %917 = vadd.xlane.f32.xlu0 %v916
          %v918 = vpop.xlane.xlu0 %917
          %v919 = vrcp.pop 32.0
          %v920 = vmul.f32 %v918, %v919
          %v921 = vsub.f32 %v910, %v920
          %v922 = vmul.f32 %v921, %v921
          %v923 = vsel %vm915, %v922, 0.0
          %924 = vadd.xlane.f32.xlu0 %v923
          %v925 = vpop.xlane.xlu0 %924
          %v926 = vmul.f32 %v925, %v919
          %v927 = vadd.f32 %v926, 1e-12
          %v928 = vrsqrt.pop %v927
          %v929 = vmul.f32 %v921, %v928
          %v931 = vlaneseq
          %v932 = vshrl.u32 %v931, 7
          %v933 = vsub.s32 0, %v932
          %v934 = vrot.slane %v848, %v933
          %v936 = vmul.f32 %v929, %v934
          %v938 = vlaneseq
          %v939 = vshrl.u32 %v938, 7
          %v940 = vsub.s32 0, %v939
          %v941 = vrot.slane %v849, %v940
          %v943 = vadd.f32 %v936, %v941
          %944 = vst.msk [vmem:[#allocation2] sm:$0xff] %vm915, %v943
        $region168: #{tpu_custom_call.1} parent=91 // pred_fallthru
          _
        %v945 = vld [vmem:[#allocation2] sm:$0xff]
        %v946 = vld [vmem:[%s726] sm:$0x1]
        %v947 = vpack.c.bf16 %v945, %v945
        %v948 = vld [vmem:[#allocation14] sm:$0xf]
        %v949 = vld [vmem:[#allocation14 + $0x4] sm:$0xf]
        %v950 = vld [vmem:[#allocation14 + $0x8] sm:$0xf]
        %v951 = vld [vmem:[#allocation14 + $0xc] sm:$0xf]
        %v952 = vld [vmem:[#allocation15] sm:$0x1]
        %v954 = vlaneseq
        %v955 = vshrl.u32 %v954, 7
        %v956 = vsub.s32 0, %v955
        %v957 = vrot.slane %v952, %v956
        %v963 = vunpack.c.l.b16 %v948
        %v964 = vunpack.c.l.b16 %v949
        %v965 = vunpack.c.l.b16 %v950
        %v966 = vunpack.c.l.b16 %v951
        %v967 = vpack.c.b16 %v964, %v963
        %v968 = vpack.c.b16 %v966, %v965
        %vm971 = vcmask 261120
        %v973 = vsel %vm971, %v947, 0
        %975 = vmatprep.subr.bf16.mxu0 0
        %976 = vmatpush1.bf16.msra.mxu0 %v967
        %977 = vmatprep.subr.bf16.mxu0 0
        %978 = vmatpush1.bf16.msra.mxu0 %v968
        %979 = vmatprep.subr.bf16.mxu0 0
        %980 = vmatpush1.bf16.msra.mxu0 0
        %981 = vmatprep.subr.bf16.mxu0 0
        %982 = vmatpush1.bf16.msra.mxu0 0
        %983 = vmatprep.subr.bf16.mxu0 0
        %984 = vmatpush1.bf16.msra.mxu0 0
        %985 = vmatprep.subr.bf16.mxu0 0
        %986 = vmatpush1.bf16.msra.mxu0 0
        %987 = vmatprep.subr.bf16.mxu0 0
        %988 = vmatpush1.bf16.msra.mxu0 0
        %989 = vmatprep.subr.bf16.mxu0 0
        %990 = vmatpush1.bf16.msra.mxu0 0
        %991 = vmatprep.subr.bf16.mxu0 0
        %992 = vmatpush1.bf16.msra.mxu0 0
        %993 = vmatprep.subr.bf16.mxu0 0
        %994 = vmatpush1.bf16.msra.mxu0 0
        %995 = vmatprep.subr.bf16.mxu0 0
        %996 = vmatpush1.bf16.msra.mxu0 0
        %997 = vmatprep.subr.bf16.mxu0 0
        %998 = vmatpush1.bf16.msra.mxu0 0
        %999 = vmatprep.subr.bf16.mxu0 0
        %1000 = vmatpush1.bf16.msra.mxu0 0
        %1001 = vmatprep.subr.bf16.mxu0 0
        %1002 = vmatpush1.bf16.msra.mxu0 0
        %1003 = vmatprep.subr.bf16.mxu0 0
        %1004 = vmatpush1.bf16.msra.mxu0 0
        %1005 = vmatprep.subr.bf16.mxu0 0
        %1006 = vmatpush1.bf16.msra.mxu0 0
        %1007 = vmatprep.mubr.bf16.mxu0 0
        %1008 = vmatmul.mubr.bf16.gmra.mrb[0].mxu0 %v973
        %v1009 = vpop.f32.mrb[0].mxu0
        %v1010 = vadd.f32 %v957, %v1009
        %v1011 = vpop.f32.mrb[0].mxu0
        %v1012 = vpop.f32.mrb[0].mxu0
        %v1013 = vpop.f32.mrb[0].mxu0
        %1014 = vdwg.mxu0
        %v1015 = vmul.f32 %v1010, 0.35355338
        %v1016 = vpack.c.bf16 %v1015, %v1015
        %v1017 = vpack.c.bf16 %v1010, %v1010
        %v1019 = vlaneseq
        %v1020 = vshrl.u32 %v1019, 7
        %v1021 = vsub.s32 0, %v1020
        %v1022 = vrot.slane %v946, %v1021
        %1025 = vrot.lane.b32.xlu0 %v1017, 96
        %v1026 = vpop.permute.xlu0 %1025
        %vm1027 = vcmask 64512
        %v1029 = vsel %vm1027, %v1016, 0
        %v1032 = vsel %vm1027, %v1026, 0
        %1034 = vmatprep.subr.bf16.mxu0 0
        %1035 = vmatpush1.bf16.xpose.msra.mxu0 %v1032
        %1036 = vmatprep.subr.bf16.mxu0 0
        %1037 = vmatpush1.bf16.xpose.msra.mxu0 0
        %1038 = vmatprep.subr.bf16.mxu0 0
        %1039 = vmatpush1.bf16.xpose.msra.mxu0 0
        %1040 = vmatprep.subr.bf16.mxu0 0
        %1041 = vmatpush1.bf16.xpose.msra.mxu0 0
        %1042 = vmatprep.subr.bf16.mxu0 0
        %1043 = vmatpush1.bf16.xpose.msra.mxu0 0
        %1044 = vmatprep.subr.bf16.mxu0 0
        %1045 = vmatpush1.bf16.xpose.msra.mxu0 0
        %1046 = vmatprep.subr.bf16.mxu0 0
        %1047 = vmatpush1.bf16.xpose.msra.mxu0 0
        %1048 = vmatprep.subr.bf16.mxu0 0
        %1049 = vmatpush1.bf16.xpose.msra.mxu0 0
        %1050 = vmatprep.subr.bf16.mxu0 0
        %1051 = vmatpush1.bf16.xpose.msra.mxu0 0
        %1052 = vmatprep.subr.bf16.mxu0 0
        %1053 = vmatpush1.bf16.xpose.msra.mxu0 0
        %1054 = vmatprep.subr.bf16.mxu0 0
        %1055 = vmatpush1.bf16.xpose.msra.mxu0 0
        %1056 = vmatprep.subr.bf16.mxu0 0
        %1057 = vmatpush1.bf16.xpose.msra.mxu0 0
        %1058 = vmatprep.subr.bf16.mxu0 0
        %1059 = vmatpush1.bf16.xpose.msra.mxu0 0
        %1060 = vmatprep.subr.bf16.mxu0 0
        %1061 = vmatpush1.bf16.xpose.msra.mxu0 0
        %1062 = vmatprep.subr.bf16.mxu0 0
        %1063 = vmatpush1.bf16.xpose.msra.mxu0 0
        %1064 = vmatprep.subr.bf16.mxu0 0
        %1065 = vmatpush1.bf16.xpose.msra.mxu0 0
        %1066 = vmatprep.mubr.bf16.mxu0 0
        %1067 = vmatmul.mubr.bf16.gmra.mrb[0].mxu0 %v1029
        %v1068 = vpop.f32.mrb[0].mxu0
        %v1069 = vadd.f32 %v1022, %v1068
        %v1070 = vpop.f32.mrb[0].mxu0
        %v1071 = vpop.f32.mrb[0].mxu0
        %v1072 = vpop.f32.mrb[0].mxu0
        %1073 = vdwg.mxu0
        %v1074 = vsel %vm1027, %v1069, -inf
        %1075 = vmax.xlane.f32.xlu0 %v1074
        %v1076 = vpop.xlane.xlu0 %1075
        %v1077 = vsub.f32 %v1069, %v1076
        %v1078 = vmul.f32 %v1077, 1.442695
        %v1079 = vpow.pop %v1078
        %v1080 = vsel %vm1027, %v1079, 0.0
        %1081 = vadd.xlane.f32.xlu0 %v1080
        %v1082 = vpop.xlane.xlu0 %1081
        %v1083 = vrcp.pop %v1082
        %v1084 = vmul.f32 %v1079, %v1083
        %v1085 = vpack.c.bf16 %v1084, %v1084
        %1086 = vrot.lane.b32.xlu0 %v1017, 64
        %v1087 = vpop.permute.xlu0 %1086
        %v1089 = vsel %vm1027, %v1085, 0
        %vm1091 = vcmask 1043456
        %v1093 = vsel %vm1091, %v1087, 0
        %1095 = vmatprep.subr.bf16.mxu0 0
        %1096 = vmatpush1.bf16.msra.mxu0 %v1093
        %1097 = vmatprep.subr.bf16.mxu0 0
        %1098 = vmatpush1.bf16.msra.mxu0 0
        %1099 = vmatprep.subr.bf16.mxu0 0
        %1100 = vmatpush1.bf16.msra.mxu0 0
        %1101 = vmatprep.subr.bf16.mxu0 0
        %1102 = vmatpush1.bf16.msra.mxu0 0
        %1103 = vmatprep.subr.bf16.mxu0 0
        %1104 = vmatpush1.bf16.msra.mxu0 0
        %1105 = vmatprep.subr.bf16.mxu0 0
        %1106 = vmatpush1.bf16.msra.mxu0 0
        %1107 = vmatprep.subr.bf16.mxu0 0
        %1108 = vmatpush1.bf16.msra.mxu0 0
        %1109 = vmatprep.subr.bf16.mxu0 0
        %1110 = vmatpush1.bf16.msra.mxu0 0
        %1111 = vmatprep.subr.bf16.mxu0 0
        %1112 = vmatpush1.bf16.msra.mxu0 0
        %1113 = vmatprep.subr.bf16.mxu0 0
        %1114 = vmatpush1.bf16.msra.mxu0 0
        %1115 = vmatprep.subr.bf16.mxu0 0
        %1116 = vmatpush1.bf16.msra.mxu0 0
        %1117 = vmatprep.subr.bf16.mxu0 0
        %1118 = vmatpush1.bf16.msra.mxu0 0
        %1119 = vmatprep.subr.bf16.mxu0 0
        %1120 = vmatpush1.bf16.msra.mxu0 0
        %1121 = vmatprep.subr.bf16.mxu0 0
        %1122 = vmatpush1.bf16.msra.mxu0 0
        %1123 = vmatprep.subr.bf16.mxu0 0
        %1124 = vmatpush1.bf16.msra.mxu0 0
        %1125 = vmatprep.subr.bf16.mxu0 0
        %1126 = vmatpush1.bf16.msra.mxu0 0
        %1127 = vmatprep.mubr.bf16.mxu0 0
        %1128 = vmatmul.mubr.bf16.gmra.mrb[0].mxu0 %v1089
        %v1129 = vpop.f32.mrb[0].mxu0
        %v1130 = vadd.f32 0.0, %v1129
        %v1131 = vpop.f32.mrb[0].mxu0
        %v1132 = vpop.f32.mrb[0].mxu0
        %v1133 = vpop.f32.mrb[0].mxu0
        %1134 = vdwg.mxu0
        %1136 = vrot.lane.b32.xlu0 %v1016, 120
        %v1137 = vpop.permute.xlu0 %1136
        %1138 = vrot.lane.b32.xlu0 %v1017, 88
        %v1139 = vpop.permute.xlu0 %1138
        %v1141 = vsel %vm1027, %v1137, 0
        %v1144 = vsel %vm1027, %v1139, 0
        %1146 = vmatprep.subr.bf16.mxu0 0
        %1147 = vmatpush1.bf16.xpose.msra.mxu0 %v1144
        %1148 = vmatprep.subr.bf16.mxu0 0
        %1149 = vmatpush1.bf16.xpose.msra.mxu0 0
        %1150 = vmatprep.subr.bf16.mxu0 0
        %1151 = vmatpush1.bf16.xpose.msra.mxu0 0
        %1152 = vmatprep.subr.bf16.mxu0 0
        %1153 = vmatpush1.bf16.xpose.msra.mxu0 0
        %1154 = vmatprep.subr.bf16.mxu0 0
        %1155 = vmatpush1.bf16.xpose.msra.mxu0 0
        %1156 = vmatprep.subr.bf16.mxu0 0
        %1157 = vmatpush1.bf16.xpose.msra.mxu0 0
        %1158 = vmatprep.subr.bf16.mxu0 0
        %1159 = vmatpush1.bf16.xpose.msra.mxu0 0
        %1160 = vmatprep.subr.bf16.mxu0 0
        %1161 = vmatpush1.bf16.xpose.msra.mxu0 0
        %1162 = vmatprep.subr.bf16.mxu0 0
        %1163 = vmatpush1.bf16.xpose.msra.mxu0 0
        %1164 = vmatprep.subr.bf16.mxu0 0
        %1165 = vmatpush1.bf16.xpose.msra.mxu0 0
        %1166 = vmatprep.subr.bf16.mxu0 0
        %1167 = vmatpush1.bf16.xpose.msra.mxu0 0
        %1168 = vmatprep.subr.bf16.mxu0 0
        %1169 = vmatpush1.bf16.xpose.msra.mxu0 0
        %1170 = vmatprep.subr.bf16.mxu0 0
        %1171 = vmatpush1.bf16.xpose.msra.mxu0 0
        %1172 = vmatprep.subr.bf16.mxu0 0
        %1173 = vmatpush1.bf16.xpose.msra.mxu0 0
        %1174 = vmatprep.subr.bf16.mxu0 0
        %1175 = vmatpush1.bf16.xpose.msra.mxu0 0
        %1176 = vmatprep.subr.bf16.mxu0 0
        %1177 = vmatpush1.bf16.xpose.msra.mxu0 0
        %1178 = vmatprep.mubr.bf16.mxu0 0
        %1179 = vmatmul.mubr.bf16.gmra.mrb[0].mxu0 %v1141
        %v1180 = vpop.f32.mrb[0].mxu0
        %v1181 = vadd.f32 %v1022, %v1180
        %v1182 = vpop.f32.mrb[0].mxu0
        %v1183 = vpop.f32.mrb[0].mxu0
        %v1184 = vpop.f32.mrb[0].mxu0
        %1185 = vdwg.mxu0
        %v1186 = vsel %vm1027, %v1181, -inf
        %1187 = vmax.xlane.f32.xlu0 %v1186
        %v1188 = vpop.xlane.xlu0 %1187
        %v1189 = vsub.f32 %v1181, %v1188
        %v1190 = vmul.f32 %v1189, 1.442695
        %v1191 = vpow.pop %v1190
        %v1192 = vsel %vm1027, %v1191, 0.0
        %1193 = vadd.xlane.f32.xlu0 %v1192
        %v1194 = vpop.xlane.xlu0 %1193
        %v1195 = vrcp.pop %v1194
        %v1196 = vmul.f32 %v1191, %v1195
        %v1197 = vpack.c.bf16 %v1196, %v1196
        %1198 = vrot.lane.b32.xlu0 %v1017, 56
        %v1199 = vpop.permute.xlu0 %1198
        %v1201 = vsel %vm1027, %v1197, 0
        %v1204 = vsel %vm1091, %v1199, 0
        %1206 = vmatprep.subr.bf16.mxu0 0
        %1207 = vmatpush1.bf16.msra.mxu0 %v1204
        %1208 = vmatprep.subr.bf16.mxu0 0
        %1209 = vmatpush1.bf16.msra.mxu0 0
        %1210 = vmatprep.subr.bf16.mxu0 0
        %1211 = vmatpush1.bf16.msra.mxu0 0
        %1212 = vmatprep.subr.bf16.mxu0 0
        %1213 = vmatpush1.bf16.msra.mxu0 0
        %1214 = vmatprep.subr.bf16.mxu0 0
        %1215 = vmatpush1.bf16.msra.mxu0 0
        %1216 = vmatprep.subr.bf16.mxu0 0
        %1217 = vmatpush1.bf16.msra.mxu0 0
        %1218 = vmatprep.subr.bf16.mxu0 0
        %1219 = vmatpush1.bf16.msra.mxu0 0
        %1220 = vmatprep.subr.bf16.mxu0 0
        %1221 = vmatpush1.bf16.msra.mxu0 0
        %1222 = vmatprep.subr.bf16.mxu0 0
        %1223 = vmatpush1.bf16.msra.mxu0 0
        %1224 = vmatprep.subr.bf16.mxu0 0
        %1225 = vmatpush1.bf16.msra.mxu0 0
        %1226 = vmatprep.subr.bf16.mxu0 0
        %1227 = vmatpush1.bf16.msra.mxu0 0
        %1228 = vmatprep.subr.bf16.mxu0 0
        %1229 = vmatpush1.bf16.msra.mxu0 0
        %1230 = vmatprep.subr.bf16.mxu0 0
        %1231 = vmatpush1.bf16.msra.mxu0 0
        %1232 = vmatprep.subr.bf16.mxu0 0
        %1233 = vmatpush1.bf16.msra.mxu0 0
        %1234 = vmatprep.subr.bf16.mxu0 0
        %1235 = vmatpush1.bf16.msra.mxu0 0
        %1236 = vmatprep.subr.bf16.mxu0 0
        %1237 = vmatpush1.bf16.msra.mxu0 0
        %1238 = vmatprep.mubr.bf16.mxu0 0
        %1239 = vmatmul.mubr.bf16.gmra.mrb[0].mxu0 %v1201
        %v1240 = vpop.f32.mrb[0].mxu0
        %v1241 = vadd.f32 0.0, %v1240
        %v1242 = vpop.f32.mrb[0].mxu0
        %v1243 = vpop.f32.mrb[0].mxu0
        %v1244 = vpop.f32.mrb[0].mxu0
        %1245 = vdwg.mxu0
        %1246 = vrot.lane.b32.xlu0 %v1016, 112
        %v1247 = vpop.permute.xlu0 %1246
        %1248 = vrot.lane.b32.xlu0 %v1017, 80
        %v1249 = vpop.permute.xlu0 %1248
        %v1251 = vsel %vm1027, %v1247, 0
        %v1254 = vsel %vm1027, %v1249, 0
        %1256 = vmatprep.subr.bf16.mxu0 0
        %1257 = vmatpush1.bf16.xpose.msra.mxu0 %v1254
        %1258 = vmatprep.subr.bf16.mxu0 0
        %1259 = vmatpush1.bf16.xpose.msra.mxu0 0
        %1260 = vmatprep.subr.bf16.mxu0 0
        %1261 = vmatpush1.bf16.xpose.msra.mxu0 0
        %1262 = vmatprep.subr.bf16.mxu0 0
        %1263 = vmatpush1.bf16.xpose.msra.mxu0 0
        %1264 = vmatprep.subr.bf16.mxu0 0
        %1265 = vmatpush1.bf16.xpose.msra.mxu0 0
        %1266 = vmatprep.subr.bf16.mxu0 0
        %1267 = vmatpush1.bf16.xpose.msra.mxu0 0
        %1268 = vmatprep.subr.bf16.mxu0 0
        %1269 = vmatpush1.bf16.xpose.msra.mxu0 0
        %1270 = vmatprep.subr.bf16.mxu0 0
        %1271 = vmatpush1.bf16.xpose.msra.mxu0 0
        %1272 = vmatprep.subr.bf16.mxu0 0
        %1273 = vmatpush1.bf16.xpose.msra.mxu0 0
        %1274 = vmatprep.subr.bf16.mxu0 0
        %1275 = vmatpush1.bf16.xpose.msra.mxu0 0
        %1276 = vmatprep.subr.bf16.mxu0 0
        %1277 = vmatpush1.bf16.xpose.msra.mxu0 0
        %1278 = vmatprep.subr.bf16.mxu0 0
        %1279 = vmatpush1.bf16.xpose.msra.mxu0 0
        %1280 = vmatprep.subr.bf16.mxu0 0
        %1281 = vmatpush1.bf16.xpose.msra.mxu0 0
        %1282 = vmatprep.subr.bf16.mxu0 0
        %1283 = vmatpush1.bf16.xpose.msra.mxu0 0
        %1284 = vmatprep.subr.bf16.mxu0 0
        %1285 = vmatpush1.bf16.xpose.msra.mxu0 0
        %1286 = vmatprep.subr.bf16.mxu0 0
        %1287 = vmatpush1.bf16.xpose.msra.mxu0 0
        %1288 = vmatprep.mubr.bf16.mxu0 0
        %1289 = vmatmul.mubr.bf16.gmra.mrb[0].mxu0 %v1251
        %v1290 = vpop.f32.mrb[0].mxu0
        %v1291 = vadd.f32 %v1022, %v1290
        %v1292 = vpop.f32.mrb[0].mxu0
        %v1293 = vpop.f32.mrb[0].mxu0
        %v1294 = vpop.f32.mrb[0].mxu0
        %1295 = vdwg.mxu0
        %v1296 = vsel %vm1027, %v1291, -inf
        %1297 = vmax.xlane.f32.xlu0 %v1296
        %v1298 = vpop.xlane.xlu0 %1297
        %v1299 = vsub.f32 %v1291, %v1298
        %v1300 = vmul.f32 %v1299, 1.442695
        %v1301 = vpow.pop %v1300
        %v1302 = vsel %vm1027, %v1301, 0.0
        %1303 = vadd.xlane.f32.xlu0 %v1302
        %v1304 = vpop.xlane.xlu0 %1303
        %v1305 = vrcp.pop %v1304
        %v1306 = vmul.f32 %v1301, %v1305
        %v1307 = vpack.c.bf16 %v1306, %v1306
        %1308 = vrot.lane.b32.xlu0 %v1017, 48
        %v1309 = vpop.permute.xlu0 %1308
        %v1311 = vsel %vm1027, %v1307, 0
        %v1314 = vsel %vm1091, %v1309, 0
        %1316 = vmatprep.subr.bf16.mxu0 0
        %1317 = vmatpush1.bf16.msra.mxu0 %v1314
        %1318 = vmatprep.subr.bf16.mxu0 0
        %1319 = vmatpush1.bf16.msra.mxu0 0
        %1320 = vmatprep.subr.bf16.mxu0 0
        %1321 = vmatpush1.bf16.msra.mxu0 0
        %1322 = vmatprep.subr.bf16.mxu0 0
        %1323 = vmatpush1.bf16.msra.mxu0 0
        %1324 = vmatprep.subr.bf16.mxu0 0
        %1325 = vmatpush1.bf16.msra.mxu0 0
        %1326 = vmatprep.subr.bf16.mxu0 0
        %1327 = vmatpush1.bf16.msra.mxu0 0
        %1328 = vmatprep.subr.bf16.mxu0 0
        %1329 = vmatpush1.bf16.msra.mxu0 0
        %1330 = vmatprep.subr.bf16.mxu0 0
        %1331 = vmatpush1.bf16.msra.mxu0 0
        %1332 = vmatprep.subr.bf16.mxu0 0
        %1333 = vmatpush1.bf16.msra.mxu0 0
        %1334 = vmatprep.subr.bf16.mxu0 0
        %1335 = vmatpush1.bf16.msra.mxu0 0
        %1336 = vmatprep.subr.bf16.mxu0 0
        %1337 = vmatpush1.bf16.msra.mxu0 0
        %1338 = vmatprep.subr.bf16.mxu0 0
        %1339 = vmatpush1.bf16.msra.mxu0 0
        %1340 = vmatprep.subr.bf16.mxu0 0
        %1341 = vmatpush1.bf16.msra.mxu0 0
        %1342 = vmatprep.subr.bf16.mxu0 0
        %1343 = vmatpush1.bf16.msra.mxu0 0
        %1344 = vmatprep.subr.bf16.mxu0 0
        %1345 = vmatpush1.bf16.msra.mxu0 0
        %1346 = vmatprep.subr.bf16.mxu0 0
        %1347 = vmatpush1.bf16.msra.mxu0 0
        %1348 = vmatprep.mubr.bf16.mxu0 0
        %1349 = vmatmul.mubr.bf16.gmra.mrb[0].mxu0 %v1311
        %v1350 = vpop.f32.mrb[0].mxu0
        %v1351 = vadd.f32 0.0, %v1350
        %v1352 = vpop.f32.mrb[0].mxu0
        %v1353 = vpop.f32.mrb[0].mxu0
        %v1354 = vpop.f32.mrb[0].mxu0
        %1355 = vdwg.mxu0
        %1356 = vrot.lane.b32.xlu0 %v1016, 104
        %v1357 = vpop.permute.xlu0 %1356
        %1358 = vrot.lane.b32.xlu0 %v1017, 72
        %v1359 = vpop.permute.xlu0 %1358
        %v1361 = vsel %vm1027, %v1357, 0
        %v1364 = vsel %vm1027, %v1359, 0
        %1366 = vmatprep.subr.bf16.mxu0 0
        %1367 = vmatpush1.bf16.xpose.msra.mxu0 %v1364
        %1368 = vmatprep.subr.bf16.mxu0 0
        %1369 = vmatpush1.bf16.xpose.msra.mxu0 0
        %1370 = vmatprep.subr.bf16.mxu0 0
        %1371 = vmatpush1.bf16.xpose.msra.mxu0 0
        %1372 = vmatprep.subr.bf16.mxu0 0
        %1373 = vmatpush1.bf16.xpose.msra.mxu0 0
        %1374 = vmatprep.subr.bf16.mxu0 0
        %1375 = vmatpush1.bf16.xpose.msra.mxu0 0
        %1376 = vmatprep.subr.bf16.mxu0 0
        %1377 = vmatpush1.bf16.xpose.msra.mxu0 0
        %1378 = vmatprep.subr.bf16.mxu0 0
        %1379 = vmatpush1.bf16.xpose.msra.mxu0 0
        %1380 = vmatprep.subr.bf16.mxu0 0
        %1381 = vmatpush1.bf16.xpose.msra.mxu0 0
        %1382 = vmatprep.subr.bf16.mxu0 0
        %1383 = vmatpush1.bf16.xpose.msra.mxu0 0
        %1384 = vmatprep.subr.bf16.mxu0 0
        %1385 = vmatpush1.bf16.xpose.msra.mxu0 0
        %1386 = vmatprep.subr.bf16.mxu0 0
        %1387 = vmatpush1.bf16.xpose.msra.mxu0 0
        %1388 = vmatprep.subr.bf16.mxu0 0
        %1389 = vmatpush1.bf16.xpose.msra.mxu0 0
        %1390 = vmatprep.subr.bf16.mxu0 0
        %1391 = vmatpush1.bf16.xpose.msra.mxu0 0
        %1392 = vmatprep.subr.bf16.mxu0 0
        %1393 = vmatpush1.bf16.xpose.msra.mxu0 0
        %1394 = vmatprep.subr.bf16.mxu0 0
        %1395 = vmatpush1.bf16.xpose.msra.mxu0 0
        %1396 = vmatprep.subr.bf16.mxu0 0
        %1397 = vmatpush1.bf16.xpose.msra.mxu0 0
        %1398 = vmatprep.mubr.bf16.mxu0 0
        %1399 = vmatmul.mubr.bf16.gmra.mrb[0].mxu0 %v1361
        %v1400 = vpop.f32.mrb[0].mxu0
        %v1401 = vadd.f32 %v1022, %v1400
        %v1402 = vpop.f32.mrb[0].mxu0
        %v1403 = vpop.f32.mrb[0].mxu0
        %v1404 = vpop.f32.mrb[0].mxu0
        %1405 = vdwg.mxu0
        %v1406 = vsel %vm1027, %v1401, -inf
        %1407 = vmax.xlane.f32.xlu0 %v1406
        %v1408 = vpop.xlane.xlu0 %1407
        %v1409 = vsub.f32 %v1401, %v1408
        %v1410 = vmul.f32 %v1409, 1.442695
        %v1411 = vpow.pop %v1410
        %v1412 = vsel %vm1027, %v1411, 0.0
        %1413 = vadd.xlane.f32.xlu0 %v1412
        %v1414 = vpop.xlane.xlu0 %1413
        %v1415 = vrcp.pop %v1414
        %v1416 = vmul.f32 %v1411, %v1415
        %v1417 = vpack.c.bf16 %v1416, %v1416
        %1418 = vrot.lane.b32.xlu0 %v1017, 40
        %v1419 = vpop.permute.xlu0 %1418
        %v1421 = vsel %vm1027, %v1417, 0
        %v1424 = vsel %vm1091, %v1419, 0
        %1426 = vmatprep.subr.bf16.mxu0 0
        %1427 = vmatpush1.bf16.msra.mxu0 %v1424
        %1428 = vmatprep.subr.bf16.mxu0 0
        %1429 = vmatpush1.bf16.msra.mxu0 0
        %1430 = vmatprep.subr.bf16.mxu0 0
        %1431 = vmatpush1.bf16.msra.mxu0 0
        %1432 = vmatprep.subr.bf16.mxu0 0
        %1433 = vmatpush1.bf16.msra.mxu0 0
        %1434 = vmatprep.subr.bf16.mxu0 0
        %1435 = vmatpush1.bf16.msra.mxu0 0
        %1436 = vmatprep.subr.bf16.mxu0 0
        %1437 = vmatpush1.bf16.msra.mxu0 0
        %1438 = vmatprep.subr.bf16.mxu0 0
        %1439 = vmatpush1.bf16.msra.mxu0 0
        %1440 = vmatprep.subr.bf16.mxu0 0
        %1441 = vmatpush1.bf16.msra.mxu0 0
        %1442 = vmatprep.subr.bf16.mxu0 0
        %1443 = vmatpush1.bf16.msra.mxu0 0
        %1444 = vmatprep.subr.bf16.mxu0 0
        %1445 = vmatpush1.bf16.msra.mxu0 0
        %1446 = vmatprep.subr.bf16.mxu0 0
        %1447 = vmatpush1.bf16.msra.mxu0 0
        %1448 = vmatprep.subr.bf16.mxu0 0
        %1449 = vmatpush1.bf16.msra.mxu0 0
        %1450 = vmatprep.subr.bf16.mxu0 0
        %1451 = vmatpush1.bf16.msra.mxu0 0
        %1452 = vmatprep.subr.bf16.mxu0 0
        %1453 = vmatpush1.bf16.msra.mxu0 0
        %1454 = vmatprep.subr.bf16.mxu0 0
        %1455 = vmatpush1.bf16.msra.mxu0 0
        %1456 = vmatprep.subr.bf16.mxu0 0
        %1457 = vmatpush1.bf16.msra.mxu0 0
        %1458 = vmatprep.mubr.bf16.mxu0 0
        %1459 = vmatmul.mubr.bf16.gmra.mrb[0].mxu0 %v1421
        %v1460 = vpop.f32.mrb[0].mxu0
        %v1461 = vadd.f32 0.0, %v1460
        %v1462 = vpop.f32.mrb[0].mxu0
        %v1463 = vpop.f32.mrb[0].mxu0
        %v1464 = vpop.f32.mrb[0].mxu0
        %1465 = vdwg.mxu0
        %1467 = vrot.lane.b32.xlu0 %v1241, 8
        %v1468 = vpop.permute.xlu0 %1467
        %1471 = vrot.lane.b32.xlu0 %v1351, 16
        %v1472 = vpop.permute.xlu0 %1471
        %1475 = vrot.lane.b32.xlu0 %v1461, 24
        %v1476 = vpop.permute.xlu0 %1475
        %v1478 = vsel %vm1027, %v1130, %v1468
        %vm1479 = vcmask 130048
        %v1480 = vsel %vm1479, %v1478, %v1472
        %vm1481 = vcmask 195584
        %v1482 = vsel %vm1481, %v1480, %v1476
        %v1483 = vpack.c.bf16 %v1482, %v1482
        %v1484 = vld [vmem:[#allocation17] sm:$0xf]
        %v1485 = vld [vmem:[#allocation17 + $0x4] sm:$0xf]
        %v1486 = vld [vmem:[#allocation17 + $0x8] sm:$0xf]
        %v1487 = vld [vmem:[#allocation17 + $0xc] sm:$0xf]
        %v1488 = vld [vmem:[#allocation18] sm:$0x1]
        %v1490 = vlaneseq
        %v1491 = vshrl.u32 %v1490, 7
        %v1492 = vsub.s32 0, %v1491
        %v1493 = vrot.slane %v1488, %v1492
        %v1499 = vunpack.c.l.b16 %v1484
        %v1500 = vunpack.c.l.b16 %v1485
        %v1501 = vunpack.c.l.b16 %v1486
        %v1502 = vunpack.c.l.b16 %v1487
        %v1503 = vpack.c.b16 %v1500, %v1499
        %v1504 = vpack.c.b16 %v1502, %v1501
        %v1508 = vsel %vm971, %v1483, 0
        %1510 = vmatprep.subr.bf16.mxu0 0
        %1511 = vmatpush1.bf16.msra.mxu0 %v1503
        %1512 = vmatprep.subr.bf16.mxu0 0
        %1513 = vmatpush1.bf16.msra.mxu0 %v1504
        %1514 = vmatprep.subr.bf16.mxu0 0
        %1515 = vmatpush1.bf16.msra.mxu0 0
        %1516 = vmatprep.subr.bf16.mxu0 0
        %1517 = vmatpush1.bf16.msra.mxu0 0
        %1518 = vmatprep.subr.bf16.mxu0 0
        %1519 = vmatpush1.bf16.msra.mxu0 0
        %1520 = vmatprep.subr.bf16.mxu0 0
        %1521 = vmatpush1.bf16.msra.mxu0 0
        %1522 = vmatprep.subr.bf16.mxu0 0
        %1523 = vmatpush1.bf16.msra.mxu0 0
        %1524 = vmatprep.subr.bf16.mxu0 0
        %1525 = vmatpush1.bf16.msra.mxu0 0
        %1526 = vmatprep.subr.bf16.mxu0 0
        %1527 = vmatpush1.bf16.msra.mxu0 0
        %1528 = vmatprep.subr.bf16.mxu0 0
        %1529 = vmatpush1.bf16.msra.mxu0 0
        %1530 = vmatprep.subr.bf16.mxu0 0
        %1531 = vmatpush1.bf16.msra.mxu0 0
        %1532 = vmatprep.subr.bf16.mxu0 0
        %1533 = vmatpush1.bf16.msra.mxu0 0
        %1534 = vmatprep.subr.bf16.mxu0 0
        %1535 = vmatpush1.bf16.msra.mxu0 0
        %1536 = vmatprep.subr.bf16.mxu0 0
        %1537 = vmatpush1.bf16.msra.mxu0 0
        %1538 = vmatprep.subr.bf16.mxu0 0
        %1539 = vmatpush1.bf16.msra.mxu0 0
        %1540 = vmatprep.subr.bf16.mxu0 0
        %1541 = vmatpush1.bf16.msra.mxu0 0
        %1542 = vmatprep.mubr.bf16.mxu0 0
        %1543 = vmatmul.mubr.bf16.gmra.mrb[0].mxu0 %v1508
        %v1544 = vpop.f32.mrb[0].mxu0
        %v1545 = vadd.f32 %v1493, %v1544
        %v1546 = vpop.f32.mrb[0].mxu0
        %v1547 = vpop.f32.mrb[0].mxu0
        %v1548 = vpop.f32.mrb[0].mxu0
        %1549 = vdwg.mxu0
        %v1550 = vadd.f32 %v1545, %v945
        %v1551 = vld [vmem:[#allocation20] sm:$0x1]
        %v1552 = vld [vmem:[#allocation21] sm:$0x1]
        %v1553 = vsel %vm971, %v1550, 0.0
        %1554 = vadd.xlane.f32.xlu0 %v1553
        %v1555 = vpop.xlane.xlu0 %1554
        %v1556 = vrcp.pop 32.0
        %v1557 = vmul.f32 %v1555, %v1556
        %v1558 = vsub.f32 %v1550, %v1557
        %v1559 = vmul.f32 %v1558, %v1558
        %v1560 = vsel %vm971, %v1559, 0.0
        %1561 = vadd.xlane.f32.xlu0 %v1560
        %v1562 = vpop.xlane.xlu0 %1561
        %v1563 = vmul.f32 %v1562, %v1556
        %v1564 = vadd.f32 %v1563, 1e-12
        %v1565 = vrsqrt.pop %v1564
        %v1566 = vmul.f32 %v1558, %v1565
        %v1568 = vlaneseq
        %v1569 = vshrl.u32 %v1568, 7
        %v1570 = vsub.s32 0, %v1569
        %v1571 = vrot.slane %v1551, %v1570
        %v1573 = vmul.f32 %v1566, %v1571
        %v1575 = vlaneseq
        %v1576 = vshrl.u32 %v1575, 7
        %v1577 = vsub.s32 0, %v1576
        %v1578 = vrot.slane %v1552, %v1577
        %v1580 = vadd.f32 %v1573, %v1578
        %v1581 = vsel %vm971, %v1580, 0.0
        %1582 = vadd.xlane.f32.xlu0 %v1581
        %v1583 = vpop.xlane.xlu0 %1582
        %v1584 = vmul.f32 %v1583, %v1556
        %v1585 = vsub.f32 %v1580, %v1584
        %v1586 = vmul.f32 %v1585, %v1585
        %v1587 = vsel %vm971, %v1586, 0.0
        %1588 = vadd.xlane.f32.xlu0 %v1587
        %v1589 = vpop.xlane.xlu0 %1588
        %v1590 = vmul.f32 %v1589, %v1556
        %v1591 = vadd.f32 %v1590, 1e-12
        %v1592 = vrsqrt.pop %v1591
        %v1593 = vmul.f32 %v1585, %v1592
        %v1595 = vlaneseq
        %v1596 = vshrl.u32 %v1595, 7
        %v1597 = vsub.s32 0, %v1596
        %v1598 = vrot.slane %v848, %v1597
        %v1600 = vmul.f32 %v1593, %v1598
        %v1602 = vlaneseq
        %v1603 = vshrl.u32 %v1602, 7
        %v1604 = vsub.s32 0, %v1603
        %v1605 = vrot.slane %v849, %v1604
        %v1607 = vadd.f32 %v1600, %v1605
        %v1608 = vpack.c.bf16 %v1607, %v1607
        %v1609 = vld [vmem:[#allocation23] sm:$0xf]
        %v1610 = vld [vmem:[#allocation23 + $0x4] sm:$0xf]
        %v1611 = vld [vmem:[#allocation23 + $0x8] sm:$0xf]
        %v1612 = vld [vmem:[#allocation23 + $0xc] sm:$0xf]
        %v1613 = vld [vmem:[#allocation24] sm:$0x1]
        %v1615 = vlaneseq
        %v1616 = vshrl.u32 %v1615, 7
        %v1617 = vsub.s32 0, %v1616
        %v1618 = vrot.slane %v1613, %v1617
        %v1624 = vunpack.c.l.b16 %v1609
        %v1625 = vunpack.c.l.b16 %v1610
        %v1626 = vunpack.c.l.b16 %v1611
        %v1627 = vunpack.c.l.b16 %v1612
        %v1628 = vpack.c.b16 %v1625, %v1624
        %v1629 = vpack.c.b16 %v1627, %v1626
        %v1633 = vsel %vm971, %v1608, 0
        %1635 = vmatprep.subr.bf16.mxu0 0
        %1636 = vmatpush1.bf16.msra.mxu0 %v1628
        %1637 = vmatprep.subr.bf16.mxu0 0
        %1638 = vmatpush1.bf16.msra.mxu0 %v1629
        %1639 = vmatprep.subr.bf16.mxu0 0
        %1640 = vmatpush1.bf16.msra.mxu0 0
        %1641 = vmatprep.subr.bf16.mxu0 0
        %1642 = vmatpush1.bf16.msra.mxu0 0
        %1643 = vmatprep.subr.bf16.mxu0 0
        %1644 = vmatpush1.bf16.msra.mxu0 0
        %1645 = vmatprep.subr.bf16.mxu0 0
        %1646 = vmatpush1.bf16.msra.mxu0 0
        %1647 = vmatprep.subr.bf16.mxu0 0
        %1648 = vmatpush1.bf16.msra.mxu0 0
        %1649 = vmatprep.subr.bf16.mxu0 0
        %1650 = vmatpush1.bf16.msra.mxu0 0
        %1651 = vmatprep.subr.bf16.mxu0 0
        %1652 = vmatpush1.bf16.msra.mxu0 0
        %1653 = vmatprep.subr.bf16.mxu0 0
        %1654 = vmatpush1.bf16.msra.mxu0 0
        %1655 = vmatprep.subr.bf16.mxu0 0
        %1656 = vmatpush1.bf16.msra.mxu0 0
        %1657 = vmatprep.subr.bf16.mxu0 0
        %1658 = vmatpush1.bf16.msra.mxu0 0
        %1659 = vmatprep.subr.bf16.mxu0 0
        %1660 = vmatpush1.bf16.msra.mxu0 0
        %1661 = vmatprep.subr.bf16.mxu0 0
        %1662 = vmatpush1.bf16.msra.mxu0 0
        %1663 = vmatprep.subr.bf16.mxu0 0
        %1664 = vmatpush1.bf16.msra.mxu0 0
        %1665 = vmatprep.subr.bf16.mxu0 0
        %1666 = vmatpush1.bf16.msra.mxu0 0
        %1667 = vmatprep.mubr.bf16.mxu0 0
        %1668 = vmatmul.mubr.bf16.gmra.mrb[0].mxu0 %v1633
        %v1669 = vpop.f32.mrb[0].mxu0
        %v1670 = vadd.f32 %v1618, %v1669
        %v1671 = vpop.f32.mrb[0].mxu0
        %v1672 = vpop.f32.mrb[0].mxu0
        %v1673 = vpop.f32.mrb[0].mxu0
        %1674 = vdwg.mxu0
        %v1675 = vmul.f32 %v1670, 0.5
        %v1676 = vrcp.pop 1.4142135
        %v1677 = vmul.f32 %v1670, %v1676
        %v1678 = verf.f32.pop %v1677
        %v1679 = vadd.f32 %v1678, 1.0
        %v1680 = vmul.f32 %v1675, %v1679
        %v1681 = vpack.c.bf16 %v1680, %v1680
        %v1682 = vld [vmem:[#allocation26] sm:$0xf]
        %v1683 = vld [vmem:[#allocation26 + $0x4] sm:$0xf]
        %v1684 = vld [vmem:[#allocation26 + $0x8] sm:$0xf]
        %v1685 = vld [vmem:[#allocation26 + $0xc] sm:$0xf]
        %v1686 = vld [vmem:[#allocation26 + $0x10] sm:$0xf]
        %v1687 = vld [vmem:[#allocation26 + $0x14] sm:$0xf]
        %v1688 = vld [vmem:[#allocation26 + $0x18] sm:$0xf]
        %v1689 = vld [vmem:[#allocation26 + $0x1c] sm:$0xf]
        %v1690 = vld [vmem:[#allocation27] sm:$0x1]
        %v1692 = vlaneseq
        %v1693 = vshrl.u32 %v1692, 7
        %v1694 = vsub.s32 0, %v1693
        %v1695 = vrot.slane %v1690, %v1694
        %v1705 = vunpack.c.l.b16 %v1682
        %v1706 = vunpack.c.l.b16 %v1683
        %v1707 = vunpack.c.l.b16 %v1684
        %v1708 = vunpack.c.l.b16 %v1685
        %v1709 = vunpack.c.l.b16 %v1686
        %v1710 = vunpack.c.l.b16 %v1687
        %v1711 = vunpack.c.l.b16 %v1688
        %v1712 = vunpack.c.l.b16 %v1689
        %v1713 = vpack.c.b16 %v1706, %v1705
        %v1714 = vpack.c.b16 %v1708, %v1707
        %v1715 = vpack.c.b16 %v1710, %v1709
        %v1716 = vpack.c.b16 %v1712, %v1711
        %vm1721 = vcmask 523264
        %v1723 = vsel %vm1721, %v1681, 0
        %1725 = vmatprep.subr.bf16.mxu0 0
        %1726 = vmatpush1.bf16.msra.mxu0 %v1713
        %1727 = vmatprep.subr.bf16.mxu0 0
        %1728 = vmatpush1.bf16.msra.mxu0 %v1714
        %1729 = vmatprep.subr.bf16.mxu0 0
        %1730 = vmatpush1.bf16.msra.mxu0 %v1715
        %1731 = vmatprep.subr.bf16.mxu0 0
        %1732 = vmatpush1.bf16.msra.mxu0 %v1716
        %1733 = vmatprep.subr.bf16.mxu0 0
        %1734 = vmatpush1.bf16.msra.mxu0 0
        %1735 = vmatprep.subr.bf16.mxu0 0
        %1736 = vmatpush1.bf16.msra.mxu0 0
        %1737 = vmatprep.subr.bf16.mxu0 0
        %1738 = vmatpush1.bf16.msra.mxu0 0
        %1739 = vmatprep.subr.bf16.mxu0 0
        %1740 = vmatpush1.bf16.msra.mxu0 0
        %1741 = vmatprep.subr.bf16.mxu0 0
        %1742 = vmatpush1.bf16.msra.mxu0 0
        %1743 = vmatprep.subr.bf16.mxu0 0
        %1744 = vmatpush1.bf16.msra.mxu0 0
        %1745 = vmatprep.subr.bf16.mxu0 0
        %1746 = vmatpush1.bf16.msra.mxu0 0
        %1747 = vmatprep.subr.bf16.mxu0 0
        %1748 = vmatpush1.bf16.msra.mxu0 0
        %1749 = vmatprep.subr.bf16.mxu0 0
        %1750 = vmatpush1.bf16.msra.mxu0 0
        %1751 = vmatprep.subr.bf16.mxu0 0
        %1752 = vmatpush1.bf16.msra.mxu0 0
        %1753 = vmatprep.subr.bf16.mxu0 0
        %1754 = vmatpush1.bf16.msra.mxu0 0
        %1755 = vmatprep.subr.bf16.mxu0 0
        %1756 = vmatpush1.bf16.msra.mxu0 0
        %1757 = vmatprep.mubr.bf16.mxu0 0
        %1758 = vmatmul.mubr.bf16.gmra.mrb[0].mxu0 %v1723
        %v1759 = vpop.f32.mrb[0].mxu0
        %v1760 = vadd.f32 %v1695, %v1759
        %v1761 = vpop.f32.mrb[0].mxu0
        %v1762 = vpop.f32.mrb[0].mxu0
        %v1763 = vpop.f32.mrb[0].mxu0
        %1764 = vdwg.mxu0
        %v1765 = vadd.f32 %v1760, %v1607
        %v1766 = vld [vmem:[#allocation29] sm:$0x1]
        %v1767 = vld [vmem:[#allocation30] sm:$0x1]
        %v1768 = vsel %vm971, %v1765, 0.0
        %1769 = vadd.xlane.f32.xlu0 %v1768
        %v1770 = vpop.xlane.xlu0 %1769
        %v1771 = vmul.f32 %v1770, %v1556
        %v1772 = vsub.f32 %v1765, %v1771
        %v1773 = vmul.f32 %v1772, %v1772
        %v1774 = vsel %vm971, %v1773, 0.0
        %1775 = vadd.xlane.f32.xlu0 %v1774
        %v1776 = vpop.xlane.xlu0 %1775
        %v1777 = vmul.f32 %v1776, %v1556
        %v1778 = vadd.f32 %v1777, 1e-12
        %v1779 = vrsqrt.pop %v1778
        %v1780 = vmul.f32 %v1772, %v1779
        %v1782 = vlaneseq
        %v1783 = vshrl.u32 %v1782, 7
        %v1784 = vsub.s32 0, %v1783
        %v1785 = vrot.slane %v1766, %v1784
        %v1787 = vmul.f32 %v1780, %v1785
        %v1789 = vlaneseq
        %v1790 = vshrl.u32 %v1789, 7
        %v1791 = vsub.s32 0, %v1790
        %v1792 = vrot.slane %v1767, %v1791
        %v1794 = vadd.f32 %v1787, %v1792
        %1795 = vst.msk [vmem:[#allocation2] sm:$0xff] %vm971, %v1794
        %p1796 = scmp.eq.s32.totalorder %s51, 1
        // Predicated region
        $region169: #{tpu_custom_call.1} parent=91 // pred_check
          %p1797 = pneg %p1796
        $region170: #{tpu_custom_call.1} parent=91 // pred_check_branch
          %1799 = sbr.rel (%p1797) target = $region172
        $region171: #{tpu_custom_call.1} parent=91 // pred_region
          %1800 = vst.msk [vmem:[%s846] sm:$0xff] %vm971, %v1794
        $region172: #{tpu_custom_call.1} parent=91 // pred_fallthru
          _
        %s1801 = sand.u32 %s454, 1
        %s1802 = scalar_lea.sflag [#allocation5], %s1801
        %s1803 = sand.u32 %s454, 1
        %s1804 = smul.addr %s1803, 8
        %s1805 = scalar_lea.vmem [#allocation32], %s1804
        // Predicated region
        $region173: #{tpu_custom_call.1} parent=91 // pred_check
          %p1806 = pneg %p464
        $region174: #{tpu_custom_call.1} parent=91 // pred_check_branch
          %1808 = sbr.rel (%p1806) target = $region176
        $region175: #{tpu_custom_call.1} parent=91 // pred_region
          %s1810 = ssub.s32 128, 128
          %1811 = vsyncadd %s1802, %s1810
          %s1812 = smul.addr %s50, 128
          %s1813 = scalar_lea.hbm %s18, %s1812
          %s1815 = sshll.u32 %s1805, 4
          %s1816 = int_to_ptr.vmem [resolvable:$true] %s1815
          %1818 = dma.vmem_to_hbm [thread:$0]  %s1816, 128, %s1813, %s1802
        $region176: #{tpu_custom_call.1} parent=91 // pred_fallthru
          _
      $region92: #{tpu_custom_call.1} parent=5 // pred_fallthru
        _
      %p1819 = scmp.le.s32.totalorder 2, %s41
      // Predicated region
      $region177: #{tpu_custom_call.1} parent=5 // pred_check
        %p1820 = pneg %p1819
      $region178: #{tpu_custom_call.1} parent=5 // pred_check_branch
        %1822 = sbr.rel (%p1820) target = $region180
      $region179: #{tpu_custom_call.1} parent=5 // pred_region
        %s1823 = ssub.s32 %s41, 2
        // Predicated region
        $region181: #{tpu_custom_call.1} parent=179 // pred_check
          %p1824 = pneg %p470
        $region182: #{tpu_custom_call.1} parent=179 // pred_check_branch
          %1826 = sbr.rel (%p1824) target = $region184
        $region183: #{tpu_custom_call.1} parent=179 // pred_region
          %s1827 = sand.u32 %s455, 1
          %s1828 = scalar_lea.sflag [#allocation5], %s1827
          %s1829 = sand.u32 %s455, 1
          %s1830 = smul.addr %s1829, 8
          %s1831 = scalar_lea.vmem [#allocation32], %s1830
          %1832 = dma.done %s1828, 128
        $region184: #{tpu_custom_call.1} parent=179 // pred_fallthru
          _
      $region180: #{tpu_custom_call.1} parent=5 // pred_fallthru
        _
    $region6: #{tpu_custom_call.1} parent=1 // loop_footer
      %s45 = sadd.s32 1, %s41
    $region7: #{tpu_custom_call.1} parent=1 // loop_footer_branch
      %40 = sbr.rel target = $region3
    $region8: #{tpu_custom_call.1} parent=1 // loop_exit
      _
    %1833 = vsyncpa [#allocation4], 1
    %s1834 = scalar_lea.sflag [#allocation4], 1
    %1835 = vsyncpa %s1834, 1
    %1836 = vsyncpa [#allocation7], 1
    %s1837 = scalar_lea.sflag [#allocation7], 1
    %1838 = vsyncpa %s1837, 1
    %1839 = vsyncpa [#allocation10], 1
    %1840 = vsyncpa [#allocation13], 1
    %1841 = vsyncpa [#allocation16], 1
    %1842 = vsyncpa [#allocation19], 1
    %1843 = vsyncpa [#allocation22], 1
    %1844 = vsyncpa [#allocation25], 1
    %1845 = vsyncpa [#allocation28], 1
    %1846 = vsyncpa [#allocation31], 1
    %1847 = vsyncpa [#allocation5], 1
    %s1848 = scalar_lea.sflag [#allocation5], 1
    %1849 = vsyncpa %s1848, 1

</llo_original>
